<compile_context>
chip_gen: v7x
topology: tpu7x:2x2x1
jax: 0.10.0
libtpu: 0.0.40
codegen_flags: <defaults>
</compile_context>

<pallas_src>
import functools

import jax
import jax.numpy as jnp
from jax.experimental import pallas as pl
from jax.experimental.pallas import tpu as pltpu

LEAKY_SLOPE = 0.01   # torch.nn.functional.leaky_relu default negative_slope
BN_EPS = 1e-5        # torch.nn.BatchNorm2d default eps
LANE = 128


def _round_up(x, m):
    return (x + m - 1) // m * m


def conv4_strides(in_h, in_w):
    in_size = min(in_w, in_h)
    ratio = in_size // 4
    if ratio >= 16:
        return (2, 2, 2, 2)
    elif ratio >= 8:
        return (1, 2, 2, 2)
    elif ratio >= 4:
        return (1, 2, 2, 1)
    elif ratio >= 2:
        return (1, 2, 1, 1)
    else:
        return (1, 1, 1, 1)


def _build_layers(H, W, C, strides):
    """Static per-layer geometry (kernel=3, padding=1)."""
    chans = (32, 64, 128, 256)
    layers = []
    h, w, cin = H, W, C
    for i, s in enumerate(strides):
        ho = (h - 1) // s + 1
        wo = (w - 1) // s + 1
        layers.append(dict(stride=s, h_in=h, w_in=w, h_out=ho, w_out=wo,
                           cin=cin, cin_p=_round_up(max(cin, 1), LANE),
                           cout=chans[i], cout_p=_round_up(chans[i], LANE)))
        h, w, cin = ho, wo, chans[i]
    return layers


# ----------------------------- fused Pallas kernel ------------------------------

def _make_kernel(layers):
    n_layers = len(layers)

    def _collapse(tap, ho, wo, c):
        # (1, ho, wo, c) -> (ho*wo, c).  When wo is not a sublane multiple, build row-major
        # order with whole-row concatenation (layout-safe) instead of a second-minor regroup.
        if wo % 8 == 0:
            return tap.reshape(ho * wo, c)
        rows = [tap[:, hh] for hh in range(ho)]              # each (1, wo, c)
        return jnp.concatenate(rows, axis=1).reshape(ho * wo, c)

    def _store_padded(dst_ref, y, ho, wo, c):
        # Write (ho*wo, c) into the interior of the zero-bordered padded scratch.
        y = y.astype(dst_ref.dtype)
        if wo % 8 == 0:
            dst_ref[:, 1:1 + ho, 1:1 + wo, :] = y.reshape(1, ho, wo, c)
        else:
            for hh in range(ho):
                dst_ref[:, 1 + hh:2 + hh, 1:1 + wo, :] = (
                    y[hh * wo:(hh + 1) * wo, :].reshape(1, 1, wo, c))

    def _conv_layer(src_ref, w_ref, b_ref, L):
        ho, wo, c, s = L["h_out"], L["w_out"], L["cin_p"], L["stride"]
        if s == 1:
            taps_by_kh = [
                [src_ref[:, kh:kh + ho, kw:kw + wo, :].astype(jnp.bfloat16)
                 for kw in range(3)]
                for kh in range(3)]
        else:
            hp = L["h_in"] + 2
            # W phase: strided slice directly on the ref (no compaction copies / buffers).
            # H phase: free leading-dim phase-split reshape.
            phased = []
            for kw in range(3):
                v = src_ref[:, :, pl.ds(kw, wo, stride=2), :]          # (1, hp, wo, c)
                phased.append(v.astype(jnp.bfloat16).reshape(1, hp // 2, 2, wo, c))
            taps_by_kh = [
                [phased[kw][:, kh // 2:kh // 2 + ho, kh % 2, :, :] for kw in range(3)]
                for kh in range(3)]
        acc = None
        for kh in range(3):
            # K-pack the 3 kw taps: one (M, 3c) x (3c, cout) MXU dot per kh.
            a = _collapse(jnp.concatenate(taps_by_kh[kh], axis=-1), ho, wo, 3 * c)
            d = jnp.dot(a, w_ref[kh], preferred_element_type=jnp.float32)
            acc = d if acc is None else acc + d
        y = acc + b_ref[...]                                  # folded-BN shift (f32 epilogue)
        return jnp.where(y >= 0.0, y, LEAKY_SLOPE * y)        # LeakyReLU

    def kernel(x_ref, w0, b0, w1, b1, w2, b2, w3, b3, lw, lb, o_ref, s1, s2, s3):
        scr = (s1, s2, s3)

        # Zero only the 1-pixel border of every padded activation scratch.  The interior is
        # fully overwritten below, so this replaces the old full-scratch zero fill.
        for s_ref in scr:
            _, hp, wp, cc = s_ref.shape
            zrow = jnp.zeros((1, 1, wp, cc), s_ref.dtype)
            s_ref[:, 0:1, :, :] = zrow
            s_ref[:, hp - 1:hp, :, :] = zrow
            zcol = jnp.zeros((1, hp, 1, cc), s_ref.dtype)
            s_ref[:, :, 0:1, :] = zcol
            s_ref[:, :, wp - 1:wp, :] = zcol

        # Layer 0: patches were im2col'ed in the wrapper -> a single MXU dot.
        L0 = layers[0]
        y = jnp.dot(x_ref[0], w0[...], preferred_element_type=jnp.float32) + b0[...]
        y = jnp.where(y >= 0.0, y, LEAKY_SLOPE * y)
        _store_padded(s1, y, L0["h_out"], L0["w_out"], L0["cout_p"])

        # Layers 1..3: implicit im2col over the VMEM-resident padded activation.
        w_refs = (w1, w2, w3)
        b_refs = (b1, b2, b3)
        for i in range(1, n_layers):
            L = layers[i]
            y = _conv_layer(scr[i - 1], w_refs[i - 1], b_refs[i - 1], L)
            if i + 1 < n_layers:
                _store_padded(scr[i], y, L["h_out"], L["w_out"], L["cout_p"])

        # Global average pool + Linear on the last activation (still resident on-core).
        L3 = layers[-1]
        inv_hw = 1.0 / float(L3["h_out"] * L3["w_out"])
        pooled = jnp.sum(y, axis=0, keepdims=True) * inv_hw          # (1, 256) f32
        logits = jnp.dot(pooled, lw[...], preferred_element_type=jnp.float32) + lb[...]
        o_ref[...] = logits.reshape(1, 1, logits.shape[-1])          # lane-dense (1,1,128)

    return kernel


# ------------------------------- forward wrapper ----------------------------------

@functools.partial(jax.jit, static_argnames=("strides",))
def conv4_forward(x_nchw, kparams, linear, strides):
    N, C, H, W = x_nchw.shape
    layers = _build_layers(H, W, C, strides)
    L0 = layers[0]

    # ---- layer-0 im2col in the wrapper: (N, H0*W0, round_up(9*C, 128)) bf16 patches ----
    x = jnp.transpose(x_nchw, (0, 2, 3, 1)).astype(jnp.float32)       # NHWC
    xp = jnp.pad(x, ((0, 0), (1, 1), (1, 1), (0, 0)))                 # spatial padding=1
    s0, ho0, wo0 = L0["stride"], L0["h_out"], L0["w_out"]
    taps = []
    for kh in range(3):
        for kw in range(3):
            taps.append(xp[:, kh:kh + s0 * (ho0 - 1) + 1:s0,
                           kw:kw + s0 * (wo0 - 1) + 1:s0, :])
    k0 = 9 * C
    k0p = _round_up(k0, LANE)
    patches = jnp.concatenate(taps, axis=-1).reshape(N, ho0 * wo0, k0)
    patches = jnp.pad(patches, ((0, 0), (0, 0), (0, k0p - k0))).astype(jnp.bfloat16)

    # ---- lane-pad the Linear head (out_size -> 128) ----
    lw, lb = linear
    out_size = lw.shape[1]
    out_p = _round_up(out_size, LANE)
    lwp = jnp.pad(lw, ((0, 0), (0, out_p - out_size)))
    lbp = jnp.pad(lb.reshape(1, -1), ((0, 0), (0, out_p - out_size)))

    # ---- VMEM scratch: zero-bordered padded activation feeding layers 1..3 ----
    scratch_shapes = []
    for i in range(1, 4):
        L = layers[i]
        if L["stride"] == 2:
            # TODO(synk): odd spatial H with stride 2 is not handled by the H phase split.
            assert L["h_in"] % 2 == 0
        scratch_shapes.append(
            pltpu.VMEM((1, L["h_in"] + 2, L["w_in"] + 2, L["cin_p"]), jnp.float32))

    kernel = _make_kernel(layers)

    in_specs = [pl.BlockSpec((1, ho0 * wo0, k0p), lambda n: (n, 0, 0))]
    for i in range(4):
        wshape = kparams[i]["w"].shape
        in_specs.append(pl.BlockSpec(
            wshape, (lambda n: (0, 0)) if len(wshape) == 2 else (lambda n: (0, 0, 0))))
        in_specs.append(pl.BlockSpec(kparams[i]["b"].shape, lambda n: (0, 0)))
    in_specs.append(pl.BlockSpec(lwp.shape, lambda n: (0, 0)))
    in_specs.append(pl.BlockSpec(lbp.shape, lambda n: (0, 0)))

    out = pl.pallas_call(
        kernel,
        out_shape=jax.ShapeDtypeStruct((N, 1, out_p), jnp.float32),
        grid=(N,),
        in_specs=in_specs,
        out_specs=pl.BlockSpec((1, 1, out_p), lambda n: (n, 0, 0)),
        scratch_shapes=scratch_shapes,
        compiler_params=pltpu.CompilerParams(
            dimension_semantics=("parallel",),            # batch across TCs on v7x
            vmem_limit_bytes=48 * 1024 * 1024),
    )(patches, *[kparams[i][k] for i in range(4) for k in ("w", "b")], lwp, lbp)
    return out[:, 0, :out_size]


# ------------------------------- params / reference --------------------------------

def init_conv4_params(key, channels_in, output_size):
    """Returns (kernel_params, ref_params, (lw, lb)).

    kernel_params: BN-folded, channel/K-padded bf16 weights in the kernel's layout
                   (layer 0: (round_up(9*C,128), 128); layers 1..3: (3, 3*128, cout_p)).
    ref_params:    BN-folded f32 HWIO weights + biases for the pure-JAX reference.
    """
    chans = [32, 64, 128, 256]
    kernel_params, ref_params = [], []
    cin = channels_in
    for idx, c in enumerate(chans):
        key, k1, k2, k3, k4, k5 = jax.random.split(key, 6)
        fan_in = cin * 9
        w = jax.random.normal(k1, (3, 3, cin, c), jnp.float32) * (2.0 / fan_in) ** 0.5
        gamma = 1.0 + 0.1 * jax.random.normal(k2, (c,), jnp.float32)
        beta = 0.1 * jax.random.normal(k3, (c,), jnp.float32)
        running_mean = 0.1 * jax.random.normal(k4, (c,), jnp.float32)
        running_var = jnp.abs(1.0 + 0.1 * jax.random.normal(k5, (c,), jnp.float32))
        scale = gamma / jnp.sqrt(running_var + BN_EPS)
        bias = beta - running_mean * scale
        wf = w * scale[None, None, None, :]                   # fold BN scale into conv weight
        ref_params.append({"w": wf, "b": bias})

        cout_p = _round_up(c, LANE)
        if idx == 0:
            k0 = 9 * cin
            k0p = _round_up(k0, LANE)
            wk = jnp.zeros((k0p, cout_p), jnp.float32).at[:k0, :c].set(wf.reshape(k0, c))
        else:
            cin_p = _round_up(cin, LANE)
            wk = jnp.zeros((3, 3, cin_p, cout_p), jnp.float32).at[:, :, :cin, :c].set(wf)
            wk = wk.reshape(3, 3 * cin_p, cout_p)             # kw packed along K per kh
        bk = jnp.zeros((1, cout_p), jnp.float32).at[0, :c].set(bias)
        kernel_params.append({"w": wk.astype(jnp.bfloat16), "b": bk})
        cin = c

    key, kw_, kb_ = jax.random.split(key, 3)
    lw = jax.random.normal(kw_, (chans[-1], output_size), jnp.float32) * (1.0 / chans[-1]) ** 0.5
    lb = 0.1 * jax.random.normal(kb_, (output_size,), jnp.float32)
    return kernel_params, ref_params, (lw, lb)


def conv4_reference(x_nchw, ref_params, linear, strides):
    """Pure-JAX f32 reference of the same (eval-mode) forward pass."""
    x = jnp.transpose(x_nchw, (0, 2, 3, 1)).astype(jnp.float32)
    for p, s in zip(ref_params, strides):
        y = jax.lax.conv_general_dilated(
            x, p["w"], window_strides=(s, s), padding=((1, 1), (1, 1)),
            dimension_numbers=("NHWC", "HWIO", "NHWC"))
        y = y + p["b"].reshape(1, 1, 1, -1)
        x = jnp.where(y >= 0.0, y, LEAKY_SLOPE * y)
    pooled = jnp.mean(x, axis=(1, 2))
    lw, lb = linear
    return pooled @ lw + lb.reshape(1, -1)


# --------------------------------------- main ---------------------------------------

if __name__ == "__main__":
    key = jax.random.PRNGKey(0)
    kx, kp = jax.random.split(key)

    N, C, H, W = 2, 4, 16, 16
    output_size = 10

    x = jax.random.normal(kx, (N, C, H, W), jnp.float32)
    kernel_params, ref_params, linear = init_conv4_params(kp, C, output_size)
    strides = conv4_strides(H, W)            # (1, 2, 2, 1) for 16x16 -> spatial 16,16,8,4,4

    out = conv4_forward(x, kernel_params, linear, strides=strides)
    out = jax.block_until_ready(out)
    assert out.shape == (N, output_size), out.shape
    assert bool(jnp.all(jnp.isfinite(out)))

    ref = conv4_reference(x, ref_params, linear, strides)
    assert bool(jnp.allclose(out, ref, rtol=2e-1, atol=2e-1)), \
        float(jnp.max(jnp.abs(out - ref)))

    print("KERNEL_OK")
</pallas_src>

<mosaic_0001>
module attributes {stable_mosaic.version = 11 : i64} {
  func.func @kernel(%arg0: i32, %arg1: memref<1x256x128xbf16, #tpu.memory_space<vmem>>, %arg2: memref<128x128xbf16, #tpu.memory_space<vmem>>, %arg3: memref<1x128xf32, #tpu.memory_space<vmem>>, %arg4: memref<3x384x128xbf16, #tpu.memory_space<vmem>>, %arg5: memref<1x128xf32, #tpu.memory_space<vmem>>, %arg6: memref<3x384x128xbf16, #tpu.memory_space<vmem>>, %arg7: memref<1x128xf32, #tpu.memory_space<vmem>>, %arg8: memref<3x384x256xbf16, #tpu.memory_space<vmem>>, %arg9: memref<1x256xf32, #tpu.memory_space<vmem>>, %arg10: memref<256x128xf32, #tpu.memory_space<vmem>>, %arg11: memref<1x128xf32, #tpu.memory_space<vmem>>, %arg12: memref<1x1x128xf32, #tpu.memory_space<vmem>>, %arg13: memref<1x18x18x128xf32, #tpu.memory_space<vmem>>, %arg14: memref<1x10x10x128xf32, #tpu.memory_space<vmem>>, %arg15: memref<1x6x6x128xf32, #tpu.memory_space<vmem>>) attributes {dimension_semantics = [#tpu.dimension_semantics<parallel>], iteration_bounds = array<i64: 2>, scalar_prefetch = 0 : i64, scratch_operands = 3 : i64, tpu.core_type = #tpu.core_type<tc>, window_params = [{transform_indices = @transform_0, window_bounds = array<i64: 1, 256, 128>}, {pipeline_mode = #tpu.pipeline_mode<synchronous>, transform_indices = @transform_1, window_bounds = array<i64: 128, 128>}, {pipeline_mode = #tpu.pipeline_mode<synchronous>, transform_indices = @transform_2, window_bounds = array<i64: 1, 128>}, {pipeline_mode = #tpu.pipeline_mode<synchronous>, transform_indices = @transform_3, window_bounds = array<i64: 3, 384, 128>}, {pipeline_mode = #tpu.pipeline_mode<synchronous>, transform_indices = @transform_4, window_bounds = array<i64: 1, 128>}, {pipeline_mode = #tpu.pipeline_mode<synchronous>, transform_indices = @transform_5, window_bounds = array<i64: 3, 384, 128>}, {pipeline_mode = #tpu.pipeline_mode<synchronous>, transform_indices = @transform_6, window_bounds = array<i64: 1, 128>}, {pipeline_mode = #tpu.pipeline_mode<synchronous>, transform_indices = @transform_7, window_bounds = array<i64: 3, 384, 256>}, {pipeline_mode = #tpu.pipeline_mode<synchronous>, transform_indices = @transform_8, window_bounds = array<i64: 1, 256>}, {pipeline_mode = #tpu.pipeline_mode<synchronous>, transform_indices = @transform_9, window_bounds = array<i64: 256, 128>}, {pipeline_mode = #tpu.pipeline_mode<synchronous>, transform_indices = @transform_10, window_bounds = array<i64: 1, 128>}, {transform_indices = @transform_11, window_bounds = array<i64: 1, 1, 128>}]} {
    %cst = arith.constant 0.000000e+00 : f32
    %0 = vector.broadcast %cst : f32 to vector<1x1x18x128xf32>
    %c0 = arith.constant 0 : index
    %c0_0 = arith.constant 0 : index
    %c0_1 = arith.constant 0 : index
    %c0_2 = arith.constant 0 : index
    %1 = vector.load %arg13[%c0, %c0_0, %c0_1, %c0_2] : memref<1x18x18x128xf32, #tpu.memory_space<vmem>>, vector<1x1x18x128xf32>
    tpu.vector_store %arg13[%c0, %c0_0, %c0_1, %c0_2], %0 {strides = array<i32>} : memref<1x18x18x128xf32, #tpu.memory_space<vmem>>, vector<1x1x18x128xf32>,
    %c0_3 = arith.constant 0 : index
    %c17 = arith.constant 17 : index
    %c0_4 = arith.constant 0 : index
    %c0_5 = arith.constant 0 : index
    %2 = vector.load %arg13[%c0_3, %c17, %c0_4, %c0_5] : memref<1x18x18x128xf32, #tpu.memory_space<vmem>>, vector<1x1x18x128xf32>
    tpu.vector_store %arg13[%c0_3, %c17, %c0_4, %c0_5], %0 {strides = array<i32>} : memref<1x18x18x128xf32, #tpu.memory_space<vmem>>, vector<1x1x18x128xf32>,
    %cst_6 = arith.constant 0.000000e+00 : f32
    %3 = vector.broadcast %cst_6 : f32 to vector<1x18x1x128xf32>
    %c0_7 = arith.constant 0 : index
    %c0_8 = arith.constant 0 : index
    %c0_9 = arith.constant 0 : index
    %c0_10 = arith.constant 0 : index
    %4 = vector.load %arg13[%c0_7, %c0_8, %c0_9, %c0_10] : memref<1x18x18x128xf32, #tpu.memory_space<vmem>>, vector<1x18x1x128xf32>
    tpu.vector_store %arg13[%c0_7, %c0_8, %c0_9, %c0_10], %3 {strides = array<i32>} : memref<1x18x18x128xf32, #tpu.memory_space<vmem>>, vector<1x18x1x128xf32>,
    %c0_11 = arith.constant 0 : index
    %c0_12 = arith.constant 0 : index
    %c17_13 = arith.constant 17 : index
    %c0_14 = arith.constant 0 : index
    %5 = vector.load %arg13[%c0_11, %c0_12, %c17_13, %c0_14] : memref<1x18x18x128xf32, #tpu.memory_space<vmem>>, vector<1x18x1x128xf32>
    tpu.vector_store %arg13[%c0_11, %c0_12, %c17_13, %c0_14], %3 {strides = array<i32>} : memref<1x18x18x128xf32, #tpu.memory_space<vmem>>, vector<1x18x1x128xf32>,
    %cst_15 = arith.constant 0.000000e+00 : f32
    %6 = vector.broadcast %cst_15 : f32 to vector<1x1x10x128xf32>
    %c0_16 = arith.constant 0 : index
    %c0_17 = arith.constant 0 : index
    %c0_18 = arith.constant 0 : index
    %c0_19 = arith.constant 0 : index
    %7 = vector.load %arg14[%c0_16, %c0_17, %c0_18, %c0_19] : memref<1x10x10x128xf32, #tpu.memory_space<vmem>>, vector<1x1x10x128xf32>
    tpu.vector_store %arg14[%c0_16, %c0_17, %c0_18, %c0_19], %6 {strides = array<i32>} : memref<1x10x10x128xf32, #tpu.memory_space<vmem>>, vector<1x1x10x128xf32>,
    %c0_20 = arith.constant 0 : index
    %c9 = arith.constant 9 : index
    %c0_21 = arith.constant 0 : index
    %c0_22 = arith.constant 0 : index
    %8 = vector.load %arg14[%c0_20, %c9, %c0_21, %c0_22] : memref<1x10x10x128xf32, #tpu.memory_space<vmem>>, vector<1x1x10x128xf32>
    tpu.vector_store %arg14[%c0_20, %c9, %c0_21, %c0_22], %6 {strides = array<i32>} : memref<1x10x10x128xf32, #tpu.memory_space<vmem>>, vector<1x1x10x128xf32>,
    %cst_23 = arith.constant 0.000000e+00 : f32
    %9 = vector.broadcast %cst_23 : f32 to vector<1x10x1x128xf32>
    %c0_24 = arith.constant 0 : index
    %c0_25 = arith.constant 0 : index
    %c0_26 = arith.constant 0 : index
    %c0_27 = arith.constant 0 : index
    %10 = vector.load %arg14[%c0_24, %c0_25, %c0_26, %c0_27] : memref<1x10x10x128xf32, #tpu.memory_space<vmem>>, vector<1x10x1x128xf32>
    tpu.vector_store %arg14[%c0_24, %c0_25, %c0_26, %c0_27], %9 {strides = array<i32>} : memref<1x10x10x128xf32, #tpu.memory_space<vmem>>, vector<1x10x1x128xf32>,
    %c0_28 = arith.constant 0 : index
    %c0_29 = arith.constant 0 : index
    %c9_30 = arith.constant 9 : index
    %c0_31 = arith.constant 0 : index
    %11 = vector.load %arg14[%c0_28, %c0_29, %c9_30, %c0_31] : memref<1x10x10x128xf32, #tpu.memory_space<vmem>>, vector<1x10x1x128xf32>
    tpu.vector_store %arg14[%c0_28, %c0_29, %c9_30, %c0_31], %9 {strides = array<i32>} : memref<1x10x10x128xf32, #tpu.memory_space<vmem>>, vector<1x10x1x128xf32>,
    %cst_32 = arith.constant 0.000000e+00 : f32
    %12 = vector.broadcast %cst_32 : f32 to vector<1x1x6x128xf32>
    %c0_33 = arith.constant 0 : index
    %c0_34 = arith.constant 0 : index
    %c0_35 = arith.constant 0 : index
    %c0_36 = arith.constant 0 : index
    %13 = vector.load %arg15[%c0_33, %c0_34, %c0_35, %c0_36] : memref<1x6x6x128xf32, #tpu.memory_space<vmem>>, vector<1x1x6x128xf32>
    tpu.vector_store %arg15[%c0_33, %c0_34, %c0_35, %c0_36], %12 {strides = array<i32>} : memref<1x6x6x128xf32, #tpu.memory_space<vmem>>, vector<1x1x6x128xf32>,
    %c0_37 = arith.constant 0 : index
    %c5 = arith.constant 5 : index
    %c0_38 = arith.constant 0 : index
    %c0_39 = arith.constant 0 : index
    %14 = vector.load %arg15[%c0_37, %c5, %c0_38, %c0_39] : memref<1x6x6x128xf32, #tpu.memory_space<vmem>>, vector<1x1x6x128xf32>
    tpu.vector_store %arg15[%c0_37, %c5, %c0_38, %c0_39], %12 {strides = array<i32>} : memref<1x6x6x128xf32, #tpu.memory_space<vmem>>, vector<1x1x6x128xf32>,
    %cst_40 = arith.constant 0.000000e+00 : f32
    %15 = vector.broadcast %cst_40 : f32 to vector<1x6x1x128xf32>
    %c0_41 = arith.constant 0 : index
    %c0_42 = arith.constant 0 : index
    %c0_43 = arith.constant 0 : index
    %c0_44 = arith.constant 0 : index
    %16 = vector.load %arg15[%c0_41, %c0_42, %c0_43, %c0_44] : memref<1x6x6x128xf32, #tpu.memory_space<vmem>>, vector<1x6x1x128xf32>
    tpu.vector_store %arg15[%c0_41, %c0_42, %c0_43, %c0_44], %15 {strides = array<i32>} : memref<1x6x6x128xf32, #tpu.memory_space<vmem>>, vector<1x6x1x128xf32>,
    %c0_45 = arith.constant 0 : index
    %c0_46 = arith.constant 0 : index
    %c5_47 = arith.constant 5 : index
    %c0_48 = arith.constant 0 : index
    %17 = vector.load %arg15[%c0_45, %c0_46, %c5_47, %c0_48] : memref<1x6x6x128xf32, #tpu.memory_space<vmem>>, vector<1x6x1x128xf32>
    tpu.vector_store %arg15[%c0_45, %c0_46, %c5_47, %c0_48], %15 {strides = array<i32>} : memref<1x6x6x128xf32, #tpu.memory_space<vmem>>, vector<1x6x1x128xf32>,
    %c0_49 = arith.constant 0 : index
    %c0_50 = arith.constant 0 : index
    %c0_51 = arith.constant 0 : index
    %18 = vector.load %arg1[%c0_49, %c0_50, %c0_51] : memref<1x256x128xbf16, #tpu.memory_space<vmem>>, vector<1x256x128xbf16>
    %19 = vector.shape_cast %18 : vector<1x256x128xbf16> to vector<256x128xbf16>
    %c0_52 = arith.constant 0 : index
    %c0_53 = arith.constant 0 : index
    %20 = vector.load %arg2[%c0_52, %c0_53] : memref<128x128xbf16, #tpu.memory_space<vmem>>, vector<128x128xbf16>
    %cst_54 = arith.constant dense<0.000000e+00> : vector<256x128xf32>
    %21 = tpu.matmul %19, %20, %cst_54 {dimension_numbers = #tpu.dot_dimension_numbers<[1], [0], [0], [1], [0, 0, 1, 1], [], []>} : vector<256x128xbf16>, vector<128x128xbf16>, vector<256x128xf32> -> vector<256x128xf32>
    %c0_55 = arith.constant 0 : index
    %c0_56 = arith.constant 0 : index
    %22 = vector.load %arg3[%c0_55, %c0_56] : memref<1x128xf32, #tpu.memory_space<vmem>>, vector<1x128xf32>
    %23 = vector.broadcast %22 : vector<1x128xf32> to vector<256x128xf32>
    %24 = arith.addf %21, %23 : vector<256x128xf32>
    %cst_57 = arith.constant 0.000000e+00 : f32
    %25 = vector.broadcast %cst_57 : f32 to vector<256x128xf32>
    %26 = arith.cmpf oge, %24, %25 : vector<256x128xf32>
    %cst_58 = arith.constant 0.00999999977 : f32
    %27 = vector.broadcast %cst_58 : f32 to vector<256x128xf32>
    %28 = arith.mulf %27, %24 : vector<256x128xf32>
    %29 = arith.select %26, %24, %28 : vector<256x128xi1>, vector<256x128xf32>
    %30 = vector.shape_cast %29 : vector<256x128xf32> to vector<1x16x16x128xf32>
    %c0_59 = arith.constant 0 : index
    %c1 = arith.constant 1 : index
    %c1_60 = arith.constant 1 : index
    %c0_61 = arith.constant 0 : index
    %31 = vector.load %arg13[%c0_59, %c1, %c1_60, %c0_61] : memref<1x18x18x128xf32, #tpu.memory_space<vmem>>, vector<1x16x16x128xf32>
    tpu.vector_store %arg13[%c0_59, %c1, %c1_60, %c0_61], %30 {strides = array<i32>} : memref<1x18x18x128xf32, #tpu.memory_space<vmem>>, vector<1x16x16x128xf32>,
    %c0_62 = arith.constant 0 : index
    %c0_63 = arith.constant 0 : index
    %c0_64 = arith.constant 0 : index
    %c0_65 = arith.constant 0 : index
    %32 = tpu.strided_load %arg13[%c0_62, %c0_63, %c0_64, %c0_65] {strides = array<i32: 1, 1, 2, 1>} : memref<1x18x18x128xf32, #tpu.memory_space<vmem>>, vector<1x18x8x128xf32>
    %33 = arith.truncf %32 : vector<1x18x8x128xf32> to vector<1x18x8x128xbf16>
    %34 = vector.shape_cast %33 : vector<1x18x8x128xbf16> to vector<1x9x2x8x128xbf16>
    %c0_66 = arith.constant 0 : index
    %c0_67 = arith.constant 0 : index
    %c1_68 = arith.constant 1 : index
    %c0_69 = arith.constant 0 : index
    %35 = tpu.strided_load %arg13[%c0_66, %c0_67, %c1_68, %c0_69] {strides = array<i32: 1, 1, 2, 1>} : memref<1x18x18x128xf32, #tpu.memory_space<vmem>>, vector<1x18x8x128xf32>
    %36 = arith.truncf %35 : vector<1x18x8x128xf32> to vector<1x18x8x128xbf16>
    %37 = vector.shape_cast %36 : vector<1x18x8x128xbf16> to vector<1x9x2x8x128xbf16>
    %c0_70 = arith.constant 0 : index
    %c0_71 = arith.constant 0 : index
    %c2 = arith.constant 2 : index
    %c0_72 = arith.constant 0 : index
    %38 = tpu.strided_load %arg13[%c0_70, %c0_71, %c2, %c0_72] {strides = array<i32: 1, 1, 2, 1>} : memref<1x18x18x128xf32, #tpu.memory_space<vmem>>, vector<1x18x8x128xf32>
    %39 = arith.truncf %38 : vector<1x18x8x128xf32> to vector<1x18x8x128xbf16>
    %40 = vector.shape_cast %39 : vector<1x18x8x128xbf16> to vector<1x9x2x8x128xbf16>
    %41 = vector.extract_strided_slice %34 {offsets = [0, 0, 0, 0, 0], sizes = [1, 8, 1, 8, 128], strides = [1, 1, 1, 1, 1]} : vector<1x9x2x8x128xbf16> to vector<1x8x1x8x128xbf16>
    %42 = vector.shape_cast %41 : vector<1x8x1x8x128xbf16> to vector<1x8x8x128xbf16>
    %43 = vector.extract_strided_slice %37 {offsets = [0, 0, 0, 0, 0], sizes = [1, 8, 1, 8, 128], strides = [1, 1, 1, 1, 1]} : vector<1x9x2x8x128xbf16> to vector<1x8x1x8x128xbf16>
    %44 = vector.shape_cast %43 : vector<1x8x1x8x128xbf16> to vector<1x8x8x128xbf16>
    %45 = vector.extract_strided_slice %40 {offsets = [0, 0, 0, 0, 0], sizes = [1, 8, 1, 8, 128], strides = [1, 1, 1, 1, 1]} : vector<1x9x2x8x128xbf16> to vector<1x8x1x8x128xbf16>
    %46 = vector.shape_cast %45 : vector<1x8x1x8x128xbf16> to vector<1x8x8x128xbf16>
    %47 = vector.extract_strided_slice %34 {offsets = [0, 0, 1, 0, 0], sizes = [1, 8, 1, 8, 128], strides = [1, 1, 1, 1, 1]} : vector<1x9x2x8x128xbf16> to vector<1x8x1x8x128xbf16>
    %48 = vector.shape_cast %47 : vector<1x8x1x8x128xbf16> to vector<1x8x8x128xbf16>
    %49 = vector.extract_strided_slice %37 {offsets = [0, 0, 1, 0, 0], sizes = [1, 8, 1, 8, 128], strides = [1, 1, 1, 1, 1]} : vector<1x9x2x8x128xbf16> to vector<1x8x1x8x128xbf16>
    %50 = vector.shape_cast %49 : vector<1x8x1x8x128xbf16> to vector<1x8x8x128xbf16>
    %51 = vector.extract_strided_slice %40 {offsets = [0, 0, 1, 0, 0], sizes = [1, 8, 1, 8, 128], strides = [1, 1, 1, 1, 1]} : vector<1x9x2x8x128xbf16> to vector<1x8x1x8x128xbf16>
    %52 = vector.shape_cast %51 : vector<1x8x1x8x128xbf16> to vector<1x8x8x128xbf16>
    %53 = vector.extract_strided_slice %34 {offsets = [0, 1, 0, 0, 0], sizes = [1, 8, 1, 8, 128], strides = [1, 1, 1, 1, 1]} : vector<1x9x2x8x128xbf16> to vector<1x8x1x8x128xbf16>
    %54 = vector.shape_cast %53 : vector<1x8x1x8x128xbf16> to vector<1x8x8x128xbf16>
    %55 = vector.extract_strided_slice %37 {offsets = [0, 1, 0, 0, 0], sizes = [1, 8, 1, 8, 128], strides = [1, 1, 1, 1, 1]} : vector<1x9x2x8x128xbf16> to vector<1x8x1x8x128xbf16>
    %56 = vector.shape_cast %55 : vector<1x8x1x8x128xbf16> to vector<1x8x8x128xbf16>
    %57 = vector.extract_strided_slice %40 {offsets = [0, 1, 0, 0, 0], sizes = [1, 8, 1, 8, 128], strides = [1, 1, 1, 1, 1]} : vector<1x9x2x8x128xbf16> to vector<1x8x1x8x128xbf16>
    %58 = vector.shape_cast %57 : vector<1x8x1x8x128xbf16> to vector<1x8x8x128xbf16>
    %59 = tpu.concatenate %42, %44, %46 in 3 : vector<1x8x8x128xbf16>, vector<1x8x8x128xbf16>, vector<1x8x8x128xbf16> -> vector<1x8x8x384xbf16>
    %60 = vector.shape_cast %59 : vector<1x8x8x384xbf16> to vector<64x384xbf16>
    %c0_73 = arith.constant 0 : index
    %c0_74 = arith.constant 0 : index
    %c0_75 = arith.constant 0 : index
    %61 = vector.load %arg4[%c0_73, %c0_74, %c0_75] : memref<3x384x128xbf16, #tpu.memory_space<vmem>>, vector<1x384x128xbf16>
    %62 = vector.shape_cast %61 : vector<1x384x128xbf16> to vector<384x128xbf16>
    %cst_76 = arith.constant dense<0.000000e+00> : vector<64x128xf32>
    %63 = tpu.matmul %60, %62, %cst_76 {dimension_numbers = #tpu.dot_dimension_numbers<[1], [0], [0], [1], [0, 0, 1, 1], [], []>} : vector<64x384xbf16>, vector<384x128xbf16>, vector<64x128xf32> -> vector<64x128xf32>
    %64 = tpu.concatenate %48, %50, %52 in 3 : vector<1x8x8x128xbf16>, vector<1x8x8x128xbf16>, vector<1x8x8x128xbf16> -> vector<1x8x8x384xbf16>
    %65 = vector.shape_cast %64 : vector<1x8x8x384xbf16> to vector<64x384xbf16>
    %c1_77 = arith.constant 1 : index
    %c0_78 = arith.constant 0 : index
    %c0_79 = arith.constant 0 : index
    %66 = vector.load %arg4[%c1_77, %c0_78, %c0_79] : memref<3x384x128xbf16, #tpu.memory_space<vmem>>, vector<1x384x128xbf16>
    %67 = vector.shape_cast %66 : vector<1x384x128xbf16> to vector<384x128xbf16>
    %cst_80 = arith.constant dense<0.000000e+00> : vector<64x128xf32>
    %68 = tpu.matmul %65, %67, %cst_80 {dimension_numbers = #tpu.dot_dimension_numbers<[1], [0], [0], [1], [0, 0, 1, 1], [], []>} : vector<64x384xbf16>, vector<384x128xbf16>, vector<64x128xf32> -> vector<64x128xf32>
    %69 = arith.addf %63, %68 : vector<64x128xf32>
    %70 = tpu.concatenate %54, %56, %58 in 3 : vector<1x8x8x128xbf16>, vector<1x8x8x128xbf16>, vector<1x8x8x128xbf16> -> vector<1x8x8x384xbf16>
    %71 = vector.shape_cast %70 : vector<1x8x8x384xbf16> to vector<64x384xbf16>
    %c2_81 = arith.constant 2 : index
    %c0_82 = arith.constant 0 : index
    %c0_83 = arith.constant 0 : index
    %72 = vector.load %arg4[%c2_81, %c0_82, %c0_83] : memref<3x384x128xbf16, #tpu.memory_space<vmem>>, vector<1x384x128xbf16>
    %73 = vector.shape_cast %72 : vector<1x384x128xbf16> to vector<384x128xbf16>
    %cst_84 = arith.constant dense<0.000000e+00> : vector<64x128xf32>
    %74 = tpu.matmul %71, %73, %cst_84 {dimension_numbers = #tpu.dot_dimension_numbers<[1], [0], [0], [1], [0, 0, 1, 1], [], []>} : vector<64x384xbf16>, vector<384x128xbf16>, vector<64x128xf32> -> vector<64x128xf32>
    %75 = arith.addf %69, %74 : vector<64x128xf32>
    %c0_85 = arith.constant 0 : index
    %c0_86 = arith.constant 0 : index
    %76 = vector.load %arg5[%c0_85, %c0_86] : memref<1x128xf32, #tpu.memory_space<vmem>>, vector<1x128xf32>
    %77 = vector.broadcast %76 : vector<1x128xf32> to vector<64x128xf32>
    %78 = arith.addf %75, %77 : vector<64x128xf32>
    %cst_87 = arith.constant 0.000000e+00 : f32
    %79 = vector.broadcast %cst_87 : f32 to vector<64x128xf32>
    %80 = arith.cmpf oge, %78, %79 : vector<64x128xf32>
    %cst_88 = arith.constant 0.00999999977 : f32
    %81 = vector.broadcast %cst_88 : f32 to vector<64x128xf32>
    %82 = arith.mulf %81, %78 : vector<64x128xf32>
    %83 = arith.select %80, %78, %82 : vector<64x128xi1>, vector<64x128xf32>
    %84 = vector.shape_cast %83 : vector<64x128xf32> to vector<1x8x8x128xf32>
    %c0_89 = arith.constant 0 : index
    %c1_90 = arith.constant 1 : index
    %c1_91 = arith.constant 1 : index
    %c0_92 = arith.constant 0 : index
    %85 = vector.load %arg14[%c0_89, %c1_90, %c1_91, %c0_92] : memref<1x10x10x128xf32, #tpu.memory_space<vmem>>, vector<1x8x8x128xf32>
    tpu.vector_store %arg14[%c0_89, %c1_90, %c1_91, %c0_92], %84 {strides = array<i32>} : memref<1x10x10x128xf32, #tpu.memory_space<vmem>>, vector<1x8x8x128xf32>,
    %c0_93 = arith.constant 0 : index
    %c0_94 = arith.constant 0 : index
    %c0_95 = arith.constant 0 : index
    %c0_96 = arith.constant 0 : index
    %86 = tpu.strided_load %arg14[%c0_93, %c0_94, %c0_95, %c0_96] {strides = array<i32: 1, 1, 2, 1>} : memref<1x10x10x128xf32, #tpu.memory_space<vmem>>, vector<1x10x4x128xf32>
    %87 = arith.truncf %86 : vector<1x10x4x128xf32> to vector<1x10x4x128xbf16>
    %88 = vector.shape_cast %87 : vector<1x10x4x128xbf16> to vector<1x5x2x4x128xbf16>
    %c0_97 = arith.constant 0 : index
    %c0_98 = arith.constant 0 : index
    %c1_99 = arith.constant 1 : index
    %c0_100 = arith.constant 0 : index
    %89 = tpu.strided_load %arg14[%c0_97, %c0_98, %c1_99, %c0_100] {strides = array<i32: 1, 1, 2, 1>} : memref<1x10x10x128xf32, #tpu.memory_space<vmem>>, vector<1x10x4x128xf32>
    %90 = arith.truncf %89 : vector<1x10x4x128xf32> to vector<1x10x4x128xbf16>
    %91 = vector.shape_cast %90 : vector<1x10x4x128xbf16> to vector<1x5x2x4x128xbf16>
    %c0_101 = arith.constant 0 : index
    %c0_102 = arith.constant 0 : index
    %c2_103 = arith.constant 2 : index
    %c0_104 = arith.constant 0 : index
    %92 = tpu.strided_load %arg14[%c0_101, %c0_102, %c2_103, %c0_104] {strides = array<i32: 1, 1, 2, 1>} : memref<1x10x10x128xf32, #tpu.memory_space<vmem>>, vector<1x10x4x128xf32>
    %93 = arith.truncf %92 : vector<1x10x4x128xf32> to vector<1x10x4x128xbf16>
    %94 = vector.shape_cast %93 : vector<1x10x4x128xbf16> to vector<1x5x2x4x128xbf16>
    %95 = vector.extract_strided_slice %88 {offsets = [0, 0, 0, 0, 0], sizes = [1, 4, 1, 4, 128], strides = [1, 1, 1, 1, 1]} : vector<1x5x2x4x128xbf16> to vector<1x4x1x4x128xbf16>
    %96 = vector.shape_cast %95 : vector<1x4x1x4x128xbf16> to vector<1x4x4x128xbf16>
    %97 = vector.extract_strided_slice %91 {offsets = [0, 0, 0, 0, 0], sizes = [1, 4, 1, 4, 128], strides = [1, 1, 1, 1, 1]} : vector<1x5x2x4x128xbf16> to vector<1x4x1x4x128xbf16>
    %98 = vector.shape_cast %97 : vector<1x4x1x4x128xbf16> to vector<1x4x4x128xbf16>
    %99 = vector.extract_strided_slice %94 {offsets = [0, 0, 0, 0, 0], sizes = [1, 4, 1, 4, 128], strides = [1, 1, 1, 1, 1]} : vector<1x5x2x4x128xbf16> to vector<1x4x1x4x128xbf16>
    %100 = vector.shape_cast %99 : vector<1x4x1x4x128xbf16> to vector<1x4x4x128xbf16>
    %101 = vector.extract_strided_slice %88 {offsets = [0, 0, 1, 0, 0], sizes = [1, 4, 1, 4, 128], strides = [1, 1, 1, 1, 1]} : vector<1x5x2x4x128xbf16> to vector<1x4x1x4x128xbf16>
    %102 = vector.shape_cast %101 : vector<1x4x1x4x128xbf16> to vector<1x4x4x128xbf16>
    %103 = vector.extract_strided_slice %91 {offsets = [0, 0, 1, 0, 0], sizes = [1, 4, 1, 4, 128], strides = [1, 1, 1, 1, 1]} : vector<1x5x2x4x128xbf16> to vector<1x4x1x4x128xbf16>
    %104 = vector.shape_cast %103 : vector<1x4x1x4x128xbf16> to vector<1x4x4x128xbf16>
    %105 = vector.extract_strided_slice %94 {offsets = [0, 0, 1, 0, 0], sizes = [1, 4, 1, 4, 128], strides = [1, 1, 1, 1, 1]} : vector<1x5x2x4x128xbf16> to vector<1x4x1x4x128xbf16>
    %106 = vector.shape_cast %105 : vector<1x4x1x4x128xbf16> to vector<1x4x4x128xbf16>
    %107 = vector.extract_strided_slice %88 {offsets = [0, 1, 0, 0, 0], sizes = [1, 4, 1, 4, 128], strides = [1, 1, 1, 1, 1]} : vector<1x5x2x4x128xbf16> to vector<1x4x1x4x128xbf16>
    %108 = vector.shape_cast %107 : vector<1x4x1x4x128xbf16> to vector<1x4x4x128xbf16>
    %109 = vector.extract_strided_slice %91 {offsets = [0, 1, 0, 0, 0], sizes = [1, 4, 1, 4, 128], strides = [1, 1, 1, 1, 1]} : vector<1x5x2x4x128xbf16> to vector<1x4x1x4x128xbf16>
    %110 = vector.shape_cast %109 : vector<1x4x1x4x128xbf16> to vector<1x4x4x128xbf16>
    %111 = vector.extract_strided_slice %94 {offsets = [0, 1, 0, 0, 0], sizes = [1, 4, 1, 4, 128], strides = [1, 1, 1, 1, 1]} : vector<1x5x2x4x128xbf16> to vector<1x4x1x4x128xbf16>
    %112 = vector.shape_cast %111 : vector<1x4x1x4x128xbf16> to vector<1x4x4x128xbf16>
    %113 = tpu.concatenate %96, %98, %100 in 3 : vector<1x4x4x128xbf16>, vector<1x4x4x128xbf16>, vector<1x4x4x128xbf16> -> vector<1x4x4x384xbf16>
    %114 = vector.extract_strided_slice %113 {offsets = [0, 0, 0, 0], sizes = [1, 1, 4, 384], strides = [1, 1, 1, 1]} : vector<1x4x4x384xbf16> to vector<1x1x4x384xbf16>
    %115 = vector.shape_cast %114 : vector<1x1x4x384xbf16> to vector<1x4x384xbf16>
    %116 = vector.extract_strided_slice %113 {offsets = [0, 1, 0, 0], sizes = [1, 1, 4, 384], strides = [1, 1, 1, 1]} : vector<1x4x4x384xbf16> to vector<1x1x4x384xbf16>
    %117 = vector.shape_cast %116 : vector<1x1x4x384xbf16> to vector<1x4x384xbf16>
    %118 = vector.extract_strided_slice %113 {offsets = [0, 2, 0, 0], sizes = [1, 1, 4, 384], strides = [1, 1, 1, 1]} : vector<1x4x4x384xbf16> to vector<1x1x4x384xbf16>
    %119 = vector.shape_cast %118 : vector<1x1x4x384xbf16> to vector<1x4x384xbf16>
    %120 = vector.extract_strided_slice %113 {offsets = [0, 3, 0, 0], sizes = [1, 1, 4, 384], strides = [1, 1, 1, 1]} : vector<1x4x4x384xbf16> to vector<1x1x4x384xbf16>
    %121 = vector.shape_cast %120 : vector<1x1x4x384xbf16> to vector<1x4x384xbf16>
    %122 = tpu.concatenate %115, %117, %119, %121 in 1 : vector<1x4x384xbf16>, vector<1x4x384xbf16>, vector<1x4x384xbf16>, vector<1x4x384xbf16> -> vector<1x16x384xbf16>
    %123 = vector.shape_cast %122 : vector<1x16x384xbf16> to vector<16x384xbf16>
    %c0_105 = arith.constant 0 : index
    %c0_106 = arith.constant 0 : index
    %c0_107 = arith.constant 0 : index
    %124 = vector.load %arg6[%c0_105, %c0_106, %c0_107] : memref<3x384x128xbf16, #tpu.memory_space<vmem>>, vector<1x384x128xbf16>
    %125 = vector.shape_cast %124 : vector<1x384x128xbf16> to vector<384x128xbf16>
    %cst_108 = arith.constant dense<0.000000e+00> : vector<16x128xf32>
    %126 = tpu.matmul %123, %125, %cst_108 {dimension_numbers = #tpu.dot_dimension_numbers<[1], [0], [0], [1], [0, 0, 1, 1], [], []>} : vector<16x384xbf16>, vector<384x128xbf16>, vector<16x128xf32> -> vector<16x128xf32>
    %127 = tpu.concatenate %102, %104, %106 in 3 : vector<1x4x4x128xbf16>, vector<1x4x4x128xbf16>, vector<1x4x4x128xbf16> -> vector<1x4x4x384xbf16>
    %128 = vector.extract_strided_slice %127 {offsets = [0, 0, 0, 0], sizes = [1, 1, 4, 384], strides = [1, 1, 1, 1]} : vector<1x4x4x384xbf16> to vector<1x1x4x384xbf16>
    %129 = vector.shape_cast %128 : vector<1x1x4x384xbf16> to vector<1x4x384xbf16>
    %130 = vector.extract_strided_slice %127 {offsets = [0, 1, 0, 0], sizes = [1, 1, 4, 384], strides = [1, 1, 1, 1]} : vector<1x4x4x384xbf16> to vector<1x1x4x384xbf16>
    %131 = vector.shape_cast %130 : vector<1x1x4x384xbf16> to vector<1x4x384xbf16>
    %132 = vector.extract_strided_slice %127 {offsets = [0, 2, 0, 0], sizes = [1, 1, 4, 384], strides = [1, 1, 1, 1]} : vector<1x4x4x384xbf16> to vector<1x1x4x384xbf16>
    %133 = vector.shape_cast %132 : vector<1x1x4x384xbf16> to vector<1x4x384xbf16>
    %134 = vector.extract_strided_slice %127 {offsets = [0, 3, 0, 0], sizes = [1, 1, 4, 384], strides = [1, 1, 1, 1]} : vector<1x4x4x384xbf16> to vector<1x1x4x384xbf16>
    %135 = vector.shape_cast %134 : vector<1x1x4x384xbf16> to vector<1x4x384xbf16>
    %136 = tpu.concatenate %129, %131, %133, %135 in 1 : vector<1x4x384xbf16>, vector<1x4x384xbf16>, vector<1x4x384xbf16>, vector<1x4x384xbf16> -> vector<1x16x384xbf16>
    %137 = vector.shape_cast %136 : vector<1x16x384xbf16> to vector<16x384xbf16>
    %c1_109 = arith.constant 1 : index
    %c0_110 = arith.constant 0 : index
    %c0_111 = arith.constant 0 : index
    %138 = vector.load %arg6[%c1_109, %c0_110, %c0_111] : memref<3x384x128xbf16, #tpu.memory_space<vmem>>, vector<1x384x128xbf16>
    %139 = vector.shape_cast %138 : vector<1x384x128xbf16> to vector<384x128xbf16>
    %cst_112 = arith.constant dense<0.000000e+00> : vector<16x128xf32>
    %140 = tpu.matmul %137, %139, %cst_112 {dimension_numbers = #tpu.dot_dimension_numbers<[1], [0], [0], [1], [0, 0, 1, 1], [], []>} : vector<16x384xbf16>, vector<384x128xbf16>, vector<16x128xf32> -> vector<16x128xf32>
    %141 = arith.addf %126, %140 : vector<16x128xf32>
    %142 = tpu.concatenate %108, %110, %112 in 3 : vector<1x4x4x128xbf16>, vector<1x4x4x128xbf16>, vector<1x4x4x128xbf16> -> vector<1x4x4x384xbf16>
    %143 = vector.extract_strided_slice %142 {offsets = [0, 0, 0, 0], sizes = [1, 1, 4, 384], strides = [1, 1, 1, 1]} : vector<1x4x4x384xbf16> to vector<1x1x4x384xbf16>
    %144 = vector.shape_cast %143 : vector<1x1x4x384xbf16> to vector<1x4x384xbf16>
    %145 = vector.extract_strided_slice %142 {offsets = [0, 1, 0, 0], sizes = [1, 1, 4, 384], strides = [1, 1, 1, 1]} : vector<1x4x4x384xbf16> to vector<1x1x4x384xbf16>
    %146 = vector.shape_cast %145 : vector<1x1x4x384xbf16> to vector<1x4x384xbf16>
    %147 = vector.extract_strided_slice %142 {offsets = [0, 2, 0, 0], sizes = [1, 1, 4, 384], strides = [1, 1, 1, 1]} : vector<1x4x4x384xbf16> to vector<1x1x4x384xbf16>
    %148 = vector.shape_cast %147 : vector<1x1x4x384xbf16> to vector<1x4x384xbf16>
    %149 = vector.extract_strided_slice %142 {offsets = [0, 3, 0, 0], sizes = [1, 1, 4, 384], strides = [1, 1, 1, 1]} : vector<1x4x4x384xbf16> to vector<1x1x4x384xbf16>
    %150 = vector.shape_cast %149 : vector<1x1x4x384xbf16> to vector<1x4x384xbf16>
    %151 = tpu.concatenate %144, %146, %148, %150 in 1 : vector<1x4x384xbf16>, vector<1x4x384xbf16>, vector<1x4x384xbf16>, vector<1x4x384xbf16> -> vector<1x16x384xbf16>
    %152 = vector.shape_cast %151 : vector<1x16x384xbf16> to vector<16x384xbf16>
    %c2_113 = arith.constant 2 : index
    %c0_114 = arith.constant 0 : index
    %c0_115 = arith.constant 0 : index
    %153 = vector.load %arg6[%c2_113, %c0_114, %c0_115] : memref<3x384x128xbf16, #tpu.memory_space<vmem>>, vector<1x384x128xbf16>
    %154 = vector.shape_cast %153 : vector<1x384x128xbf16> to vector<384x128xbf16>
    %cst_116 = arith.constant dense<0.000000e+00> : vector<16x128xf32>
    %155 = tpu.matmul %152, %154, %cst_116 {dimension_numbers = #tpu.dot_dimension_numbers<[1], [0], [0], [1], [0, 0, 1, 1], [], []>} : vector<16x384xbf16>, vector<384x128xbf16>, vector<16x128xf32> -> vector<16x128xf32>
    %156 = arith.addf %141, %155 : vector<16x128xf32>
    %c0_117 = arith.constant 0 : index
    %c0_118 = arith.constant 0 : index
    %157 = vector.load %arg7[%c0_117, %c0_118] : memref<1x128xf32, #tpu.memory_space<vmem>>, vector<1x128xf32>
    %158 = vector.broadcast %157 : vector<1x128xf32> to vector<16x128xf32>
    %159 = arith.addf %156, %158 : vector<16x128xf32>
    %cst_119 = arith.constant 0.000000e+00 : f32
    %160 = vector.broadcast %cst_119 : f32 to vector<16x128xf32>
    %161 = arith.cmpf oge, %159, %160 : vector<16x128xf32>
    %cst_120 = arith.constant 0.00999999977 : f32
    %162 = vector.broadcast %cst_120 : f32 to vector<16x128xf32>
    %163 = arith.mulf %162, %159 : vector<16x128xf32>
    %164 = arith.select %161, %159, %163 : vector<16x128xi1>, vector<16x128xf32>
    %165 = vector.extract_strided_slice %164 {offsets = [0, 0], sizes = [4, 128], strides = [1, 1]} : vector<16x128xf32> to vector<4x128xf32>
    %166 = vector.shape_cast %165 : vector<4x128xf32> to vector<1x1x4x128xf32>
    %c0_121 = arith.constant 0 : index
    %c1_122 = arith.constant 1 : index
    %c1_123 = arith.constant 1 : index
    %c0_124 = arith.constant 0 : index
    %167 = vector.load %arg15[%c0_121, %c1_122, %c1_123, %c0_124] : memref<1x6x6x128xf32, #tpu.memory_space<vmem>>, vector<1x1x4x128xf32>
    tpu.vector_store %arg15[%c0_121, %c1_122, %c1_123, %c0_124], %166 {strides = array<i32>} : memref<1x6x6x128xf32, #tpu.memory_space<vmem>>, vector<1x1x4x128xf32>,
    %168 = vector.extract_strided_slice %164 {offsets = [4, 0], sizes = [4, 128], strides = [1, 1]} : vector<16x128xf32> to vector<4x128xf32>
    %169 = vector.shape_cast %168 : vector<4x128xf32> to vector<1x1x4x128xf32>
    %c0_125 = arith.constant 0 : index
    %c2_126 = arith.constant 2 : index
    %c1_127 = arith.constant 1 : index
    %c0_128 = arith.constant 0 : index
    %170 = vector.load %arg15[%c0_125, %c2_126, %c1_127, %c0_128] : memref<1x6x6x128xf32, #tpu.memory_space<vmem>>, vector<1x1x4x128xf32>
    tpu.vector_store %arg15[%c0_125, %c2_126, %c1_127, %c0_128], %169 {strides = array<i32>} : memref<1x6x6x128xf32, #tpu.memory_space<vmem>>, vector<1x1x4x128xf32>,
    %171 = vector.extract_strided_slice %164 {offsets = [8, 0], sizes = [4, 128], strides = [1, 1]} : vector<16x128xf32> to vector<4x128xf32>
    %172 = vector.shape_cast %171 : vector<4x128xf32> to vector<1x1x4x128xf32>
    %c0_129 = arith.constant 0 : index
    %c3 = arith.constant 3 : index
    %c1_130 = arith.constant 1 : index
    %c0_131 = arith.constant 0 : index
    %173 = vector.load %arg15[%c0_129, %c3, %c1_130, %c0_131] : memref<1x6x6x128xf32, #tpu.memory_space<vmem>>, vector<1x1x4x128xf32>
    tpu.vector_store %arg15[%c0_129, %c3, %c1_130, %c0_131], %172 {strides = array<i32>} : memref<1x6x6x128xf32, #tpu.memory_space<vmem>>, vector<1x1x4x128xf32>,
    %174 = vector.extract_strided_slice %164 {offsets = [12, 0], sizes = [4, 128], strides = [1, 1]} : vector<16x128xf32> to vector<4x128xf32>
    %175 = vector.shape_cast %174 : vector<4x128xf32> to vector<1x1x4x128xf32>
    %c0_132 = arith.constant 0 : index
    %c4 = arith.constant 4 : index
    %c1_133 = arith.constant 1 : index
    %c0_134 = arith.constant 0 : index
    %176 = vector.load %arg15[%c0_132, %c4, %c1_133, %c0_134] : memref<1x6x6x128xf32, #tpu.memory_space<vmem>>, vector<1x1x4x128xf32>
    tpu.vector_store %arg15[%c0_132, %c4, %c1_133, %c0_134], %175 {strides = array<i32>} : memref<1x6x6x128xf32, #tpu.memory_space<vmem>>, vector<1x1x4x128xf32>,
    %c0_135 = arith.constant 0 : index
    %c0_136 = arith.constant 0 : index
    %c0_137 = arith.constant 0 : index
    %c0_138 = arith.constant 0 : index
    %177 = vector.load %arg15[%c0_135, %c0_136, %c0_137, %c0_138] : memref<1x6x6x128xf32, #tpu.memory_space<vmem>>, vector<1x4x4x128xf32>
    %178 = arith.truncf %177 : vector<1x4x4x128xf32> to vector<1x4x4x128xbf16>
    %c0_139 = arith.constant 0 : index
    %c0_140 = arith.constant 0 : index
    %c1_141 = arith.constant 1 : index
    %c0_142 = arith.constant 0 : index
    %179 = vector.load %arg15[%c0_139, %c0_140, %c1_141, %c0_142] : memref<1x6x6x128xf32, #tpu.memory_space<vmem>>, vector<1x4x4x128xf32>
    %180 = arith.truncf %179 : vector<1x4x4x128xf32> to vector<1x4x4x128xbf16>
    %c0_143 = arith.constant 0 : index
    %c0_144 = arith.constant 0 : index
    %c2_145 = arith.constant 2 : index
    %c0_146 = arith.constant 0 : index
    %181 = vector.load %arg15[%c0_143, %c0_144, %c2_145, %c0_146] : memref<1x6x6x128xf32, #tpu.memory_space<vmem>>, vector<1x4x4x128xf32>
    %182 = arith.truncf %181 : vector<1x4x4x128xf32> to vector<1x4x4x128xbf16>
    %c0_147 = arith.constant 0 : index
    %c1_148 = arith.constant 1 : index
    %c0_149 = arith.constant 0 : index
    %c0_150 = arith.constant 0 : index
    %183 = vector.load %arg15[%c0_147, %c1_148, %c0_149, %c0_150] : memref<1x6x6x128xf32, #tpu.memory_space<vmem>>, vector<1x4x4x128xf32>
    %184 = arith.truncf %183 : vector<1x4x4x128xf32> to vector<1x4x4x128xbf16>
    %c0_151 = arith.constant 0 : index
    %c1_152 = arith.constant 1 : index
    %c1_153 = arith.constant 1 : index
    %c0_154 = arith.constant 0 : index
    %185 = vector.load %arg15[%c0_151, %c1_152, %c1_153, %c0_154] : memref<1x6x6x128xf32, #tpu.memory_space<vmem>>, vector<1x4x4x128xf32>
    %186 = arith.truncf %185 : vector<1x4x4x128xf32> to vector<1x4x4x128xbf16>
    %c0_155 = arith.constant 0 : index
    %c1_156 = arith.constant 1 : index
    %c2_157 = arith.constant 2 : index
    %c0_158 = arith.constant 0 : index
    %187 = vector.load %arg15[%c0_155, %c1_156, %c2_157, %c0_158] : memref<1x6x6x128xf32, #tpu.memory_space<vmem>>, vector<1x4x4x128xf32>
    %188 = arith.truncf %187 : vector<1x4x4x128xf32> to vector<1x4x4x128xbf16>
    %c0_159 = arith.constant 0 : index
    %c2_160 = arith.constant 2 : index
    %c0_161 = arith.constant 0 : index
    %c0_162 = arith.constant 0 : index
    %189 = vector.load %arg15[%c0_159, %c2_160, %c0_161, %c0_162] : memref<1x6x6x128xf32, #tpu.memory_space<vmem>>, vector<1x4x4x128xf32>
    %190 = arith.truncf %189 : vector<1x4x4x128xf32> to vector<1x4x4x128xbf16>
    %c0_163 = arith.constant 0 : index
    %c2_164 = arith.constant 2 : index
    %c1_165 = arith.constant 1 : index
    %c0_166 = arith.constant 0 : index
    %191 = vector.load %arg15[%c0_163, %c2_164, %c1_165, %c0_166] : memref<1x6x6x128xf32, #tpu.memory_space<vmem>>, vector<1x4x4x128xf32>
    %192 = arith.truncf %191 : vector<1x4x4x128xf32> to vector<1x4x4x128xbf16>
    %c0_167 = arith.constant 0 : index
    %c2_168 = arith.constant 2 : index
    %c2_169 = arith.constant 2 : index
    %c0_170 = arith.constant 0 : index
    %193 = vector.load %arg15[%c0_167, %c2_168, %c2_169, %c0_170] : memref<1x6x6x128xf32, #tpu.memory_space<vmem>>, vector<1x4x4x128xf32>
    %194 = arith.truncf %193 : vector<1x4x4x128xf32> to vector<1x4x4x128xbf16>
    %195 = tpu.concatenate %178, %180, %182 in 3 : vector<1x4x4x128xbf16>, vector<1x4x4x128xbf16>, vector<1x4x4x128xbf16> -> vector<1x4x4x384xbf16>
    %196 = vector.extract_strided_slice %195 {offsets = [0, 0, 0, 0], sizes = [1, 1, 4, 384], strides = [1, 1, 1, 1]} : vector<1x4x4x384xbf16> to vector<1x1x4x384xbf16>
    %197 = vector.shape_cast %196 : vector<1x1x4x384xbf16> to vector<1x4x384xbf16>
    %198 = vector.extract_strided_slice %195 {offsets = [0, 1, 0, 0], sizes = [1, 1, 4, 384], strides = [1, 1, 1, 1]} : vector<1x4x4x384xbf16> to vector<1x1x4x384xbf16>
    %199 = vector.shape_cast %198 : vector<1x1x4x384xbf16> to vector<1x4x384xbf16>
    %200 = vector.extract_strided_slice %195 {offsets = [0, 2, 0, 0], sizes = [1, 1, 4, 384], strides = [1, 1, 1, 1]} : vector<1x4x4x384xbf16> to vector<1x1x4x384xbf16>
    %201 = vector.shape_cast %200 : vector<1x1x4x384xbf16> to vector<1x4x384xbf16>
    %202 = vector.extract_strided_slice %195 {offsets = [0, 3, 0, 0], sizes = [1, 1, 4, 384], strides = [1, 1, 1, 1]} : vector<1x4x4x384xbf16> to vector<1x1x4x384xbf16>
    %203 = vector.shape_cast %202 : vector<1x1x4x384xbf16> to vector<1x4x384xbf16>
    %204 = tpu.concatenate %197, %199, %201, %203 in 1 : vector<1x4x384xbf16>, vector<1x4x384xbf16>, vector<1x4x384xbf16>, vector<1x4x384xbf16> -> vector<1x16x384xbf16>
    %205 = vector.shape_cast %204 : vector<1x16x384xbf16> to vector<16x384xbf16>
    %c0_171 = arith.constant 0 : index
    %c0_172 = arith.constant 0 : index
    %c0_173 = arith.constant 0 : index
    %206 = vector.load %arg8[%c0_171, %c0_172, %c0_173] : memref<3x384x256xbf16, #tpu.memory_space<vmem>>, vector<1x384x256xbf16>
    %207 = vector.shape_cast %206 : vector<1x384x256xbf16> to vector<384x256xbf16>
    %cst_174 = arith.constant dense<0.000000e+00> : vector<16x256xf32>
    %208 = tpu.matmul %205, %207, %cst_174 {dimension_numbers = #tpu.dot_dimension_numbers<[1], [0], [0], [1], [0, 0, 1, 1], [], []>} : vector<16x384xbf16>, vector<384x256xbf16>, vector<16x256xf32> -> vector<16x256xf32>
    %209 = tpu.concatenate %184, %186, %188 in 3 : vector<1x4x4x128xbf16>, vector<1x4x4x128xbf16>, vector<1x4x4x128xbf16> -> vector<1x4x4x384xbf16>
    %210 = vector.extract_strided_slice %209 {offsets = [0, 0, 0, 0], sizes = [1, 1, 4, 384], strides = [1, 1, 1, 1]} : vector<1x4x4x384xbf16> to vector<1x1x4x384xbf16>
    %211 = vector.shape_cast %210 : vector<1x1x4x384xbf16> to vector<1x4x384xbf16>
    %212 = vector.extract_strided_slice %209 {offsets = [0, 1, 0, 0], sizes = [1, 1, 4, 384], strides = [1, 1, 1, 1]} : vector<1x4x4x384xbf16> to vector<1x1x4x384xbf16>
    %213 = vector.shape_cast %212 : vector<1x1x4x384xbf16> to vector<1x4x384xbf16>
    %214 = vector.extract_strided_slice %209 {offsets = [0, 2, 0, 0], sizes = [1, 1, 4, 384], strides = [1, 1, 1, 1]} : vector<1x4x4x384xbf16> to vector<1x1x4x384xbf16>
    %215 = vector.shape_cast %214 : vector<1x1x4x384xbf16> to vector<1x4x384xbf16>
    %216 = vector.extract_strided_slice %209 {offsets = [0, 3, 0, 0], sizes = [1, 1, 4, 384], strides = [1, 1, 1, 1]} : vector<1x4x4x384xbf16> to vector<1x1x4x384xbf16>
    %217 = vector.shape_cast %216 : vector<1x1x4x384xbf16> to vector<1x4x384xbf16>
    %218 = tpu.concatenate %211, %213, %215, %217 in 1 : vector<1x4x384xbf16>, vector<1x4x384xbf16>, vector<1x4x384xbf16>, vector<1x4x384xbf16> -> vector<1x16x384xbf16>
    %219 = vector.shape_cast %218 : vector<1x16x384xbf16> to vector<16x384xbf16>
    %c1_175 = arith.constant 1 : index
    %c0_176 = arith.constant 0 : index
    %c0_177 = arith.constant 0 : index
    %220 = vector.load %arg8[%c1_175, %c0_176, %c0_177] : memref<3x384x256xbf16, #tpu.memory_space<vmem>>, vector<1x384x256xbf16>
    %221 = vector.shape_cast %220 : vector<1x384x256xbf16> to vector<384x256xbf16>
    %cst_178 = arith.constant dense<0.000000e+00> : vector<16x256xf32>
    %222 = tpu.matmul %219, %221, %cst_178 {dimension_numbers = #tpu.dot_dimension_numbers<[1], [0], [0], [1], [0, 0, 1, 1], [], []>} : vector<16x384xbf16>, vector<384x256xbf16>, vector<16x256xf32> -> vector<16x256xf32>
    %223 = arith.addf %208, %222 : vector<16x256xf32>
    %224 = tpu.concatenate %190, %192, %194 in 3 : vector<1x4x4x128xbf16>, vector<1x4x4x128xbf16>, vector<1x4x4x128xbf16> -> vector<1x4x4x384xbf16>
    %225 = vector.extract_strided_slice %224 {offsets = [0, 0, 0, 0], sizes = [1, 1, 4, 384], strides = [1, 1, 1, 1]} : vector<1x4x4x384xbf16> to vector<1x1x4x384xbf16>
    %226 = vector.shape_cast %225 : vector<1x1x4x384xbf16> to vector<1x4x384xbf16>
    %227 = vector.extract_strided_slice %224 {offsets = [0, 1, 0, 0], sizes = [1, 1, 4, 384], strides = [1, 1, 1, 1]} : vector<1x4x4x384xbf16> to vector<1x1x4x384xbf16>
    %228 = vector.shape_cast %227 : vector<1x1x4x384xbf16> to vector<1x4x384xbf16>
    %229 = vector.extract_strided_slice %224 {offsets = [0, 2, 0, 0], sizes = [1, 1, 4, 384], strides = [1, 1, 1, 1]} : vector<1x4x4x384xbf16> to vector<1x1x4x384xbf16>
    %230 = vector.shape_cast %229 : vector<1x1x4x384xbf16> to vector<1x4x384xbf16>
    %231 = vector.extract_strided_slice %224 {offsets = [0, 3, 0, 0], sizes = [1, 1, 4, 384], strides = [1, 1, 1, 1]} : vector<1x4x4x384xbf16> to vector<1x1x4x384xbf16>
    %232 = vector.shape_cast %231 : vector<1x1x4x384xbf16> to vector<1x4x384xbf16>
    %233 = tpu.concatenate %226, %228, %230, %232 in 1 : vector<1x4x384xbf16>, vector<1x4x384xbf16>, vector<1x4x384xbf16>, vector<1x4x384xbf16> -> vector<1x16x384xbf16>
    %234 = vector.shape_cast %233 : vector<1x16x384xbf16> to vector<16x384xbf16>
    %c2_179 = arith.constant 2 : index
    %c0_180 = arith.constant 0 : index
    %c0_181 = arith.constant 0 : index
    %235 = vector.load %arg8[%c2_179, %c0_180, %c0_181] : memref<3x384x256xbf16, #tpu.memory_space<vmem>>, vector<1x384x256xbf16>
    %236 = vector.shape_cast %235 : vector<1x384x256xbf16> to vector<384x256xbf16>
    %cst_182 = arith.constant dense<0.000000e+00> : vector<16x256xf32>
    %237 = tpu.matmul %234, %236, %cst_182 {dimension_numbers = #tpu.dot_dimension_numbers<[1], [0], [0], [1], [0, 0, 1, 1], [], []>} : vector<16x384xbf16>, vector<384x256xbf16>, vector<16x256xf32> -> vector<16x256xf32>
    %238 = arith.addf %223, %237 : vector<16x256xf32>
    %c0_183 = arith.constant 0 : index
    %c0_184 = arith.constant 0 : index
    %239 = vector.load %arg9[%c0_183, %c0_184] : memref<1x256xf32, #tpu.memory_space<vmem>>, vector<1x256xf32>
    %240 = vector.broadcast %239 : vector<1x256xf32> to vector<16x256xf32>
    %241 = arith.addf %238, %240 : vector<16x256xf32>
    %cst_185 = arith.constant 0.000000e+00 : f32
    %242 = vector.broadcast %cst_185 : f32 to vector<16x256xf32>
    %243 = arith.cmpf oge, %241, %242 : vector<16x256xf32>
    %cst_186 = arith.constant 0.00999999977 : f32
    %244 = vector.broadcast %cst_186 : f32 to vector<16x256xf32>
    %245 = arith.mulf %244, %241 : vector<16x256xf32>
    %246 = arith.select %243, %241, %245 : vector<16x256xi1>, vector<16x256xf32>
    %cst_187 = arith.constant dense<0.000000e+00> : vector<256xf32>
    %247 = vector.multi_reduction <add>, %246, %cst_187 [0] : vector<16x256xf32> to vector<256xf32>
    %248 = vector.shape_cast %247 : vector<256xf32> to vector<1x256xf32>
    %cst_188 = arith.constant 6.250000e-02 : f32
    %249 = vector.broadcast %cst_188 : f32 to vector<1x256xf32>
    %250 = arith.mulf %248, %249 : vector<1x256xf32>
    %c0_189 = arith.constant 0 : index
    %c0_190 = arith.constant 0 : index
    %251 = vector.load %arg10[%c0_189, %c0_190] : memref<256x128xf32, #tpu.memory_space<vmem>>, vector<256x128xf32>
    %cst_191 = arith.constant dense<0.000000e+00> : vector<1x128xf32>
    %252 = tpu.matmul %250, %251, %cst_191 {dimension_numbers = #tpu.dot_dimension_numbers<[1], [0], [0], [1], [0, 0, 1, 1], [], []>} : vector<1x256xf32>, vector<256x128xf32>, vector<1x128xf32> -> vector<1x128xf32>
    %c0_192 = arith.constant 0 : index
    %c0_193 = arith.constant 0 : index
    %253 = vector.load %arg11[%c0_192, %c0_193] : memref<1x128xf32, #tpu.memory_space<vmem>>, vector<1x128xf32>
    %254 = arith.addf %252, %253 : vector<1x128xf32>
    %255 = vector.shape_cast %254 : vector<1x128xf32> to vector<1x1x128xf32>
    %c0_194 = arith.constant 0 : index
    %c0_195 = arith.constant 0 : index
    %c0_196 = arith.constant 0 : index
    %256 = vector.load %arg12[%c0_194, %c0_195, %c0_196] : memref<1x1x128xf32, #tpu.memory_space<vmem>>, vector<1x1x128xf32>
    tpu.vector_store %arg12[%c0_194, %c0_195, %c0_196], %255 {strides = array<i32>} : memref<1x1x128xf32, #tpu.memory_space<vmem>>, vector<1x1x128xf32>,
    return
  }
  func.func @transform_0(%arg0: i32) -> (i32, i32, i32) {
    %c0_i32 = arith.constant 0 : i32
    %c0_i32_0 = arith.constant 0 : i32
    %c0_i32_1 = arith.constant 0 : i32
    return %arg0, %c0_i32, %c0_i32_0 : i32, i32, i32
  }
  func.func @transform_1(%arg0: i32) -> (i32, i32) {
    %c0_i32 = arith.constant 0 : i32
    %c0_i32_0 = arith.constant 0 : i32
    %c0_i32_1 = arith.constant 0 : i32
    return %c0_i32, %c0_i32_0 : i32, i32
  }
  func.func @transform_2(%arg0: i32) -> (i32, i32) {
    %c0_i32 = arith.constant 0 : i32
    %c0_i32_0 = arith.constant 0 : i32
    %c0_i32_1 = arith.constant 0 : i32
    return %c0_i32, %c0_i32_0 : i32, i32
  }
  func.func @transform_3(%arg0: i32) -> (i32, i32, i32) {
    %c0_i32 = arith.constant 0 : i32
    %c0_i32_0 = arith.constant 0 : i32
    %c0_i32_1 = arith.constant 0 : i32
    %c0_i32_2 = arith.constant 0 : i32
    return %c0_i32, %c0_i32_0, %c0_i32_1 : i32, i32, i32
  }
  func.func @transform_4(%arg0: i32) -> (i32, i32) {
    %c0_i32 = arith.constant 0 : i32
    %c0_i32_0 = arith.constant 0 : i32
    %c0_i32_1 = arith.constant 0 : i32
    return %c0_i32, %c0_i32_0 : i32, i32
  }
  func.func @transform_5(%arg0: i32) -> (i32, i32, i32) {
    %c0_i32 = arith.constant 0 : i32
    %c0_i32_0 = arith.constant 0 : i32
    %c0_i32_1 = arith.constant 0 : i32
    %c0_i32_2 = arith.constant 0 : i32
    return %c0_i32, %c0_i32_0, %c0_i32_1 : i32, i32, i32
  }
  func.func @transform_6(%arg0: i32) -> (i32, i32) {
    %c0_i32 = arith.constant 0 : i32
    %c0_i32_0 = arith.constant 0 : i32
    %c0_i32_1 = arith.constant 0 : i32
    return %c0_i32, %c0_i32_0 : i32, i32
  }
  func.func @transform_7(%arg0: i32) -> (i32, i32, i32) {
    %c0_i32 = arith.constant 0 : i32
    %c0_i32_0 = arith.constant 0 : i32
    %c0_i32_1 = arith.constant 0 : i32
    %c0_i32_2 = arith.constant 0 : i32
    return %c0_i32, %c0_i32_0, %c0_i32_1 : i32, i32, i32
  }
  func.func @transform_8(%arg0: i32) -> (i32, i32) {
    %c0_i32 = arith.constant 0 : i32
    %c0_i32_0 = arith.constant 0 : i32
    %c0_i32_1 = arith.constant 0 : i32
    return %c0_i32, %c0_i32_0 : i32, i32
  }
  func.func @transform_9(%arg0: i32) -> (i32, i32) {
    %c0_i32 = arith.constant 0 : i32
    %c0_i32_0 = arith.constant 0 : i32
    %c0_i32_1 = arith.constant 0 : i32
    return %c0_i32, %c0_i32_0 : i32, i32
  }
  func.func @transform_10(%arg0: i32) -> (i32, i32) {
    %c0_i32 = arith.constant 0 : i32
    %c0_i32_0 = arith.constant 0 : i32
    %c0_i32_1 = arith.constant 0 : i32
    return %c0_i32, %c0_i32_0 : i32, i32
  }
  func.func @transform_11(%arg0: i32) -> (i32, i32, i32) {
    %c0_i32 = arith.constant 0 : i32
    %c0_i32_0 = arith.constant 0 : i32
    %c0_i32_1 = arith.constant 0 : i32
    return %arg0, %c0_i32, %c0_i32_0 : i32, i32, i32
  }
}

</mosaic_0001>

<llo_original>
// kernel: conv4_forward.1
$region0: #{conv4_forward.1}
  #allocation0 [shape = 'u32[]', space=smem, size = 0x4, offset = 0x4, fixed_abs, tag = 'smem constant byte address 0x4 - core index']
  #allocation1 [shape = 'u32[144,128]{1,0:T(1,128)}', space=vmem, size = 0x12000, scoped, tag = 'internal scratch']
  #allocation2 [shape = 'f32[1,18,18,128]{3,2,1,0:T(8,128)}', space=vmem, size = 0x36000, scoped, tag = 'scratch operand']
  #allocation3 [shape = 'f32[1,10,10,128]{3,2,1,0:T(8,128)}', space=vmem, size = 0x14000, scoped, tag = 'scratch operand']
  #allocation4 [shape = 'f32[1,6,6,128]{3,2,1,0:T(8,128)}', space=vmem, size = 0x6000, scoped, tag = 'scratch operand']
  %s0 = inlined_call_operand.vmem [shape: bf16[2,256,128], index: 0, kind: input, shape index: {}]
  %s1 = inlined_call_operand.vmem [shape: bf16[128,128], index: 1, kind: input, shape index: {}]
  %s2 = inlined_call_operand.vmem [shape: f32[1,128], index: 2, kind: input, shape index: {}]
  %s3 = inlined_call_operand.vmem [shape: bf16[3,384,128], index: 3, kind: input, shape index: {}]
  %s4 = inlined_call_operand.vmem [shape: f32[1,128], index: 4, kind: input, shape index: {}]
  %s5 = inlined_call_operand.vmem [shape: bf16[3,384,128], index: 5, kind: input, shape index: {}]
  %s6 = inlined_call_operand.vmem [shape: f32[1,128], index: 6, kind: input, shape index: {}]
  %s7 = inlined_call_operand.vmem [shape: bf16[3,384,256], index: 7, kind: input, shape index: {}]
  %s8 = inlined_call_operand.vmem [shape: f32[1,256], index: 8, kind: input, shape index: {}]
  %s9 = inlined_call_operand.vmem [shape: f32[256,128], index: 9, kind: input, shape index: {}]
  %s10 = inlined_call_operand.vmem [shape: f32[1,128], index: 10, kind: input, shape index: {}]
  %s11 = inlined_call_operand.hbm [shape: f32[2,1,128], index: 11, kind: output, shape index: {}]
  %s12 = sld [smem:[#allocation0]]
  $region77: #{conv4_forward.1} parent=0
    _
  %s14 = ssub.s32 1, %s12
  %s15 = scalar_select 0, %s14, %s12
  $region1: #{conv4_forward.1} parent=0
    #allocation5 [shape = 'u8[1024]{0}', space=vmem, size = 0x400, scoped, tag = 'output window, operand 0']
    #allocation6 [shape = 's32[2]{0}', space=sflag, size = 0x8, scoped, tag = 'scoped memory for conv4_forward.1']
    %16 = vsyncpa [#allocation6], 0
    %s17 = scalar_lea.sflag [#allocation6], 1
    %18 = vsyncpa %s17, 0
    loop: start=0, step=1, limit=4
    $region2: #{conv4_forward.1} parent=1 // loop_pre_header
      _
    $region3: #{conv4_forward.1} parent=1 // loop_header
      %s20 = sphi 0, %s24
      %p21 = scmp.ge.s32.totalorder %s20, 4
      %s30 = sphi 0, %s32
      %s33 = sphi 0, %s30
      %s34 = sphi 0, %s33
      %s50 = sphi 0, %s34
      %s54 = sphi 0, %s54
      %s56 = sphi 0, %s54
      %s57 = sphi 0, %s56
      %s71 = sphi 0, %s57
      %s75 = sphi 0, %s75
      %s77 = sphi 0, %s75
      %s78 = sphi 0, %s77
      %s92 = sphi 0, %s78
      %s96 = sphi 0, %s96
      %s98 = sphi 0, %s96
      %s99 = sphi 0, %s98
      %s113 = sphi 0, %s99
      %s117 = sphi 0, %s117
      %s119 = sphi 0, %s117
      %s120 = sphi 0, %s119
      %s134 = sphi 0, %s120
      %s138 = sphi 0, %s138
      %s140 = sphi 0, %s138
      %s141 = sphi 0, %s140
      %s155 = sphi 0, %s141
      %s159 = sphi 0, %s159
      %s161 = sphi 0, %s159
      %s162 = sphi 0, %s161
      %s176 = sphi 0, %s162
      %s180 = sphi 0, %s180
      %s182 = sphi 0, %s180
      %s183 = sphi 0, %s182
      %s197 = sphi 0, %s183
      %s201 = sphi 0, %s201
      %s203 = sphi 0, %s201
      %s204 = sphi 0, %s203
      %s218 = sphi 0, %s204
      %s222 = sphi 0, %s222
      %s224 = sphi 0, %s222
      %s225 = sphi 0, %s224
      %s239 = sphi 0, %s225
      %s243 = sphi 0, %s243
      %s245 = sphi 0, %s243
      %s246 = sphi 0, %s245
      %s260 = sphi 0, %s246
      %s266 = sphi 0, %s268
      %s269 = sphi 0, %s266
      %s270 = sphi 0, %s269
      %s286 = sphi 0, %s270
    $region4: #{conv4_forward.1} parent=1 // loop_header_branch
      %23 = sbr.rel (%p21) target = $region8
    $region5: #{conv4_forward.1} parent=1 // loop_body
      %s25 = ssub.s32 %s20, 1
      %s26 = ssub.s32 %s20, 2
      %s27 = sadd.s32 %s20, 1
      %s28 = ssub.s32 %s20, %s27
      %p29 = scmp.eq.s32.totalorder %s28, 0
      %s31 = sadd.s32 %s30, 1
      %s32 = scalar_select %p29, %s30, %s31
      %p35 = pneg %p29
      %p36 = scmp.eq.s32.totalorder %s20, 1
      %p37 = por %p35, %p36
      %p38 = scmp.ne.s32.totalorder %s30, %s33
      %p39 = scmp.eq.s32.totalorder %s20, 0
      %p40 = por %p38, %p39
      %p41 = scmp.ne.s32.totalorder %s30, %s33
      %p42 = scmp.eq.s32.totalorder %s25, 1
      %p43 = por %p41, %p42
      %p44 = scmp.ne.s32.totalorder %s33, %s34
      %p45 = scmp.eq.s32.totalorder %s25, 0
      %p46 = por %p44, %p45
      %p47 = scmp.ne.s32.totalorder %s33, %s34
      %p48 = scmp.eq.s32.totalorder %s26, 1
      %p49 = por %p47, %p48
      %p51 = scmp.ne.s32.totalorder %s34, %s50
      %p52 = scmp.eq.s32.totalorder %s26, 0
      %p53 = por %p51, %p52
      %s55 = sadd.s32 %s54, 1
      %p58 = scmp.eq.s32.totalorder %s20, 1
      %p59 = scmp.ne.s32.totalorder %s54, %s56
      %p60 = scmp.eq.s32.totalorder %s20, 0
      %p61 = por %p59, %p60
      %p62 = scmp.ne.s32.totalorder %s54, %s56
      %p63 = scmp.eq.s32.totalorder %s25, 1
      %p64 = por %p62, %p63
      %p65 = scmp.ne.s32.totalorder %s56, %s57
      %p66 = scmp.eq.s32.totalorder %s25, 0
      %p67 = por %p65, %p66
      %p68 = scmp.ne.s32.totalorder %s56, %s57
      %p69 = scmp.eq.s32.totalorder %s26, 1
      %p70 = por %p68, %p69
      %p72 = scmp.ne.s32.totalorder %s57, %s71
      %p73 = scmp.eq.s32.totalorder %s26, 0
      %p74 = por %p72, %p73
      %s76 = sadd.s32 %s75, 1
      %p79 = scmp.eq.s32.totalorder %s20, 1
      %p80 = scmp.ne.s32.totalorder %s75, %s77
      %p81 = scmp.eq.s32.totalorder %s20, 0
      %p82 = por %p80, %p81
      %p83 = scmp.ne.s32.totalorder %s75, %s77
      %p84 = scmp.eq.s32.totalorder %s25, 1
      %p85 = por %p83, %p84
      %p86 = scmp.ne.s32.totalorder %s77, %s78
      %p87 = scmp.eq.s32.totalorder %s25, 0
      %p88 = por %p86, %p87
      %p89 = scmp.ne.s32.totalorder %s77, %s78
      %p90 = scmp.eq.s32.totalorder %s26, 1
      %p91 = por %p89, %p90
      %p93 = scmp.ne.s32.totalorder %s78, %s92
      %p94 = scmp.eq.s32.totalorder %s26, 0
      %p95 = por %p93, %p94
      %s97 = sadd.s32 %s96, 1
      %p100 = scmp.eq.s32.totalorder %s20, 1
      %p101 = scmp.ne.s32.totalorder %s96, %s98
      %p102 = scmp.eq.s32.totalorder %s20, 0
      %p103 = por %p101, %p102
      %p104 = scmp.ne.s32.totalorder %s96, %s98
      %p105 = scmp.eq.s32.totalorder %s25, 1
      %p106 = por %p104, %p105
      %p107 = scmp.ne.s32.totalorder %s98, %s99
      %p108 = scmp.eq.s32.totalorder %s25, 0
      %p109 = por %p107, %p108
      %p110 = scmp.ne.s32.totalorder %s98, %s99
      %p111 = scmp.eq.s32.totalorder %s26, 1
      %p112 = por %p110, %p111
      %p114 = scmp.ne.s32.totalorder %s99, %s113
      %p115 = scmp.eq.s32.totalorder %s26, 0
      %p116 = por %p114, %p115
      %s118 = sadd.s32 %s117, 1
      %p121 = scmp.eq.s32.totalorder %s20, 1
      %p122 = scmp.ne.s32.totalorder %s117, %s119
      %p123 = scmp.eq.s32.totalorder %s20, 0
      %p124 = por %p122, %p123
      %p125 = scmp.ne.s32.totalorder %s117, %s119
      %p126 = scmp.eq.s32.totalorder %s25, 1
      %p127 = por %p125, %p126
      %p128 = scmp.ne.s32.totalorder %s119, %s120
      %p129 = scmp.eq.s32.totalorder %s25, 0
      %p130 = por %p128, %p129
      %p131 = scmp.ne.s32.totalorder %s119, %s120
      %p132 = scmp.eq.s32.totalorder %s26, 1
      %p133 = por %p131, %p132
      %p135 = scmp.ne.s32.totalorder %s120, %s134
      %p136 = scmp.eq.s32.totalorder %s26, 0
      %p137 = por %p135, %p136
      %s139 = sadd.s32 %s138, 1
      %p142 = scmp.eq.s32.totalorder %s20, 1
      %p143 = scmp.ne.s32.totalorder %s138, %s140
      %p144 = scmp.eq.s32.totalorder %s20, 0
      %p145 = por %p143, %p144
      %p146 = scmp.ne.s32.totalorder %s138, %s140
      %p147 = scmp.eq.s32.totalorder %s25, 1
      %p148 = por %p146, %p147
      %p149 = scmp.ne.s32.totalorder %s140, %s141
      %p150 = scmp.eq.s32.totalorder %s25, 0
      %p151 = por %p149, %p150
      %p152 = scmp.ne.s32.totalorder %s140, %s141
      %p153 = scmp.eq.s32.totalorder %s26, 1
      %p154 = por %p152, %p153
      %p156 = scmp.ne.s32.totalorder %s141, %s155
      %p157 = scmp.eq.s32.totalorder %s26, 0
      %p158 = por %p156, %p157
      %s160 = sadd.s32 %s159, 1
      %p163 = scmp.eq.s32.totalorder %s20, 1
      %p164 = scmp.ne.s32.totalorder %s159, %s161
      %p165 = scmp.eq.s32.totalorder %s20, 0
      %p166 = por %p164, %p165
      %p167 = scmp.ne.s32.totalorder %s159, %s161
      %p168 = scmp.eq.s32.totalorder %s25, 1
      %p169 = por %p167, %p168
      %p170 = scmp.ne.s32.totalorder %s161, %s162
      %p171 = scmp.eq.s32.totalorder %s25, 0
      %p172 = por %p170, %p171
      %p173 = scmp.ne.s32.totalorder %s161, %s162
      %p174 = scmp.eq.s32.totalorder %s26, 1
      %p175 = por %p173, %p174
      %p177 = scmp.ne.s32.totalorder %s162, %s176
      %p178 = scmp.eq.s32.totalorder %s26, 0
      %p179 = por %p177, %p178
      %s181 = sadd.s32 %s180, 1
      %p184 = scmp.eq.s32.totalorder %s20, 1
      %p185 = scmp.ne.s32.totalorder %s180, %s182
      %p186 = scmp.eq.s32.totalorder %s20, 0
      %p187 = por %p185, %p186
      %p188 = scmp.ne.s32.totalorder %s180, %s182
      %p189 = scmp.eq.s32.totalorder %s25, 1
      %p190 = por %p188, %p189
      %p191 = scmp.ne.s32.totalorder %s182, %s183
      %p192 = scmp.eq.s32.totalorder %s25, 0
      %p193 = por %p191, %p192
      %p194 = scmp.ne.s32.totalorder %s182, %s183
      %p195 = scmp.eq.s32.totalorder %s26, 1
      %p196 = por %p194, %p195
      %p198 = scmp.ne.s32.totalorder %s183, %s197
      %p199 = scmp.eq.s32.totalorder %s26, 0
      %p200 = por %p198, %p199
      %s202 = sadd.s32 %s201, 1
      %p205 = scmp.eq.s32.totalorder %s20, 1
      %p206 = scmp.ne.s32.totalorder %s201, %s203
      %p207 = scmp.eq.s32.totalorder %s20, 0
      %p208 = por %p206, %p207
      %p209 = scmp.ne.s32.totalorder %s201, %s203
      %p210 = scmp.eq.s32.totalorder %s25, 1
      %p211 = por %p209, %p210
      %p212 = scmp.ne.s32.totalorder %s203, %s204
      %p213 = scmp.eq.s32.totalorder %s25, 0
      %p214 = por %p212, %p213
      %p215 = scmp.ne.s32.totalorder %s203, %s204
      %p216 = scmp.eq.s32.totalorder %s26, 1
      %p217 = por %p215, %p216
      %p219 = scmp.ne.s32.totalorder %s204, %s218
      %p220 = scmp.eq.s32.totalorder %s26, 0
      %p221 = por %p219, %p220
      %s223 = sadd.s32 %s222, 1
      %p226 = scmp.eq.s32.totalorder %s20, 1
      %p227 = scmp.ne.s32.totalorder %s222, %s224
      %p228 = scmp.eq.s32.totalorder %s20, 0
      %p229 = por %p227, %p228
      %p230 = scmp.ne.s32.totalorder %s222, %s224
      %p231 = scmp.eq.s32.totalorder %s25, 1
      %p232 = por %p230, %p231
      %p233 = scmp.ne.s32.totalorder %s224, %s225
      %p234 = scmp.eq.s32.totalorder %s25, 0
      %p235 = por %p233, %p234
      %p236 = scmp.ne.s32.totalorder %s224, %s225
      %p237 = scmp.eq.s32.totalorder %s26, 1
      %p238 = por %p236, %p237
      %p240 = scmp.ne.s32.totalorder %s225, %s239
      %p241 = scmp.eq.s32.totalorder %s26, 0
      %p242 = por %p240, %p241
      %s244 = sadd.s32 %s243, 1
      %p247 = scmp.eq.s32.totalorder %s20, 1
      %p248 = scmp.ne.s32.totalorder %s243, %s245
      %p249 = scmp.eq.s32.totalorder %s20, 0
      %p250 = por %p248, %p249
      %p251 = scmp.ne.s32.totalorder %s243, %s245
      %p252 = scmp.eq.s32.totalorder %s25, 1
      %p253 = por %p251, %p252
      %p254 = scmp.ne.s32.totalorder %s245, %s246
      %p255 = scmp.eq.s32.totalorder %s25, 0
      %p256 = por %p254, %p255
      %p257 = scmp.ne.s32.totalorder %s245, %s246
      %p258 = scmp.eq.s32.totalorder %s26, 1
      %p259 = por %p257, %p258
      %p261 = scmp.ne.s32.totalorder %s246, %s260
      %p262 = scmp.eq.s32.totalorder %s26, 0
      %p263 = por %p261, %p262
      %s264 = ssub.s32 %s20, %s27
      %p265 = scmp.eq.s32.totalorder %s264, 0
      %s267 = sadd.s32 %s266, 1
      %s268 = scalar_select %p265, %s266, %s267
      %p271 = pneg %p265
      %p272 = scmp.eq.s32.totalorder %s20, 1
      %p273 = por %p271, %p272
      %p274 = scmp.ne.s32.totalorder %s266, %s269
      %p275 = scmp.eq.s32.totalorder %s20, 0
      %p276 = por %p274, %p275
      %p277 = scmp.ne.s32.totalorder %s266, %s269
      %p278 = scmp.eq.s32.totalorder %s25, 1
      %p279 = por %p277, %p278
      %p280 = scmp.ne.s32.totalorder %s269, %s270
      %p281 = scmp.eq.s32.totalorder %s25, 0
      %p282 = por %p280, %p281
      %p283 = scmp.ne.s32.totalorder %s269, %s270
      %p284 = scmp.eq.s32.totalorder %s26, 1
      %p285 = por %p283, %p284
      %p287 = scmp.ne.s32.totalorder %s270, %s286
      %p288 = scmp.eq.s32.totalorder %s26, 0
      %p289 = por %p287, %p288
      %p290 = scmp.le.s32.totalorder 1, %s20
      %p291 = scmp.lt.s32.totalorder %s20, 3
      %p292 = pnand %p290, %p291
      %p293 = pneg %p292
      // Predicated region
      $region9: #{conv4_forward.1} parent=5 // pred_check
        _
      $region10: #{conv4_forward.1} parent=5 // pred_check_branch
        %295 = sbr.rel (%p292) target = $region12
      $region11: #{conv4_forward.1} parent=5 // pred_region
        %s296 = ssub.s32 %s20, 1
        // Predicated region
        $region13: #{conv4_forward.1} parent=11 // pred_check
          %p297 = pneg %p67
        $region14: #{conv4_forward.1} parent=11 // pred_check_branch
          %299 = sbr.rel (%p297) target = $region16
        $region15: #{conv4_forward.1} parent=11 // pred_region
          _
        $region16: #{conv4_forward.1} parent=11 // pred_fallthru
          _
        // Predicated region
        $region17: #{conv4_forward.1} parent=11 // pred_check
          %p300 = pneg %p88
        $region18: #{conv4_forward.1} parent=11 // pred_check_branch
          %302 = sbr.rel (%p300) target = $region20
        $region19: #{conv4_forward.1} parent=11 // pred_region
          _
        $region20: #{conv4_forward.1} parent=11 // pred_fallthru
          _
        // Predicated region
        $region21: #{conv4_forward.1} parent=11 // pred_check
          %p303 = pneg %p109
        $region22: #{conv4_forward.1} parent=11 // pred_check_branch
          %305 = sbr.rel (%p303) target = $region24
        $region23: #{conv4_forward.1} parent=11 // pred_region
          _
        $region24: #{conv4_forward.1} parent=11 // pred_fallthru
          _
        // Predicated region
        $region25: #{conv4_forward.1} parent=11 // pred_check
          %p306 = pneg %p130
        $region26: #{conv4_forward.1} parent=11 // pred_check_branch
          %308 = sbr.rel (%p306) target = $region28
        $region27: #{conv4_forward.1} parent=11 // pred_region
          _
        $region28: #{conv4_forward.1} parent=11 // pred_fallthru
          _
        // Predicated region
        $region29: #{conv4_forward.1} parent=11 // pred_check
          %p309 = pneg %p151
        $region30: #{conv4_forward.1} parent=11 // pred_check_branch
          %311 = sbr.rel (%p309) target = $region32
        $region31: #{conv4_forward.1} parent=11 // pred_region
          _
        $region32: #{conv4_forward.1} parent=11 // pred_fallthru
          _
        // Predicated region
        $region33: #{conv4_forward.1} parent=11 // pred_check
          %p312 = pneg %p172
        $region34: #{conv4_forward.1} parent=11 // pred_check_branch
          %314 = sbr.rel (%p312) target = $region36
        $region35: #{conv4_forward.1} parent=11 // pred_region
          _
        $region36: #{conv4_forward.1} parent=11 // pred_fallthru
          _
        // Predicated region
        $region37: #{conv4_forward.1} parent=11 // pred_check
          %p315 = pneg %p193
        $region38: #{conv4_forward.1} parent=11 // pred_check_branch
          %317 = sbr.rel (%p315) target = $region40
        $region39: #{conv4_forward.1} parent=11 // pred_region
          _
        $region40: #{conv4_forward.1} parent=11 // pred_fallthru
          _
        // Predicated region
        $region41: #{conv4_forward.1} parent=11 // pred_check
          %p318 = pneg %p214
        $region42: #{conv4_forward.1} parent=11 // pred_check_branch
          %320 = sbr.rel (%p318) target = $region44
        $region43: #{conv4_forward.1} parent=11 // pred_region
          _
        $region44: #{conv4_forward.1} parent=11 // pred_fallthru
          _
        // Predicated region
        $region45: #{conv4_forward.1} parent=11 // pred_check
          %p321 = pneg %p235
        $region46: #{conv4_forward.1} parent=11 // pred_check_branch
          %323 = sbr.rel (%p321) target = $region48
        $region47: #{conv4_forward.1} parent=11 // pred_region
          _
        $region48: #{conv4_forward.1} parent=11 // pred_fallthru
          _
        // Predicated region
        $region49: #{conv4_forward.1} parent=11 // pred_check
          %p324 = pneg %p256
        $region50: #{conv4_forward.1} parent=11 // pred_check_branch
          %326 = sbr.rel (%p324) target = $region52
        $region51: #{conv4_forward.1} parent=11 // pred_region
          _
        $region52: #{conv4_forward.1} parent=11 // pred_fallthru
          _
      $region12: #{conv4_forward.1} parent=5 // pred_fallthru
        _
      %p327 = scmp.lt.s32.totalorder %s20, 2
      // Predicated region
      $region53: #{conv4_forward.1} parent=5 // pred_check
        %p328 = pneg %p327
      $region54: #{conv4_forward.1} parent=5 // pred_check_branch
        %330 = sbr.rel (%p328) target = $region56
      $region55: #{conv4_forward.1} parent=5 // pred_region
        // Predicated region
        $region57: #{conv4_forward.1} parent=55 // pred_check
          %p331 = pneg %p40
        $region58: #{conv4_forward.1} parent=55 // pred_check_branch
          %333 = sbr.rel (%p331) target = $region60
        $region59: #{conv4_forward.1} parent=55 // pred_region
          %p334 = scmp.lt.s32.totalorder %s20, 1
          %s335 = scalar_select %p334, %s20, 1
          %s336 = smul.addr %s335, 32
          %s337 = smul.addr %s336, 4
          %s338 = scalar_lea.vmem %s0, %s337
        $region60: #{conv4_forward.1} parent=55 // pred_fallthru
          _
      $region56: #{conv4_forward.1} parent=5 // pred_fallthru
        _
      %p339 = scmp.le.s32.totalorder 1, %s20
      %p340 = scmp.lt.s32.totalorder %s20, 3
      %p341 = pnand %p339, %p340
      %p342 = pneg %p341
      // Predicated region
      $region61: #{conv4_forward.1} parent=5 // pred_check
        _
      $region62: #{conv4_forward.1} parent=5 // pred_check_branch
        %344 = sbr.rel (%p341) target = $region64
      $region63: #{conv4_forward.1} parent=5 // pred_region
        %s345 = ssub.s32 %s20, 1
        %p346 = scmp.lt.s32.totalorder %s25, 1
        %s347 = scalar_select %p346, %s25, 1
        %s348 = smul.addr %s347, 32
        %s349 = smul.addr %s348, 4
        %s350 = scalar_lea.vmem %s0, %s349
        %p351 = pneg %p46
        %p352 = pneg %p43
        %p353 = pneg %p67
        %p354 = pneg %p64
        %p355 = pneg %p88
        %p356 = pneg %p85
        %p357 = pneg %p109
        %p358 = pneg %p106
        %p359 = pneg %p130
        %p360 = pneg %p127
        %p361 = pneg %p151
        %p362 = pneg %p148
        %p363 = pneg %p172
        %p364 = pneg %p169
        %p365 = pneg %p193
        %p366 = pneg %p190
        %p367 = pneg %p214
        %p368 = pneg %p211
        %p369 = pneg %p235
        %p370 = pneg %p232
        %p371 = pneg %p256
        %p372 = pneg %p253
        %p373 = pneg %p282
        %p374 = pneg %p279
        %s375 = sand.u32 %s269, 1
        %s376 = scalar_lea.sflag [#allocation6], %s375
        %s377 = sand.u32 %s269, 1
        %s378 = scalar_lea.vmem [#allocation5], %s377
        %p379 = scmp.lt.s32.totalorder %s25, 1
        %s380 = scalar_select %p379, %s25, 1
        %s381 = smul.addr %s380, 32
        %s382 = smul.addr %s381, 4
        %s383 = scalar_lea.vmem %s0, %s382
        %385 = vst [vmem:[#allocation2] sm:$0xff] 0.0
        %386 = vst [vmem:[#allocation2 + $0x8] sm:$0xff] 0.0
        %387 = vst [vmem:[#allocation2 + $0x10] sm:$0x3] 0.0
        %s388 = scalar_lea.vmem [#allocation2], 408
        %389 = vst [vmem:[%s388] sm:$0xff] 0.0
        %390 = vst [vmem:[%s388 + $0x8] sm:$0xff] 0.0
        %391 = vst [vmem:[%s388 + $0x10] sm:$0x3] 0.0
        %392 = vst [vmem:[#allocation2] sm:$0x1] 0.0
        %393 = vst [vmem:[#allocation2 + $0x18] sm:$0x1] 0.0
        %394 = vst [vmem:[#allocation2 + $0x30] sm:$0x1] 0.0
        %395 = vst [vmem:[#allocation2 + $0x48] sm:$0x1] 0.0
        %396 = vst [vmem:[#allocation2 + $0x60] sm:$0x1] 0.0
        %397 = vst [vmem:[#allocation2 + $0x78] sm:$0x1] 0.0
        %398 = vst [vmem:[#allocation2 + $0x90] sm:$0x1] 0.0
        %399 = vst [vmem:[#allocation2 + $0xa8] sm:$0x1] 0.0
        %400 = vst [vmem:[#allocation2 + $0xc0] sm:$0x1] 0.0
        %401 = vst [vmem:[#allocation2 + $0xd8] sm:$0x1] 0.0
        %402 = vst [vmem:[#allocation2 + $0xf0] sm:$0x1] 0.0
        %403 = vst [vmem:[#allocation2 + $0x108] sm:$0x1] 0.0
        %404 = vst [vmem:[#allocation2 + $0x120] sm:$0x1] 0.0
        %405 = vst [vmem:[#allocation2 + $0x138] sm:$0x1] 0.0
        %406 = vst [vmem:[#allocation2 + $0x150] sm:$0x1] 0.0
        %407 = vst [vmem:[#allocation2 + $0x168] sm:$0x1] 0.0
        %408 = vst [vmem:[#allocation2 + $0x180] sm:$0x1] 0.0
        %409 = vst [vmem:[#allocation2 + $0x198] sm:$0x1] 0.0
        %410 = vst [vmem:[#allocation2 + $0x11] sm:$0x1] 0.0
        %411 = vst [vmem:[#allocation2 + $0x29] sm:$0x1] 0.0
        %412 = vst [vmem:[#allocation2 + $0x41] sm:$0x1] 0.0
        %413 = vst [vmem:[#allocation2 + $0x59] sm:$0x1] 0.0
        %414 = vst [vmem:[#allocation2 + $0x71] sm:$0x1] 0.0
        %415 = vst [vmem:[#allocation2 + $0x89] sm:$0x1] 0.0
        %416 = vst [vmem:[#allocation2 + $0xa1] sm:$0x1] 0.0
        %417 = vst [vmem:[#allocation2 + $0xb9] sm:$0x1] 0.0
        %418 = vst [vmem:[#allocation2 + $0xd1] sm:$0x1] 0.0
        %419 = vst [vmem:[#allocation2 + $0xe9] sm:$0x1] 0.0
        %420 = vst [vmem:[#allocation2 + $0x101] sm:$0x1] 0.0
        %421 = vst [vmem:[#allocation2 + $0x119] sm:$0x1] 0.0
        %422 = vst [vmem:[#allocation2 + $0x131] sm:$0x1] 0.0
        %423 = vst [vmem:[#allocation2 + $0x149] sm:$0x1] 0.0
        %424 = vst [vmem:[#allocation2 + $0x161] sm:$0x1] 0.0
        %425 = vst [vmem:[#allocation2 + $0x179] sm:$0x1] 0.0
        %426 = vst [vmem:[#allocation2 + $0x191] sm:$0x1] 0.0
        %427 = vst [vmem:[#allocation2 + $0x1a9] sm:$0x1] 0.0
        %428 = vst [vmem:[#allocation3] sm:$0xff] 0.0
        %429 = vst [vmem:[#allocation3 + $0x8] sm:$0x3] 0.0
        %s430 = scalar_lea.vmem [#allocation3], 144
        %431 = vst [vmem:[%s430] sm:$0xff] 0.0
        %432 = vst [vmem:[%s430 + $0x8] sm:$0x3] 0.0
        %433 = vst [vmem:[#allocation3] sm:$0x1] 0.0
        %434 = vst [vmem:[#allocation3 + $0x10] sm:$0x1] 0.0
        %435 = vst [vmem:[#allocation3 + $0x20] sm:$0x1] 0.0
        %436 = vst [vmem:[#allocation3 + $0x30] sm:$0x1] 0.0
        %437 = vst [vmem:[#allocation3 + $0x40] sm:$0x1] 0.0
        %438 = vst [vmem:[#allocation3 + $0x50] sm:$0x1] 0.0
        %439 = vst [vmem:[#allocation3 + $0x60] sm:$0x1] 0.0
        %440 = vst [vmem:[#allocation3 + $0x70] sm:$0x1] 0.0
        %441 = vst [vmem:[#allocation3 + $0x80] sm:$0x1] 0.0
        %442 = vst [vmem:[#allocation3 + $0x90] sm:$0x1] 0.0
        %443 = vst [vmem:[#allocation3 + $0x9] sm:$0x1] 0.0
        %444 = vst [vmem:[#allocation3 + $0x19] sm:$0x1] 0.0
        %445 = vst [vmem:[#allocation3 + $0x29] sm:$0x1] 0.0
        %446 = vst [vmem:[#allocation3 + $0x39] sm:$0x1] 0.0
        %447 = vst [vmem:[#allocation3 + $0x49] sm:$0x1] 0.0
        %448 = vst [vmem:[#allocation3 + $0x59] sm:$0x1] 0.0
        %449 = vst [vmem:[#allocation3 + $0x69] sm:$0x1] 0.0
        %450 = vst [vmem:[#allocation3 + $0x79] sm:$0x1] 0.0
        %451 = vst [vmem:[#allocation3 + $0x89] sm:$0x1] 0.0
        %452 = vst [vmem:[#allocation3 + $0x99] sm:$0x1] 0.0
        %453 = vst [vmem:[#allocation4] sm:$0x3f] 0.0
        %s454 = scalar_lea.vmem [#allocation4], 40
        %455 = vst [vmem:[%s454] sm:$0x3f] 0.0
        %456 = vst [vmem:[#allocation4] sm:$0x1] 0.0
        %457 = vst [vmem:[#allocation4 + $0x8] sm:$0x1] 0.0
        %458 = vst [vmem:[#allocation4 + $0x10] sm:$0x1] 0.0
        %459 = vst [vmem:[#allocation4 + $0x18] sm:$0x1] 0.0
        %460 = vst [vmem:[#allocation4 + $0x20] sm:$0x1] 0.0
        %461 = vst [vmem:[#allocation4 + $0x28] sm:$0x1] 0.0
        %462 = vst [vmem:[#allocation4 + $0x5] sm:$0x1] 0.0
        %463 = vst [vmem:[#allocation4 + $0xd] sm:$0x1] 0.0
        %464 = vst [vmem:[#allocation4 + $0x15] sm:$0x1] 0.0
        %465 = vst [vmem:[#allocation4 + $0x1d] sm:$0x1] 0.0
        %466 = vst [vmem:[#allocation4 + $0x25] sm:$0x1] 0.0
        %467 = vst [vmem:[#allocation4 + $0x2d] sm:$0x1] 0.0
        %v468 = vld [vmem:[%s383] sm:$0xf]
        %v469 = vld [vmem:[%s383 + $0x4] sm:$0xf]
        %v470 = vld [vmem:[%s383 + $0x8] sm:$0xf]
        %v471 = vld [vmem:[%s383 + $0xc] sm:$0xf]
        %v472 = vld [vmem:[%s383 + $0x10] sm:$0xf]
        %v473 = vld [vmem:[%s383 + $0x14] sm:$0xf]
        %v474 = vld [vmem:[%s383 + $0x18] sm:$0xf]
        %v475 = vld [vmem:[%s383 + $0x1c] sm:$0xf]
        %v476 = vld [vmem:[%s383 + $0x20] sm:$0xf]
        %v477 = vld [vmem:[%s383 + $0x24] sm:$0xf]
        %v478 = vld [vmem:[%s383 + $0x28] sm:$0xf]
        %v479 = vld [vmem:[%s383 + $0x2c] sm:$0xf]
        %v480 = vld [vmem:[%s383 + $0x30] sm:$0xf]
        %v481 = vld [vmem:[%s383 + $0x34] sm:$0xf]
        %v482 = vld [vmem:[%s383 + $0x38] sm:$0xf]
        %v483 = vld [vmem:[%s383 + $0x3c] sm:$0xf]
        %v484 = vld [vmem:[%s383 + $0x40] sm:$0xf]
        %v485 = vld [vmem:[%s383 + $0x44] sm:$0xf]
        %v486 = vld [vmem:[%s383 + $0x48] sm:$0xf]
        %v487 = vld [vmem:[%s383 + $0x4c] sm:$0xf]
        %v488 = vld [vmem:[%s383 + $0x50] sm:$0xf]
        %v489 = vld [vmem:[%s383 + $0x54] sm:$0xf]
        %v490 = vld [vmem:[%s383 + $0x58] sm:$0xf]
        %v491 = vld [vmem:[%s383 + $0x5c] sm:$0xf]
        %v492 = vld [vmem:[%s383 + $0x60] sm:$0xf]
        %v493 = vld [vmem:[%s383 + $0x64] sm:$0xf]
        %v494 = vld [vmem:[%s383 + $0x68] sm:$0xf]
        %v495 = vld [vmem:[%s383 + $0x6c] sm:$0xf]
        %v496 = vld [vmem:[%s383 + $0x70] sm:$0xf]
        %v497 = vld [vmem:[%s383 + $0x74] sm:$0xf]
        %v498 = vld [vmem:[%s383 + $0x78] sm:$0xf]
        %v499 = vld [vmem:[%s383 + $0x7c] sm:$0xf]
        %v500 = vld [vmem:[%s1] sm:$0xf]
        %v501 = vld [vmem:[%s1 + $0x4] sm:$0xf]
        %v502 = vld [vmem:[%s1 + $0x8] sm:$0xf]
        %v503 = vld [vmem:[%s1 + $0xc] sm:$0xf]
        %v504 = vld [vmem:[%s1 + $0x10] sm:$0xf]
        %v505 = vld [vmem:[%s1 + $0x14] sm:$0xf]
        %v506 = vld [vmem:[%s1 + $0x18] sm:$0xf]
        %v507 = vld [vmem:[%s1 + $0x1c] sm:$0xf]
        %v508 = vld [vmem:[%s1 + $0x20] sm:$0xf]
        %v509 = vld [vmem:[%s1 + $0x24] sm:$0xf]
        %v510 = vld [vmem:[%s1 + $0x28] sm:$0xf]
        %v511 = vld [vmem:[%s1 + $0x2c] sm:$0xf]
        %v512 = vld [vmem:[%s1 + $0x30] sm:$0xf]
        %v513 = vld [vmem:[%s1 + $0x34] sm:$0xf]
        %v514 = vld [vmem:[%s1 + $0x38] sm:$0xf]
        %v515 = vld [vmem:[%s1 + $0x3c] sm:$0xf]
        %v516 = vld [vmem:[%s2] sm:$0x1]
        %v518 = vlaneseq
        %v519 = vshrl.u32 %v518, 7
        %v520 = vsub.s32 0, %v519
        %v521 = vrot.slane %v516, %v520
        %v555 = vunpack.c.l.b16 %v468
        %v556 = vunpack.c.l.b16 %v469
        %v557 = vunpack.c.l.b16 %v470
        %v558 = vunpack.c.l.b16 %v471
        %v559 = vunpack.c.l.b16 %v472
        %v560 = vunpack.c.l.b16 %v473
        %v561 = vunpack.c.l.b16 %v474
        %v562 = vunpack.c.l.b16 %v475
        %v563 = vunpack.c.l.b16 %v476
        %v564 = vunpack.c.l.b16 %v477
        %v565 = vunpack.c.l.b16 %v478
        %v566 = vunpack.c.l.b16 %v479
        %v567 = vunpack.c.l.b16 %v480
        %v568 = vunpack.c.l.b16 %v481
        %v569 = vunpack.c.l.b16 %v482
        %v570 = vunpack.c.l.b16 %v483
        %v571 = vunpack.c.l.b16 %v484
        %v572 = vunpack.c.l.b16 %v485
        %v573 = vunpack.c.l.b16 %v486
        %v574 = vunpack.c.l.b16 %v487
        %v575 = vunpack.c.l.b16 %v488
        %v576 = vunpack.c.l.b16 %v489
        %v577 = vunpack.c.l.b16 %v490
        %v578 = vunpack.c.l.b16 %v491
        %v579 = vunpack.c.l.b16 %v492
        %v580 = vunpack.c.l.b16 %v493
        %v581 = vunpack.c.l.b16 %v494
        %v582 = vunpack.c.l.b16 %v495
        %v583 = vunpack.c.l.b16 %v496
        %v584 = vunpack.c.l.b16 %v497
        %v585 = vunpack.c.l.b16 %v498
        %v586 = vunpack.c.l.b16 %v499
        %v587 = vpack.c.b16 %v556, %v555
        %v588 = vpack.c.b16 %v558, %v557
        %v589 = vpack.c.b16 %v560, %v559
        %v590 = vpack.c.b16 %v562, %v561
        %v591 = vpack.c.b16 %v564, %v563
        %v592 = vpack.c.b16 %v566, %v565
        %v593 = vpack.c.b16 %v568, %v567
        %v594 = vpack.c.b16 %v570, %v569
        %v595 = vpack.c.b16 %v572, %v571
        %v596 = vpack.c.b16 %v574, %v573
        %v597 = vpack.c.b16 %v576, %v575
        %v598 = vpack.c.b16 %v578, %v577
        %v599 = vpack.c.b16 %v580, %v579
        %v600 = vpack.c.b16 %v582, %v581
        %v601 = vpack.c.b16 %v584, %v583
        %v602 = vpack.c.b16 %v586, %v585
        %v635 = vunpack.c.l.b16 %v500
        %v636 = vunpack.c.l.b16 %v501
        %v637 = vunpack.c.l.b16 %v502
        %v638 = vunpack.c.l.b16 %v503
        %v639 = vunpack.c.l.b16 %v504
        %v640 = vunpack.c.l.b16 %v505
        %v641 = vunpack.c.l.b16 %v506
        %v642 = vunpack.c.l.b16 %v507
        %v643 = vunpack.c.l.b16 %v508
        %v644 = vunpack.c.l.b16 %v509
        %v645 = vunpack.c.l.b16 %v510
        %v646 = vunpack.c.l.b16 %v511
        %v647 = vunpack.c.l.b16 %v512
        %v648 = vunpack.c.l.b16 %v513
        %v649 = vunpack.c.l.b16 %v514
        %v650 = vunpack.c.l.b16 %v515
        %v651 = vpack.c.b16 %v636, %v635
        %v652 = vpack.c.b16 %v638, %v637
        %v653 = vpack.c.b16 %v640, %v639
        %v654 = vpack.c.b16 %v642, %v641
        %v655 = vpack.c.b16 %v644, %v643
        %v656 = vpack.c.b16 %v646, %v645
        %v657 = vpack.c.b16 %v648, %v647
        %v658 = vpack.c.b16 %v650, %v649
        %667 = vmatprep.subr.bf16.mxu0 0
        %668 = vmatpush1.bf16.msra.mxu0 %v651
        %669 = vmatprep.subr.bf16.mxu0 0
        %670 = vmatpush1.bf16.msra.mxu0 %v652
        %671 = vmatprep.subr.bf16.mxu0 0
        %672 = vmatpush1.bf16.msra.mxu0 %v653
        %673 = vmatprep.subr.bf16.mxu0 0
        %674 = vmatpush1.bf16.msra.mxu0 %v654
        %675 = vmatprep.subr.bf16.mxu0 0
        %676 = vmatpush1.bf16.msra.mxu0 %v655
        %677 = vmatprep.subr.bf16.mxu0 0
        %678 = vmatpush1.bf16.msra.mxu0 %v656
        %679 = vmatprep.subr.bf16.mxu0 0
        %680 = vmatpush1.bf16.msra.mxu0 %v657
        %681 = vmatprep.subr.bf16.mxu0 0
        %682 = vmatpush1.bf16.msra.mxu0 %v658
        %683 = vmatprep.subr.bf16.mxu0 0
        %684 = vmatpush1.bf16.msra.mxu0 0
        %685 = vmatprep.subr.bf16.mxu0 0
        %686 = vmatpush1.bf16.msra.mxu0 0
        %687 = vmatprep.subr.bf16.mxu0 0
        %688 = vmatpush1.bf16.msra.mxu0 0
        %689 = vmatprep.subr.bf16.mxu0 0
        %690 = vmatpush1.bf16.msra.mxu0 0
        %691 = vmatprep.subr.bf16.mxu0 0
        %692 = vmatpush1.bf16.msra.mxu0 0
        %693 = vmatprep.subr.bf16.mxu0 0
        %694 = vmatpush1.bf16.msra.mxu0 0
        %695 = vmatprep.subr.bf16.mxu0 0
        %696 = vmatpush1.bf16.msra.mxu0 0
        %697 = vmatprep.subr.bf16.mxu0 0
        %698 = vmatpush1.bf16.msra.mxu0 0
        %699 = vmatprep.mubr.bf16.mxu0 0
        %700 = vmatmul.mubr.bf16.gmra.mrb[0].mxu0 %v587
        %v701 = vpop.f32.mrb[0].mxu0
        %v702 = vadd.f32 %v521, %v701
        %v703 = vpop.f32.mrb[0].mxu0
        %v704 = vpop.f32.mrb[0].mxu0
        %v705 = vadd.f32 %v521, %v704
        %v706 = vpop.f32.mrb[0].mxu0
        %707 = vmatprep.mubr.bf16.mxu0 0
        %708 = vmatmul.mubr.bf16.gmra.mrb[0].mxu0 %v588
        %v709 = vpop.f32.mrb[0].mxu0
        %v710 = vadd.f32 %v521, %v709
        %v711 = vpop.f32.mrb[0].mxu0
        %v712 = vpop.f32.mrb[0].mxu0
        %v713 = vadd.f32 %v521, %v712
        %v714 = vpop.f32.mrb[0].mxu0
        %715 = vmatprep.mubr.bf16.mxu0 0
        %716 = vmatmul.mubr.bf16.gmra.mrb[0].mxu0 %v589
        %v717 = vpop.f32.mrb[0].mxu0
        %v718 = vadd.f32 %v521, %v717
        %v719 = vpop.f32.mrb[0].mxu0
        %v720 = vpop.f32.mrb[0].mxu0
        %v721 = vadd.f32 %v521, %v720
        %v722 = vpop.f32.mrb[0].mxu0
        %723 = vmatprep.mubr.bf16.mxu0 0
        %724 = vmatmul.mubr.bf16.gmra.mrb[0].mxu0 %v590
        %v725 = vpop.f32.mrb[0].mxu0
        %v726 = vadd.f32 %v521, %v725
        %v727 = vpop.f32.mrb[0].mxu0
        %v728 = vpop.f32.mrb[0].mxu0
        %v729 = vadd.f32 %v521, %v728
        %v730 = vpop.f32.mrb[0].mxu0
        %731 = vmatprep.mubr.bf16.mxu0 0
        %732 = vmatmul.mubr.bf16.gmra.mrb[0].mxu0 %v591
        %v733 = vpop.f32.mrb[0].mxu0
        %v734 = vadd.f32 %v521, %v733
        %v735 = vpop.f32.mrb[0].mxu0
        %v736 = vpop.f32.mrb[0].mxu0
        %v737 = vadd.f32 %v521, %v736
        %v738 = vpop.f32.mrb[0].mxu0
        %739 = vmatprep.mubr.bf16.mxu0 0
        %740 = vmatmul.mubr.bf16.gmra.mrb[0].mxu0 %v592
        %v741 = vpop.f32.mrb[0].mxu0
        %v742 = vadd.f32 %v521, %v741
        %v743 = vpop.f32.mrb[0].mxu0
        %v744 = vpop.f32.mrb[0].mxu0
        %v745 = vadd.f32 %v521, %v744
        %v746 = vpop.f32.mrb[0].mxu0
        %747 = vmatprep.mubr.bf16.mxu0 0
        %748 = vmatmul.mubr.bf16.gmra.mrb[0].mxu0 %v593
        %v749 = vpop.f32.mrb[0].mxu0
        %v750 = vadd.f32 %v521, %v749
        %v751 = vpop.f32.mrb[0].mxu0
        %v752 = vpop.f32.mrb[0].mxu0
        %v753 = vadd.f32 %v521, %v752
        %v754 = vpop.f32.mrb[0].mxu0
        %755 = vmatprep.mubr.bf16.mxu0 0
        %756 = vmatmul.mubr.bf16.gmra.mrb[0].mxu0 %v594
        %v757 = vpop.f32.mrb[0].mxu0
        %v758 = vadd.f32 %v521, %v757
        %v759 = vpop.f32.mrb[0].mxu0
        %v760 = vpop.f32.mrb[0].mxu0
        %v761 = vadd.f32 %v521, %v760
        %v762 = vpop.f32.mrb[0].mxu0
        %763 = vmatprep.mubr.bf16.mxu0 0
        %764 = vmatmul.mubr.bf16.gmra.mrb[0].mxu0 %v595
        %v765 = vpop.f32.mrb[0].mxu0
        %v766 = vadd.f32 %v521, %v765
        %v767 = vpop.f32.mrb[0].mxu0
        %v768 = vpop.f32.mrb[0].mxu0
        %v769 = vadd.f32 %v521, %v768
        %v770 = vpop.f32.mrb[0].mxu0
        %771 = vmatprep.mubr.bf16.mxu0 0
        %772 = vmatmul.mubr.bf16.gmra.mrb[0].mxu0 %v596
        %v773 = vpop.f32.mrb[0].mxu0
        %v774 = vadd.f32 %v521, %v773
        %v775 = vpop.f32.mrb[0].mxu0
        %v776 = vpop.f32.mrb[0].mxu0
        %v777 = vadd.f32 %v521, %v776
        %v778 = vpop.f32.mrb[0].mxu0
        %779 = vmatprep.mubr.bf16.mxu0 0
        %780 = vmatmul.mubr.bf16.gmra.mrb[0].mxu0 %v597
        %v781 = vpop.f32.mrb[0].mxu0
        %v782 = vadd.f32 %v521, %v781
        %v783 = vpop.f32.mrb[0].mxu0
        %v784 = vpop.f32.mrb[0].mxu0
        %v785 = vadd.f32 %v521, %v784
        %v786 = vpop.f32.mrb[0].mxu0
        %787 = vmatprep.mubr.bf16.mxu0 0
        %788 = vmatmul.mubr.bf16.gmra.mrb[0].mxu0 %v598
        %v789 = vpop.f32.mrb[0].mxu0
        %v790 = vadd.f32 %v521, %v789
        %v791 = vpop.f32.mrb[0].mxu0
        %v792 = vpop.f32.mrb[0].mxu0
        %v793 = vadd.f32 %v521, %v792
        %v794 = vpop.f32.mrb[0].mxu0
        %795 = vmatprep.mubr.bf16.mxu0 0
        %796 = vmatmul.mubr.bf16.gmra.mrb[0].mxu0 %v599
        %v797 = vpop.f32.mrb[0].mxu0
        %v798 = vadd.f32 %v521, %v797
        %v799 = vpop.f32.mrb[0].mxu0
        %v800 = vpop.f32.mrb[0].mxu0
        %v801 = vadd.f32 %v521, %v800
        %v802 = vpop.f32.mrb[0].mxu0
        %803 = vmatprep.mubr.bf16.mxu0 0
        %804 = vmatmul.mubr.bf16.gmra.mrb[0].mxu0 %v600
        %v805 = vpop.f32.mrb[0].mxu0
        %v806 = vadd.f32 %v521, %v805
        %v807 = vpop.f32.mrb[0].mxu0
        %v808 = vpop.f32.mrb[0].mxu0
        %v809 = vadd.f32 %v521, %v808
        %v810 = vpop.f32.mrb[0].mxu0
        %811 = vmatprep.mubr.bf16.mxu0 0
        %812 = vmatmul.mubr.bf16.gmra.mrb[0].mxu0 %v601
        %v813 = vpop.f32.mrb[0].mxu0
        %v814 = vadd.f32 %v521, %v813
        %v815 = vpop.f32.mrb[0].mxu0
        %v816 = vpop.f32.mrb[0].mxu0
        %v817 = vadd.f32 %v521, %v816
        %v818 = vpop.f32.mrb[0].mxu0
        %819 = vmatprep.mubr.bf16.mxu0 0
        %820 = vmatmul.mubr.bf16.gmra.mrb[0].mxu0 %v602
        %v821 = vpop.f32.mrb[0].mxu0
        %v822 = vadd.f32 %v521, %v821
        %v823 = vpop.f32.mrb[0].mxu0
        %v824 = vpop.f32.mrb[0].mxu0
        %v825 = vadd.f32 %v521, %v824
        %v826 = vpop.f32.mrb[0].mxu0
        %827 = vdwg.mxu0
        %vm828 = vcmp.ge.f32.partialorder %v702, 0.0
        %vm829 = vcmp.ge.f32.partialorder %v705, 0.0
        %vm830 = vcmp.ge.f32.partialorder %v710, 0.0
        %vm831 = vcmp.ge.f32.partialorder %v713, 0.0
        %vm832 = vcmp.ge.f32.partialorder %v718, 0.0
        %vm833 = vcmp.ge.f32.partialorder %v721, 0.0
        %vm834 = vcmp.ge.f32.partialorder %v726, 0.0
        %vm835 = vcmp.ge.f32.partialorder %v729, 0.0
        %vm836 = vcmp.ge.f32.partialorder %v734, 0.0
        %vm837 = vcmp.ge.f32.partialorder %v737, 0.0
        %vm838 = vcmp.ge.f32.partialorder %v742, 0.0
        %vm839 = vcmp.ge.f32.partialorder %v745, 0.0
        %vm840 = vcmp.ge.f32.partialorder %v750, 0.0
        %vm841 = vcmp.ge.f32.partialorder %v753, 0.0
        %vm842 = vcmp.ge.f32.partialorder %v758, 0.0
        %vm843 = vcmp.ge.f32.partialorder %v761, 0.0
        %vm844 = vcmp.ge.f32.partialorder %v766, 0.0
        %vm845 = vcmp.ge.f32.partialorder %v769, 0.0
        %vm846 = vcmp.ge.f32.partialorder %v774, 0.0
        %vm847 = vcmp.ge.f32.partialorder %v777, 0.0
        %vm848 = vcmp.ge.f32.partialorder %v782, 0.0
        %vm849 = vcmp.ge.f32.partialorder %v785, 0.0
        %vm850 = vcmp.ge.f32.partialorder %v790, 0.0
        %vm851 = vcmp.ge.f32.partialorder %v793, 0.0
        %vm852 = vcmp.ge.f32.partialorder %v798, 0.0
        %vm853 = vcmp.ge.f32.partialorder %v801, 0.0
        %vm854 = vcmp.ge.f32.partialorder %v806, 0.0
        %vm855 = vcmp.ge.f32.partialorder %v809, 0.0
        %vm856 = vcmp.ge.f32.partialorder %v814, 0.0
        %vm857 = vcmp.ge.f32.partialorder %v817, 0.0
        %vm858 = vcmp.ge.f32.partialorder %v822, 0.0
        %vm859 = vcmp.ge.f32.partialorder %v825, 0.0
        %v860 = vmul.f32 %v702, 0.01
        %v861 = vmul.f32 %v705, 0.01
        %v862 = vmul.f32 %v710, 0.01
        %v863 = vmul.f32 %v713, 0.01
        %v864 = vmul.f32 %v718, 0.01
        %v865 = vmul.f32 %v721, 0.01
        %v866 = vmul.f32 %v726, 0.01
        %v867 = vmul.f32 %v729, 0.01
        %v868 = vmul.f32 %v734, 0.01
        %v869 = vmul.f32 %v737, 0.01
        %v870 = vmul.f32 %v742, 0.01
        %v871 = vmul.f32 %v745, 0.01
        %v872 = vmul.f32 %v750, 0.01
        %v873 = vmul.f32 %v753, 0.01
        %v874 = vmul.f32 %v758, 0.01
        %v875 = vmul.f32 %v761, 0.01
        %v876 = vmul.f32 %v766, 0.01
        %v877 = vmul.f32 %v769, 0.01
        %v878 = vmul.f32 %v774, 0.01
        %v879 = vmul.f32 %v777, 0.01
        %v880 = vmul.f32 %v782, 0.01
        %v881 = vmul.f32 %v785, 0.01
        %v882 = vmul.f32 %v790, 0.01
        %v883 = vmul.f32 %v793, 0.01
        %v884 = vmul.f32 %v798, 0.01
        %v885 = vmul.f32 %v801, 0.01
        %v886 = vmul.f32 %v806, 0.01
        %v887 = vmul.f32 %v809, 0.01
        %v888 = vmul.f32 %v814, 0.01
        %v889 = vmul.f32 %v817, 0.01
        %v890 = vmul.f32 %v822, 0.01
        %v891 = vmul.f32 %v825, 0.01
        %v892 = vsel %vm828, %v702, %v860
        %v893 = vsel %vm829, %v705, %v861
        %v894 = vsel %vm830, %v710, %v862
        %v895 = vsel %vm831, %v713, %v863
        %v896 = vsel %vm832, %v718, %v864
        %v897 = vsel %vm833, %v721, %v865
        %v898 = vsel %vm834, %v726, %v866
        %v899 = vsel %vm835, %v729, %v867
        %v900 = vsel %vm836, %v734, %v868
        %v901 = vsel %vm837, %v737, %v869
        %v902 = vsel %vm838, %v742, %v870
        %v903 = vsel %vm839, %v745, %v871
        %v904 = vsel %vm840, %v750, %v872
        %v905 = vsel %vm841, %v753, %v873
        %v906 = vsel %vm842, %v758, %v874
        %v907 = vsel %vm843, %v761, %v875
        %v908 = vsel %vm844, %v766, %v876
        %v909 = vsel %vm845, %v769, %v877
        %v910 = vsel %vm846, %v774, %v878
        %v911 = vsel %vm847, %v777, %v879
        %v912 = vsel %vm848, %v782, %v880
        %v913 = vsel %vm849, %v785, %v881
        %v914 = vsel %vm850, %v790, %v882
        %v915 = vsel %vm851, %v793, %v883
        %v916 = vsel %vm852, %v798, %v884
        %v917 = vsel %vm853, %v801, %v885
        %v918 = vsel %vm854, %v806, %v886
        %v919 = vsel %vm855, %v809, %v887
        %v920 = vsel %vm856, %v814, %v888
        %v921 = vsel %vm857, %v817, %v889
        %v922 = vsel %vm858, %v822, %v890
        %v923 = vsel %vm859, %v825, %v891
        %s924 = scalar_lea.vmem [#allocation2], 24
        %925 = vst [vmem:[%s924 + $0x1] sm:$0xff] %v892
        %926 = vst [vmem:[%s924 + $0x9] sm:$0xff] %v893
        %927 = vst [vmem:[%s924 + $0x19] sm:$0xff] %v894
        %928 = vst [vmem:[%s924 + $0x21] sm:$0xff] %v895
        %929 = vst [vmem:[%s924 + $0x31] sm:$0xff] %v896
        %930 = vst [vmem:[%s924 + $0x39] sm:$0xff] %v897
        %931 = vst [vmem:[%s924 + $0x49] sm:$0xff] %v898
        %932 = vst [vmem:[%s924 + $0x51] sm:$0xff] %v899
        %933 = vst [vmem:[%s924 + $0x61] sm:$0xff] %v900
        %934 = vst [vmem:[%s924 + $0x69] sm:$0xff] %v901
        %935 = vst [vmem:[%s924 + $0x79] sm:$0xff] %v902
        %936 = vst [vmem:[%s924 + $0x81] sm:$0xff] %v903
        %937 = vst [vmem:[%s924 + $0x91] sm:$0xff] %v904
        %938 = vst [vmem:[%s924 + $0x99] sm:$0xff] %v905
        %939 = vst [vmem:[%s924 + $0xa9] sm:$0xff] %v906
        %940 = vst [vmem:[%s924 + $0xb1] sm:$0xff] %v907
        %941 = vst [vmem:[%s924 + $0xc1] sm:$0xff] %v908
        %942 = vst [vmem:[%s924 + $0xc9] sm:$0xff] %v909
        %943 = vst [vmem:[%s924 + $0xd9] sm:$0xff] %v910
        %944 = vst [vmem:[%s924 + $0xe1] sm:$0xff] %v911
        %945 = vst [vmem:[%s924 + $0xf1] sm:$0xff] %v912
        %946 = vst [vmem:[%s924 + $0xf9] sm:$0xff] %v913
        %947 = vst [vmem:[%s924 + $0x109] sm:$0xff] %v914
        %948 = vst [vmem:[%s924 + $0x111] sm:$0xff] %v915
        %949 = vst [vmem:[%s924 + $0x121] sm:$0xff] %v916
        %950 = vst [vmem:[%s924 + $0x129] sm:$0xff] %v917
        %951 = vst [vmem:[%s924 + $0x139] sm:$0xff] %v918
        %952 = vst [vmem:[%s924 + $0x141] sm:$0xff] %v919
        %953 = vst [vmem:[%s924 + $0x151] sm:$0xff] %v920
        %954 = vst [vmem:[%s924 + $0x159] sm:$0xff] %v921
        %955 = vst [vmem:[%s924 + $0x169] sm:$0xff] %v922
        %956 = vst [vmem:[%s924 + $0x171] sm:$0xff] %v923
        %v957 = vld [vmem:[#allocation2] ss:$2 sm:$0xff]
        %s958 = scalar_lea.vmem [#allocation2], 24
        %v959 = vld [vmem:[%s958] ss:$2 sm:$0xff]
        %s960 = scalar_lea.vmem [#allocation2], 48
        %v961 = vld [vmem:[%s960] ss:$2 sm:$0xff]
        %s962 = scalar_lea.vmem [#allocation2], 72
        %v963 = vld [vmem:[%s962] ss:$2 sm:$0xff]
        %s964 = scalar_lea.vmem [#allocation2], 96
        %v965 = vld [vmem:[%s964] ss:$2 sm:$0xff]
        %s966 = scalar_lea.vmem [#allocation2], 120
        %v967 = vld [vmem:[%s966] ss:$2 sm:$0xff]
        %s968 = scalar_lea.vmem [#allocation2], 144
        %v969 = vld [vmem:[%s968] ss:$2 sm:$0xff]
        %s970 = scalar_lea.vmem [#allocation2], 168
        %v971 = vld [vmem:[%s970] ss:$2 sm:$0xff]
        %s972 = scalar_lea.vmem [#allocation2], 192
        %v973 = vld [vmem:[%s972] ss:$2 sm:$0xff]
        %s974 = scalar_lea.vmem [#allocation2], 216
        %v975 = vld [vmem:[%s974] ss:$2 sm:$0xff]
        %s976 = scalar_lea.vmem [#allocation2], 240
        %v977 = vld [vmem:[%s976] ss:$2 sm:$0xff]
        %s978 = scalar_lea.vmem [#allocation2], 264
        %v979 = vld [vmem:[%s978] ss:$2 sm:$0xff]
        %s980 = scalar_lea.vmem [#allocation2], 288
        %v981 = vld [vmem:[%s980] ss:$2 sm:$0xff]
        %s982 = scalar_lea.vmem [#allocation2], 312
        %v983 = vld [vmem:[%s982] ss:$2 sm:$0xff]
        %s984 = scalar_lea.vmem [#allocation2], 336
        %v985 = vld [vmem:[%s984] ss:$2 sm:$0xff]
        %s986 = scalar_lea.vmem [#allocation2], 360
        %v987 = vld [vmem:[%s986] ss:$2 sm:$0xff]
        %s988 = scalar_lea.vmem [#allocation2], 384
        %v989 = vld [vmem:[%s988] ss:$2 sm:$0xff]
        %v990 = vpack.c.bf16 %v957, %v957
        %v991 = vpack.c.bf16 %v959, %v959
        %v992 = vpack.c.bf16 %v961, %v961
        %v993 = vpack.c.bf16 %v963, %v963
        %v994 = vpack.c.bf16 %v965, %v965
        %v995 = vpack.c.bf16 %v967, %v967
        %v996 = vpack.c.bf16 %v969, %v969
        %v997 = vpack.c.bf16 %v971, %v971
        %v998 = vpack.c.bf16 %v973, %v973
        %v999 = vpack.c.bf16 %v975, %v975
        %v1000 = vpack.c.bf16 %v977, %v977
        %v1001 = vpack.c.bf16 %v979, %v979
        %v1002 = vpack.c.bf16 %v981, %v981
        %v1003 = vpack.c.bf16 %v983, %v983
        %v1004 = vpack.c.bf16 %v985, %v985
        %v1005 = vpack.c.bf16 %v987, %v987
        %v1006 = vpack.c.bf16 %v989, %v989
        %s1007 = scalar_lea.vmem [#allocation2], 1
        %v1008 = vld [vmem:[%s1007] ss:$2 sm:$0xff]
        %s1009 = scalar_lea.vmem [#allocation2], 25
        %v1010 = vld [vmem:[%s1009] ss:$2 sm:$0xff]
        %s1011 = scalar_lea.vmem [#allocation2], 49
        %v1012 = vld [vmem:[%s1011] ss:$2 sm:$0xff]
        %s1013 = scalar_lea.vmem [#allocation2], 73
        %v1014 = vld [vmem:[%s1013] ss:$2 sm:$0xff]
        %s1015 = scalar_lea.vmem [#allocation2], 97
        %v1016 = vld [vmem:[%s1015] ss:$2 sm:$0xff]
        %s1017 = scalar_lea.vmem [#allocation2], 121
        %v1018 = vld [vmem:[%s1017] ss:$2 sm:$0xff]
        %s1019 = scalar_lea.vmem [#allocation2], 145
        %v1020 = vld [vmem:[%s1019] ss:$2 sm:$0xff]
        %s1021 = scalar_lea.vmem [#allocation2], 169
        %v1022 = vld [vmem:[%s1021] ss:$2 sm:$0xff]
        %s1023 = scalar_lea.vmem [#allocation2], 193
        %v1024 = vld [vmem:[%s1023] ss:$2 sm:$0xff]
        %s1025 = scalar_lea.vmem [#allocation2], 217
        %v1026 = vld [vmem:[%s1025] ss:$2 sm:$0xff]
        %s1027 = scalar_lea.vmem [#allocation2], 241
        %v1028 = vld [vmem:[%s1027] ss:$2 sm:$0xff]
        %s1029 = scalar_lea.vmem [#allocation2], 265
        %v1030 = vld [vmem:[%s1029] ss:$2 sm:$0xff]
        %s1031 = scalar_lea.vmem [#allocation2], 289
        %v1032 = vld [vmem:[%s1031] ss:$2 sm:$0xff]
        %s1033 = scalar_lea.vmem [#allocation2], 313
        %v1034 = vld [vmem:[%s1033] ss:$2 sm:$0xff]
        %s1035 = scalar_lea.vmem [#allocation2], 337
        %v1036 = vld [vmem:[%s1035] ss:$2 sm:$0xff]
        %s1037 = scalar_lea.vmem [#allocation2], 361
        %v1038 = vld [vmem:[%s1037] ss:$2 sm:$0xff]
        %s1039 = scalar_lea.vmem [#allocation2], 385
        %v1040 = vld [vmem:[%s1039] ss:$2 sm:$0xff]
        %v1041 = vpack.c.bf16 %v1008, %v1008
        %v1042 = vpack.c.bf16 %v1010, %v1010
        %v1043 = vpack.c.bf16 %v1012, %v1012
        %v1044 = vpack.c.bf16 %v1014, %v1014
        %v1045 = vpack.c.bf16 %v1016, %v1016
        %v1046 = vpack.c.bf16 %v1018, %v1018
        %v1047 = vpack.c.bf16 %v1020, %v1020
        %v1048 = vpack.c.bf16 %v1022, %v1022
        %v1049 = vpack.c.bf16 %v1024, %v1024
        %v1050 = vpack.c.bf16 %v1026, %v1026
        %v1051 = vpack.c.bf16 %v1028, %v1028
        %v1052 = vpack.c.bf16 %v1030, %v1030
        %v1053 = vpack.c.bf16 %v1032, %v1032
        %v1054 = vpack.c.bf16 %v1034, %v1034
        %v1055 = vpack.c.bf16 %v1036, %v1036
        %v1056 = vpack.c.bf16 %v1038, %v1038
        %v1057 = vpack.c.bf16 %v1040, %v1040
        %s1058 = scalar_lea.vmem [#allocation2], 2
        %v1059 = vld [vmem:[%s1058] ss:$2 sm:$0xff]
        %s1060 = scalar_lea.vmem [#allocation2], 26
        %v1061 = vld [vmem:[%s1060] ss:$2 sm:$0xff]
        %s1062 = scalar_lea.vmem [#allocation2], 50
        %v1063 = vld [vmem:[%s1062] ss:$2 sm:$0xff]
        %s1064 = scalar_lea.vmem [#allocation2], 74
        %v1065 = vld [vmem:[%s1064] ss:$2 sm:$0xff]
        %s1066 = scalar_lea.vmem [#allocation2], 98
        %v1067 = vld [vmem:[%s1066] ss:$2 sm:$0xff]
        %s1068 = scalar_lea.vmem [#allocation2], 122
        %v1069 = vld [vmem:[%s1068] ss:$2 sm:$0xff]
        %s1070 = scalar_lea.vmem [#allocation2], 146
        %v1071 = vld [vmem:[%s1070] ss:$2 sm:$0xff]
        %s1072 = scalar_lea.vmem [#allocation2], 170
        %v1073 = vld [vmem:[%s1072] ss:$2 sm:$0xff]
        %s1074 = scalar_lea.vmem [#allocation2], 194
        %v1075 = vld [vmem:[%s1074] ss:$2 sm:$0xff]
        %s1076 = scalar_lea.vmem [#allocation2], 218
        %v1077 = vld [vmem:[%s1076] ss:$2 sm:$0xff]
        %s1078 = scalar_lea.vmem [#allocation2], 242
        %v1079 = vld [vmem:[%s1078] ss:$2 sm:$0xff]
        %s1080 = scalar_lea.vmem [#allocation2], 266
        %v1081 = vld [vmem:[%s1080] ss:$2 sm:$0xff]
        %s1082 = scalar_lea.vmem [#allocation2], 290
        %v1083 = vld [vmem:[%s1082] ss:$2 sm:$0xff]
        %s1084 = scalar_lea.vmem [#allocation2], 314
        %v1085 = vld [vmem:[%s1084] ss:$2 sm:$0xff]
        %s1086 = scalar_lea.vmem [#allocation2], 338
        %v1087 = vld [vmem:[%s1086] ss:$2 sm:$0xff]
        %s1088 = scalar_lea.vmem [#allocation2], 362
        %v1089 = vld [vmem:[%s1088] ss:$2 sm:$0xff]
        %s1090 = scalar_lea.vmem [#allocation2], 386
        %v1091 = vld [vmem:[%s1090] ss:$2 sm:$0xff]
        %v1092 = vpack.c.bf16 %v1059, %v1059
        %v1093 = vpack.c.bf16 %v1061, %v1061
        %v1094 = vpack.c.bf16 %v1063, %v1063
        %v1095 = vpack.c.bf16 %v1065, %v1065
        %v1096 = vpack.c.bf16 %v1067, %v1067
        %v1097 = vpack.c.bf16 %v1069, %v1069
        %v1098 = vpack.c.bf16 %v1071, %v1071
        %v1099 = vpack.c.bf16 %v1073, %v1073
        %v1100 = vpack.c.bf16 %v1075, %v1075
        %v1101 = vpack.c.bf16 %v1077, %v1077
        %v1102 = vpack.c.bf16 %v1079, %v1079
        %v1103 = vpack.c.bf16 %v1081, %v1081
        %v1104 = vpack.c.bf16 %v1083, %v1083
        %v1105 = vpack.c.bf16 %v1085, %v1085
        %v1106 = vpack.c.bf16 %v1087, %v1087
        %v1107 = vpack.c.bf16 %v1089, %v1089
        %v1108 = vpack.c.bf16 %v1091, %v1091
        %v1133 = vunpack.c.l.b16 %v990
        %v1134 = vunpack.c.l.b16 %v1041
        %v1135 = vunpack.c.l.b16 %v1092
        %v1136 = vunpack.c.l.b16 %v992
        %v1137 = vunpack.c.l.b16 %v1043
        %v1138 = vunpack.c.l.b16 %v1094
        %v1139 = vunpack.c.l.b16 %v994
        %v1140 = vunpack.c.l.b16 %v1045
        %v1141 = vunpack.c.l.b16 %v1096
        %v1142 = vunpack.c.l.b16 %v996
        %v1143 = vunpack.c.l.b16 %v1047
        %v1144 = vunpack.c.l.b16 %v1098
        %v1145 = vunpack.c.l.b16 %v998
        %v1146 = vunpack.c.l.b16 %v1049
        %v1147 = vunpack.c.l.b16 %v1100
        %v1148 = vunpack.c.l.b16 %v1000
        %v1149 = vunpack.c.l.b16 %v1051
        %v1150 = vunpack.c.l.b16 %v1102
        %v1151 = vunpack.c.l.b16 %v1002
        %v1152 = vunpack.c.l.b16 %v1053
        %v1153 = vunpack.c.l.b16 %v1104
        %v1154 = vunpack.c.l.b16 %v1004
        %v1155 = vunpack.c.l.b16 %v1055
        %v1156 = vunpack.c.l.b16 %v1106
        %v1157 = vld [vmem:[%s3] sm:$0xf]
        %v1158 = vld [vmem:[%s3 + $0x4] sm:$0xf]
        %v1159 = vld [vmem:[%s3 + $0x8] sm:$0xf]
        %v1160 = vld [vmem:[%s3 + $0xc] sm:$0xf]
        %v1161 = vld [vmem:[%s3 + $0x10] sm:$0xf]
        %v1162 = vld [vmem:[%s3 + $0x14] sm:$0xf]
        %v1163 = vld [vmem:[%s3 + $0x18] sm:$0xf]
        %v1164 = vld [vmem:[%s3 + $0x1c] sm:$0xf]
        %v1165 = vld [vmem:[%s3 + $0x20] sm:$0xf]
        %v1166 = vld [vmem:[%s3 + $0x24] sm:$0xf]
        %v1167 = vld [vmem:[%s3 + $0x28] sm:$0xf]
        %v1168 = vld [vmem:[%s3 + $0x2c] sm:$0xf]
        %v1169 = vld [vmem:[%s3 + $0x30] sm:$0xf]
        %v1170 = vld [vmem:[%s3 + $0x34] sm:$0xf]
        %v1171 = vld [vmem:[%s3 + $0x38] sm:$0xf]
        %v1172 = vld [vmem:[%s3 + $0x3c] sm:$0xf]
        %v1173 = vld [vmem:[%s3 + $0x40] sm:$0xf]
        %v1174 = vld [vmem:[%s3 + $0x44] sm:$0xf]
        %v1175 = vld [vmem:[%s3 + $0x48] sm:$0xf]
        %v1176 = vld [vmem:[%s3 + $0x4c] sm:$0xf]
        %v1177 = vld [vmem:[%s3 + $0x50] sm:$0xf]
        %v1178 = vld [vmem:[%s3 + $0x54] sm:$0xf]
        %v1179 = vld [vmem:[%s3 + $0x58] sm:$0xf]
        %v1180 = vld [vmem:[%s3 + $0x5c] sm:$0xf]
        %v1181 = vld [vmem:[%s3 + $0x60] sm:$0xf]
        %v1182 = vld [vmem:[%s3 + $0x64] sm:$0xf]
        %v1183 = vld [vmem:[%s3 + $0x68] sm:$0xf]
        %v1184 = vld [vmem:[%s3 + $0x6c] sm:$0xf]
        %v1185 = vld [vmem:[%s3 + $0x70] sm:$0xf]
        %v1186 = vld [vmem:[%s3 + $0x74] sm:$0xf]
        %v1187 = vld [vmem:[%s3 + $0x78] sm:$0xf]
        %v1188 = vld [vmem:[%s3 + $0x7c] sm:$0xf]
        %v1189 = vld [vmem:[%s3 + $0x80] sm:$0xf]
        %v1190 = vld [vmem:[%s3 + $0x84] sm:$0xf]
        %v1191 = vld [vmem:[%s3 + $0x88] sm:$0xf]
        %v1192 = vld [vmem:[%s3 + $0x8c] sm:$0xf]
        %v1193 = vld [vmem:[%s3 + $0x90] sm:$0xf]
        %v1194 = vld [vmem:[%s3 + $0x94] sm:$0xf]
        %v1195 = vld [vmem:[%s3 + $0x98] sm:$0xf]
        %v1196 = vld [vmem:[%s3 + $0x9c] sm:$0xf]
        %v1197 = vld [vmem:[%s3 + $0xa0] sm:$0xf]
        %v1198 = vld [vmem:[%s3 + $0xa4] sm:$0xf]
        %v1199 = vld [vmem:[%s3 + $0xa8] sm:$0xf]
        %v1200 = vld [vmem:[%s3 + $0xac] sm:$0xf]
        %v1201 = vld [vmem:[%s3 + $0xb0] sm:$0xf]
        %v1202 = vld [vmem:[%s3 + $0xb4] sm:$0xf]
        %v1203 = vld [vmem:[%s3 + $0xb8] sm:$0xf]
        %v1204 = vld [vmem:[%s3 + $0xbc] sm:$0xf]
        %v1229 = vunpack.c.l.b16 %v991
        %v1230 = vunpack.c.l.b16 %v1042
        %v1231 = vunpack.c.l.b16 %v1093
        %v1232 = vunpack.c.l.b16 %v993
        %v1233 = vunpack.c.l.b16 %v1044
        %v1234 = vunpack.c.l.b16 %v1095
        %v1235 = vunpack.c.l.b16 %v995
        %v1236 = vunpack.c.l.b16 %v1046
        %v1237 = vunpack.c.l.b16 %v1097
        %v1238 = vunpack.c.l.b16 %v997
        %v1239 = vunpack.c.l.b16 %v1048
        %v1240 = vunpack.c.l.b16 %v1099
        %v1241 = vunpack.c.l.b16 %v999
        %v1242 = vunpack.c.l.b16 %v1050
        %v1243 = vunpack.c.l.b16 %v1101
        %v1244 = vunpack.c.l.b16 %v1001
        %v1245 = vunpack.c.l.b16 %v1052
        %v1246 = vunpack.c.l.b16 %v1103
        %v1247 = vunpack.c.l.b16 %v1003
        %v1248 = vunpack.c.l.b16 %v1054
        %v1249 = vunpack.c.l.b16 %v1105
        %v1250 = vunpack.c.l.b16 %v1005
        %v1251 = vunpack.c.l.b16 %v1056
        %v1252 = vunpack.c.l.b16 %v1107
        %s1253 = scalar_lea.vmem %s3, 192
        %v1254 = vld [vmem:[%s1253] sm:$0xf]
        %v1255 = vld [vmem:[%s1253 + $0x4] sm:$0xf]
        %v1256 = vld [vmem:[%s1253 + $0x8] sm:$0xf]
        %v1257 = vld [vmem:[%s1253 + $0xc] sm:$0xf]
        %v1258 = vld [vmem:[%s1253 + $0x10] sm:$0xf]
        %v1259 = vld [vmem:[%s1253 + $0x14] sm:$0xf]
        %v1260 = vld [vmem:[%s1253 + $0x18] sm:$0xf]
        %v1261 = vld [vmem:[%s1253 + $0x1c] sm:$0xf]
        %v1262 = vld [vmem:[%s1253 + $0x20] sm:$0xf]
        %v1263 = vld [vmem:[%s1253 + $0x24] sm:$0xf]
        %v1264 = vld [vmem:[%s1253 + $0x28] sm:$0xf]
        %v1265 = vld [vmem:[%s1253 + $0x2c] sm:$0xf]
        %v1266 = vld [vmem:[%s1253 + $0x30] sm:$0xf]
        %v1267 = vld [vmem:[%s1253 + $0x34] sm:$0xf]
        %v1268 = vld [vmem:[%s1253 + $0x38] sm:$0xf]
        %v1269 = vld [vmem:[%s1253 + $0x3c] sm:$0xf]
        %v1270 = vld [vmem:[%s1253 + $0x40] sm:$0xf]
        %v1271 = vld [vmem:[%s1253 + $0x44] sm:$0xf]
        %v1272 = vld [vmem:[%s1253 + $0x48] sm:$0xf]
        %v1273 = vld [vmem:[%s1253 + $0x4c] sm:$0xf]
        %v1274 = vld [vmem:[%s1253 + $0x50] sm:$0xf]
        %v1275 = vld [vmem:[%s1253 + $0x54] sm:$0xf]
        %v1276 = vld [vmem:[%s1253 + $0x58] sm:$0xf]
        %v1277 = vld [vmem:[%s1253 + $0x5c] sm:$0xf]
        %v1278 = vld [vmem:[%s1253 + $0x60] sm:$0xf]
        %v1279 = vld [vmem:[%s1253 + $0x64] sm:$0xf]
        %v1280 = vld [vmem:[%s1253 + $0x68] sm:$0xf]
        %v1281 = vld [vmem:[%s1253 + $0x6c] sm:$0xf]
        %v1282 = vld [vmem:[%s1253 + $0x70] sm:$0xf]
        %v1283 = vld [vmem:[%s1253 + $0x74] sm:$0xf]
        %v1284 = vld [vmem:[%s1253 + $0x78] sm:$0xf]
        %v1285 = vld [vmem:[%s1253 + $0x7c] sm:$0xf]
        %v1286 = vld [vmem:[%s1253 + $0x80] sm:$0xf]
        %v1287 = vld [vmem:[%s1253 + $0x84] sm:$0xf]
        %v1288 = vld [vmem:[%s1253 + $0x88] sm:$0xf]
        %v1289 = vld [vmem:[%s1253 + $0x8c] sm:$0xf]
        %v1290 = vld [vmem:[%s1253 + $0x90] sm:$0xf]
        %v1291 = vld [vmem:[%s1253 + $0x94] sm:$0xf]
        %v1292 = vld [vmem:[%s1253 + $0x98] sm:$0xf]
        %v1293 = vld [vmem:[%s1253 + $0x9c] sm:$0xf]
        %v1294 = vld [vmem:[%s1253 + $0xa0] sm:$0xf]
        %v1295 = vld [vmem:[%s1253 + $0xa4] sm:$0xf]
        %v1296 = vld [vmem:[%s1253 + $0xa8] sm:$0xf]
        %v1297 = vld [vmem:[%s1253 + $0xac] sm:$0xf]
        %v1298 = vld [vmem:[%s1253 + $0xb0] sm:$0xf]
        %v1299 = vld [vmem:[%s1253 + $0xb4] sm:$0xf]
        %v1300 = vld [vmem:[%s1253 + $0xb8] sm:$0xf]
        %v1301 = vld [vmem:[%s1253 + $0xbc] sm:$0xf]
        %v1302 = vpack.c.b16 %v1232, %v1229
        %v1303 = vpack.c.b16 %v1233, %v1230
        %v1304 = vpack.c.b16 %v1234, %v1231
        %v1305 = vpack.c.b16 %v1238, %v1235
        %v1306 = vpack.c.b16 %v1239, %v1236
        %v1307 = vpack.c.b16 %v1240, %v1237
        %v1308 = vpack.c.b16 %v1244, %v1241
        %v1309 = vpack.c.b16 %v1245, %v1242
        %v1310 = vpack.c.b16 %v1246, %v1243
        %v1311 = vpack.c.b16 %v1250, %v1247
        %v1312 = vpack.c.b16 %v1251, %v1248
        %v1313 = vpack.c.b16 %v1252, %v1249
        %v1374 = vunpack.c.l.b16 %v1254
        %v1375 = vunpack.c.l.b16 %v1255
        %v1376 = vunpack.c.l.b16 %v1256
        %v1377 = vunpack.c.l.b16 %v1257
        %v1378 = vunpack.c.l.b16 %v1258
        %v1379 = vunpack.c.l.b16 %v1259
        %v1380 = vunpack.c.l.b16 %v1260
        %v1381 = vunpack.c.l.b16 %v1261
        %v1382 = vunpack.c.l.b16 %v1262
        %v1383 = vunpack.c.l.b16 %v1263
        %v1384 = vunpack.c.l.b16 %v1264
        %v1385 = vunpack.c.l.b16 %v1265
        %v1386 = vunpack.c.l.b16 %v1266
        %v1387 = vunpack.c.l.b16 %v1267
        %v1388 = vunpack.c.l.b16 %v1268
        %v1389 = vunpack.c.l.b16 %v1269
        %v1390 = vunpack.c.l.b16 %v1270
        %v1391 = vunpack.c.l.b16 %v1271
        %v1392 = vunpack.c.l.b16 %v1272
        %v1393 = vunpack.c.l.b16 %v1273
        %v1394 = vunpack.c.l.b16 %v1274
        %v1395 = vunpack.c.l.b16 %v1275
        %v1396 = vunpack.c.l.b16 %v1276
        %v1397 = vunpack.c.l.b16 %v1277
        %v1398 = vunpack.c.l.b16 %v1278
        %v1399 = vunpack.c.l.b16 %v1279
        %v1400 = vunpack.c.l.b16 %v1280
        %v1401 = vunpack.c.l.b16 %v1281
        %v1402 = vunpack.c.l.b16 %v1282
        %v1403 = vunpack.c.l.b16 %v1283
        %v1404 = vunpack.c.l.b16 %v1284
        %v1405 = vunpack.c.l.b16 %v1285
        %v1406 = vunpack.c.l.b16 %v1286
        %v1407 = vunpack.c.l.b16 %v1287
        %v1408 = vunpack.c.l.b16 %v1288
        %v1409 = vunpack.c.l.b16 %v1289
        %v1410 = vunpack.c.l.b16 %v1290
        %v1411 = vunpack.c.l.b16 %v1291
        %v1412 = vunpack.c.l.b16 %v1292
        %v1413 = vunpack.c.l.b16 %v1293
        %v1414 = vunpack.c.l.b16 %v1294
        %v1415 = vunpack.c.l.b16 %v1295
        %v1416 = vunpack.c.l.b16 %v1296
        %v1417 = vunpack.c.l.b16 %v1297
        %v1418 = vunpack.c.l.b16 %v1298
        %v1419 = vunpack.c.l.b16 %v1299
        %v1420 = vunpack.c.l.b16 %v1300
        %v1421 = vunpack.c.l.b16 %v1301
        %v1422 = vpack.c.b16 %v1375, %v1374
        %v1423 = vpack.c.b16 %v1377, %v1376
        %v1424 = vpack.c.b16 %v1379, %v1378
        %v1425 = vpack.c.b16 %v1381, %v1380
        %v1426 = vpack.c.b16 %v1383, %v1382
        %v1427 = vpack.c.b16 %v1385, %v1384
        %v1428 = vpack.c.b16 %v1387, %v1386
        %v1429 = vpack.c.b16 %v1389, %v1388
        %v1430 = vpack.c.b16 %v1391, %v1390
        %v1431 = vpack.c.b16 %v1393, %v1392
        %v1432 = vpack.c.b16 %v1395, %v1394
        %v1433 = vpack.c.b16 %v1397, %v1396
        %v1434 = vpack.c.b16 %v1399, %v1398
        %v1435 = vpack.c.b16 %v1401, %v1400
        %v1436 = vpack.c.b16 %v1403, %v1402
        %v1437 = vpack.c.b16 %v1405, %v1404
        %v1438 = vpack.c.b16 %v1407, %v1406
        %v1439 = vpack.c.b16 %v1409, %v1408
        %v1440 = vpack.c.b16 %v1411, %v1410
        %v1441 = vpack.c.b16 %v1413, %v1412
        %v1442 = vpack.c.b16 %v1415, %v1414
        %v1443 = vpack.c.b16 %v1417, %v1416
        %v1444 = vpack.c.b16 %v1419, %v1418
        %v1445 = vpack.c.b16 %v1421, %v1420
        %1470 = vmatprep.subr.bf16.mxu0 0
        %1471 = vmatpush1.bf16.msra.mxu0 %v1422
        %1472 = vmatprep.subr.bf16.mxu0 0
        %1473 = vmatpush1.bf16.msra.mxu0 %v1423
        %1474 = vmatprep.subr.bf16.mxu0 0
        %1475 = vmatpush1.bf16.msra.mxu0 %v1424
        %1476 = vmatprep.subr.bf16.mxu0 0
        %1477 = vmatpush1.bf16.msra.mxu0 %v1425
        %1478 = vmatprep.subr.bf16.mxu0 0
        %1479 = vmatpush1.bf16.msra.mxu0 %v1426
        %1480 = vmatprep.subr.bf16.mxu0 0
        %1481 = vmatpush1.bf16.msra.mxu0 %v1427
        %1482 = vmatprep.subr.bf16.mxu0 0
        %1483 = vmatpush1.bf16.msra.mxu0 %v1428
        %1484 = vmatprep.subr.bf16.mxu0 0
        %1485 = vmatpush1.bf16.msra.mxu0 %v1429
        %1486 = vmatprep.subr.bf16.mxu0 0
        %1487 = vmatpush1.bf16.msra.mxu0 %v1430
        %1488 = vmatprep.subr.bf16.mxu0 0
        %1489 = vmatpush1.bf16.msra.mxu0 %v1431
        %1490 = vmatprep.subr.bf16.mxu0 0
        %1491 = vmatpush1.bf16.msra.mxu0 %v1432
        %1492 = vmatprep.subr.bf16.mxu0 0
        %1493 = vmatpush1.bf16.msra.mxu0 %v1433
        %1494 = vmatprep.subr.bf16.mxu0 0
        %1495 = vmatpush1.bf16.msra.mxu0 %v1434
        %1496 = vmatprep.subr.bf16.mxu0 0
        %1497 = vmatpush1.bf16.msra.mxu0 %v1435
        %1498 = vmatprep.subr.bf16.mxu0 0
        %1499 = vmatpush1.bf16.msra.mxu0 %v1436
        %1500 = vmatprep.subr.bf16.mxu0 0
        %1501 = vmatpush1.bf16.msra.mxu0 %v1437
        %1502 = vmatprep.mubr.bf16.mxu0 %v1303
        %1503 = vmatmul.mubr.bf16.gmra.mrb[0].mxu0 %v1302
        %v1504 = vpop.f32.mrb[0].mxu0
        %v1505 = vadd.f32 0.0, %v1504
        %v1506 = vpop.f32.mrb[0].mxu0
        %v1507 = vpop.f32.mrb[0].mxu0
        %v1508 = vadd.f32 0.0, %v1507
        %v1509 = vpop.f32.mrb[0].mxu0
        %1510 = vmatprep.mubr.bf16.mxu0 %v1306
        %1511 = vmatmul.mubr.bf16.gmra.mrb[0].mxu0 %v1305
        %v1512 = vpop.f32.mrb[0].mxu0
        %v1513 = vadd.f32 0.0, %v1512
        %v1514 = vpop.f32.mrb[0].mxu0
        %v1515 = vpop.f32.mrb[0].mxu0
        %v1516 = vadd.f32 0.0, %v1515
        %v1517 = vpop.f32.mrb[0].mxu0
        %1518 = vmatprep.mubr.bf16.mxu0 %v1309
        %1519 = vmatmul.mubr.bf16.gmra.mrb[0].mxu0 %v1308
        %v1520 = vpop.f32.mrb[0].mxu0
        %v1521 = vadd.f32 0.0, %v1520
        %v1522 = vpop.f32.mrb[0].mxu0
        %v1523 = vpop.f32.mrb[0].mxu0
        %v1524 = vadd.f32 0.0, %v1523
        %v1525 = vpop.f32.mrb[0].mxu0
        %1526 = vmatprep.mubr.bf16.mxu0 %v1312
        %1527 = vmatmul.mubr.bf16.gmra.mrb[0].mxu0 %v1311
        %v1528 = vpop.f32.mrb[0].mxu0
        %v1529 = vadd.f32 0.0, %v1528
        %v1530 = vpop.f32.mrb[0].mxu0
        %v1531 = vpop.f32.mrb[0].mxu0
        %v1532 = vadd.f32 0.0, %v1531
        %v1533 = vpop.f32.mrb[0].mxu0
        %1534 = vdwg.mxu0
        %1535 = vmatprep.subr.bf16.mxu0 0
        %1536 = vmatpush1.bf16.msra.mxu0 %v1438
        %1537 = vmatprep.subr.bf16.mxu0 0
        %1538 = vmatpush1.bf16.msra.mxu0 %v1439
        %1539 = vmatprep.subr.bf16.mxu0 0
        %1540 = vmatpush1.bf16.msra.mxu0 %v1440
        %1541 = vmatprep.subr.bf16.mxu0 0
        %1542 = vmatpush1.bf16.msra.mxu0 %v1441
        %1543 = vmatprep.subr.bf16.mxu0 0
        %1544 = vmatpush1.bf16.msra.mxu0 %v1442
        %1545 = vmatprep.subr.bf16.mxu0 0
        %1546 = vmatpush1.bf16.msra.mxu0 %v1443
        %1547 = vmatprep.subr.bf16.mxu0 0
        %1548 = vmatpush1.bf16.msra.mxu0 %v1444
        %1549 = vmatprep.subr.bf16.mxu0 0
        %1550 = vmatpush1.bf16.msra.mxu0 %v1445
        %1551 = vmatprep.subr.bf16.mxu0 0
        %1552 = vmatpush1.bf16.msra.mxu0 0
        %1553 = vmatprep.subr.bf16.mxu0 0
        %1554 = vmatpush1.bf16.msra.mxu0 0
        %1555 = vmatprep.subr.bf16.mxu0 0
        %1556 = vmatpush1.bf16.msra.mxu0 0
        %1557 = vmatprep.subr.bf16.mxu0 0
        %1558 = vmatpush1.bf16.msra.mxu0 0
        %1559 = vmatprep.subr.bf16.mxu0 0
        %1560 = vmatpush1.bf16.msra.mxu0 0
        %1561 = vmatprep.subr.bf16.mxu0 0
        %1562 = vmatpush1.bf16.msra.mxu0 0
        %1563 = vmatprep.subr.bf16.mxu0 0
        %1564 = vmatpush1.bf16.msra.mxu0 0
        %1565 = vmatprep.subr.bf16.mxu0 0
        %1566 = vmatpush1.bf16.msra.mxu0 0
        %1567 = vmatprep.mubr.bf16.mxu0 0
        %1568 = vmatmul.mubr.bf16.gmra.mrb[0].mxu0 %v1304
        %v1569 = vpop.f32.mrb[0].mxu0
        %v1570 = vadd.f32 %v1505, %v1569
        %v1571 = vpop.f32.mrb[0].mxu0
        %v1572 = vpop.f32.mrb[0].mxu0
        %v1573 = vadd.f32 %v1508, %v1572
        %v1574 = vpop.f32.mrb[0].mxu0
        %1575 = vmatprep.mubr.bf16.mxu0 0
        %1576 = vmatmul.mubr.bf16.gmra.mrb[0].mxu0 %v1307
        %v1577 = vpop.f32.mrb[0].mxu0
        %v1578 = vadd.f32 %v1513, %v1577
        %v1579 = vpop.f32.mrb[0].mxu0
        %v1580 = vpop.f32.mrb[0].mxu0
        %v1581 = vadd.f32 %v1516, %v1580
        %v1582 = vpop.f32.mrb[0].mxu0
        %1583 = vmatprep.mubr.bf16.mxu0 0
        %1584 = vmatmul.mubr.bf16.gmra.mrb[0].mxu0 %v1310
        %v1585 = vpop.f32.mrb[0].mxu0
        %v1586 = vadd.f32 %v1521, %v1585
        %v1587 = vpop.f32.mrb[0].mxu0
        %v1588 = vpop.f32.mrb[0].mxu0
        %v1589 = vadd.f32 %v1524, %v1588
        %v1590 = vpop.f32.mrb[0].mxu0
        %1591 = vmatprep.mubr.bf16.mxu0 0
        %1592 = vmatmul.mubr.bf16.gmra.mrb[0].mxu0 %v1313
        %v1593 = vpop.f32.mrb[0].mxu0
        %v1594 = vadd.f32 %v1529, %v1593
        %v1595 = vpop.f32.mrb[0].mxu0
        %v1596 = vpop.f32.mrb[0].mxu0
        %v1597 = vadd.f32 %v1532, %v1596
        %v1598 = vpop.f32.mrb[0].mxu0
        %1599 = vdwg.mxu0
        %v1600 = vpack.c.b16 %v1136, %v1133
        %v1601 = vpack.c.b16 %v1137, %v1134
        %v1602 = vpack.c.b16 %v1138, %v1135
        %v1603 = vpack.c.b16 %v1142, %v1139
        %v1604 = vpack.c.b16 %v1143, %v1140
        %v1605 = vpack.c.b16 %v1144, %v1141
        %v1606 = vpack.c.b16 %v1148, %v1145
        %v1607 = vpack.c.b16 %v1149, %v1146
        %v1608 = vpack.c.b16 %v1150, %v1147
        %v1609 = vpack.c.b16 %v1154, %v1151
        %v1610 = vpack.c.b16 %v1155, %v1152
        %v1611 = vpack.c.b16 %v1156, %v1153
        %v1672 = vunpack.c.l.b16 %v1157
        %v1673 = vunpack.c.l.b16 %v1158
        %v1674 = vunpack.c.l.b16 %v1159
        %v1675 = vunpack.c.l.b16 %v1160
        %v1676 = vunpack.c.l.b16 %v1161
        %v1677 = vunpack.c.l.b16 %v1162
        %v1678 = vunpack.c.l.b16 %v1163
        %v1679 = vunpack.c.l.b16 %v1164
        %v1680 = vunpack.c.l.b16 %v1165
        %v1681 = vunpack.c.l.b16 %v1166
        %v1682 = vunpack.c.l.b16 %v1167
        %v1683 = vunpack.c.l.b16 %v1168
        %v1684 = vunpack.c.l.b16 %v1169
        %v1685 = vunpack.c.l.b16 %v1170
        %v1686 = vunpack.c.l.b16 %v1171
        %v1687 = vunpack.c.l.b16 %v1172
        %v1688 = vunpack.c.l.b16 %v1173
        %v1689 = vunpack.c.l.b16 %v1174
        %v1690 = vunpack.c.l.b16 %v1175
        %v1691 = vunpack.c.l.b16 %v1176
        %v1692 = vunpack.c.l.b16 %v1177
        %v1693 = vunpack.c.l.b16 %v1178
        %v1694 = vunpack.c.l.b16 %v1179
        %v1695 = vunpack.c.l.b16 %v1180
        %v1696 = vunpack.c.l.b16 %v1181
        %v1697 = vunpack.c.l.b16 %v1182
        %v1698 = vunpack.c.l.b16 %v1183
        %v1699 = vunpack.c.l.b16 %v1184
        %v1700 = vunpack.c.l.b16 %v1185
        %v1701 = vunpack.c.l.b16 %v1186
        %v1702 = vunpack.c.l.b16 %v1187
        %v1703 = vunpack.c.l.b16 %v1188
        %v1704 = vunpack.c.l.b16 %v1189
        %v1705 = vunpack.c.l.b16 %v1190
        %v1706 = vunpack.c.l.b16 %v1191
        %v1707 = vunpack.c.l.b16 %v1192
        %v1708 = vunpack.c.l.b16 %v1193
        %v1709 = vunpack.c.l.b16 %v1194
        %v1710 = vunpack.c.l.b16 %v1195
        %v1711 = vunpack.c.l.b16 %v1196
        %v1712 = vunpack.c.l.b16 %v1197
        %v1713 = vunpack.c.l.b16 %v1198
        %v1714 = vunpack.c.l.b16 %v1199
        %v1715 = vunpack.c.l.b16 %v1200
        %v1716 = vunpack.c.l.b16 %v1201
        %v1717 = vunpack.c.l.b16 %v1202
        %v1718 = vunpack.c.l.b16 %v1203
        %v1719 = vunpack.c.l.b16 %v1204
        %v1720 = vpack.c.b16 %v1673, %v1672
        %v1721 = vpack.c.b16 %v1675, %v1674
        %v1722 = vpack.c.b16 %v1677, %v1676
        %v1723 = vpack.c.b16 %v1679, %v1678
        %v1724 = vpack.c.b16 %v1681, %v1680
        %v1725 = vpack.c.b16 %v1683, %v1682
        %v1726 = vpack.c.b16 %v1685, %v1684
        %v1727 = vpack.c.b16 %v1687, %v1686
        %v1728 = vpack.c.b16 %v1689, %v1688
        %v1729 = vpack.c.b16 %v1691, %v1690
        %v1730 = vpack.c.b16 %v1693, %v1692
        %v1731 = vpack.c.b16 %v1695, %v1694
        %v1732 = vpack.c.b16 %v1697, %v1696
        %v1733 = vpack.c.b16 %v1699, %v1698
        %v1734 = vpack.c.b16 %v1701, %v1700
        %v1735 = vpack.c.b16 %v1703, %v1702
        %v1736 = vpack.c.b16 %v1705, %v1704
        %v1737 = vpack.c.b16 %v1707, %v1706
        %v1738 = vpack.c.b16 %v1709, %v1708
        %v1739 = vpack.c.b16 %v1711, %v1710
        %v1740 = vpack.c.b16 %v1713, %v1712
        %v1741 = vpack.c.b16 %v1715, %v1714
        %v1742 = vpack.c.b16 %v1717, %v1716
        %v1743 = vpack.c.b16 %v1719, %v1718
        %1768 = vmatprep.subr.bf16.mxu0 0
        %1769 = vmatpush1.bf16.msra.mxu0 %v1720
        %1770 = vmatprep.subr.bf16.mxu0 0
        %1771 = vmatpush1.bf16.msra.mxu0 %v1721
        %1772 = vmatprep.subr.bf16.mxu0 0
        %1773 = vmatpush1.bf16.msra.mxu0 %v1722
        %1774 = vmatprep.subr.bf16.mxu0 0
        %1775 = vmatpush1.bf16.msra.mxu0 %v1723
        %1776 = vmatprep.subr.bf16.mxu0 0
        %1777 = vmatpush1.bf16.msra.mxu0 %v1724
        %1778 = vmatprep.subr.bf16.mxu0 0
        %1779 = vmatpush1.bf16.msra.mxu0 %v1725
        %1780 = vmatprep.subr.bf16.mxu0 0
        %1781 = vmatpush1.bf16.msra.mxu0 %v1726
        %1782 = vmatprep.subr.bf16.mxu0 0
        %1783 = vmatpush1.bf16.msra.mxu0 %v1727
        %1784 = vmatprep.subr.bf16.mxu0 0
        %1785 = vmatpush1.bf16.msra.mxu0 %v1728
        %1786 = vmatprep.subr.bf16.mxu0 0
        %1787 = vmatpush1.bf16.msra.mxu0 %v1729
        %1788 = vmatprep.subr.bf16.mxu0 0
        %1789 = vmatpush1.bf16.msra.mxu0 %v1730
        %1790 = vmatprep.subr.bf16.mxu0 0
        %1791 = vmatpush1.bf16.msra.mxu0 %v1731
        %1792 = vmatprep.subr.bf16.mxu0 0
        %1793 = vmatpush1.bf16.msra.mxu0 %v1732
        %1794 = vmatprep.subr.bf16.mxu0 0
        %1795 = vmatpush1.bf16.msra.mxu0 %v1733
        %1796 = vmatprep.subr.bf16.mxu0 0
        %1797 = vmatpush1.bf16.msra.mxu0 %v1734
        %1798 = vmatprep.subr.bf16.mxu0 0
        %1799 = vmatpush1.bf16.msra.mxu0 %v1735
        %1800 = vmatprep.mubr.bf16.mxu0 %v1601
        %1801 = vmatmul.mubr.bf16.gmra.mrb[0].mxu0 %v1600
        %v1802 = vpop.f32.mrb[0].mxu0
        %v1803 = vadd.f32 %v1570, %v1802
        %v1804 = vpop.f32.mrb[0].mxu0
        %v1805 = vpop.f32.mrb[0].mxu0
        %v1806 = vadd.f32 %v1573, %v1805
        %v1807 = vpop.f32.mrb[0].mxu0
        %1808 = vmatprep.mubr.bf16.mxu0 %v1604
        %1809 = vmatmul.mubr.bf16.gmra.mrb[0].mxu0 %v1603
        %v1810 = vpop.f32.mrb[0].mxu0
        %v1811 = vadd.f32 %v1578, %v1810
        %v1812 = vpop.f32.mrb[0].mxu0
        %v1813 = vpop.f32.mrb[0].mxu0
        %v1814 = vadd.f32 %v1581, %v1813
        %v1815 = vpop.f32.mrb[0].mxu0
        %1816 = vmatprep.mubr.bf16.mxu0 %v1607
        %1817 = vmatmul.mubr.bf16.gmra.mrb[0].mxu0 %v1606
        %v1818 = vpop.f32.mrb[0].mxu0
        %v1819 = vadd.f32 %v1586, %v1818
        %v1820 = vpop.f32.mrb[0].mxu0
        %v1821 = vpop.f32.mrb[0].mxu0
        %v1822 = vadd.f32 %v1589, %v1821
        %v1823 = vpop.f32.mrb[0].mxu0
        %1824 = vmatprep.mubr.bf16.mxu0 %v1610
        %1825 = vmatmul.mubr.bf16.gmra.mrb[0].mxu0 %v1609
        %v1826 = vpop.f32.mrb[0].mxu0
        %v1827 = vadd.f32 %v1594, %v1826
        %v1828 = vpop.f32.mrb[0].mxu0
        %v1829 = vpop.f32.mrb[0].mxu0
        %v1830 = vadd.f32 %v1597, %v1829
        %v1831 = vpop.f32.mrb[0].mxu0
        %1832 = vdwg.mxu0
        %1833 = vmatprep.subr.bf16.mxu0 0
        %1834 = vmatpush1.bf16.msra.mxu0 %v1736
        %1835 = vmatprep.subr.bf16.mxu0 0
        %1836 = vmatpush1.bf16.msra.mxu0 %v1737
        %1837 = vmatprep.subr.bf16.mxu0 0
        %1838 = vmatpush1.bf16.msra.mxu0 %v1738
        %1839 = vmatprep.subr.bf16.mxu0 0
        %1840 = vmatpush1.bf16.msra.mxu0 %v1739
        %1841 = vmatprep.subr.bf16.mxu0 0
        %1842 = vmatpush1.bf16.msra.mxu0 %v1740
        %1843 = vmatprep.subr.bf16.mxu0 0
        %1844 = vmatpush1.bf16.msra.mxu0 %v1741
        %1845 = vmatprep.subr.bf16.mxu0 0
        %1846 = vmatpush1.bf16.msra.mxu0 %v1742
        %1847 = vmatprep.subr.bf16.mxu0 0
        %1848 = vmatpush1.bf16.msra.mxu0 %v1743
        %1849 = vmatprep.subr.bf16.mxu0 0
        %1850 = vmatpush1.bf16.msra.mxu0 0
        %1851 = vmatprep.subr.bf16.mxu0 0
        %1852 = vmatpush1.bf16.msra.mxu0 0
        %1853 = vmatprep.subr.bf16.mxu0 0
        %1854 = vmatpush1.bf16.msra.mxu0 0
        %1855 = vmatprep.subr.bf16.mxu0 0
        %1856 = vmatpush1.bf16.msra.mxu0 0
        %1857 = vmatprep.subr.bf16.mxu0 0
        %1858 = vmatpush1.bf16.msra.mxu0 0
        %1859 = vmatprep.subr.bf16.mxu0 0
        %1860 = vmatpush1.bf16.msra.mxu0 0
        %1861 = vmatprep.subr.bf16.mxu0 0
        %1862 = vmatpush1.bf16.msra.mxu0 0
        %1863 = vmatprep.subr.bf16.mxu0 0
        %1864 = vmatpush1.bf16.msra.mxu0 0
        %1865 = vmatprep.mubr.bf16.mxu0 0
        %1866 = vmatmul.mubr.bf16.gmra.mrb[0].mxu0 %v1602
        %v1867 = vpop.f32.mrb[0].mxu0
        %v1868 = vadd.f32 %v1803, %v1867
        %v1869 = vpop.f32.mrb[0].mxu0
        %v1870 = vpop.f32.mrb[0].mxu0
        %v1871 = vadd.f32 %v1806, %v1870
        %v1872 = vpop.f32.mrb[0].mxu0
        %1873 = vmatprep.mubr.bf16.mxu0 0
        %1874 = vmatmul.mubr.bf16.gmra.mrb[0].mxu0 %v1605
        %v1875 = vpop.f32.mrb[0].mxu0
        %v1876 = vadd.f32 %v1811, %v1875
        %v1877 = vpop.f32.mrb[0].mxu0
        %v1878 = vpop.f32.mrb[0].mxu0
        %v1879 = vadd.f32 %v1814, %v1878
        %v1880 = vpop.f32.mrb[0].mxu0
        %1881 = vmatprep.mubr.bf16.mxu0 0
        %1882 = vmatmul.mubr.bf16.gmra.mrb[0].mxu0 %v1608
        %v1883 = vpop.f32.mrb[0].mxu0
        %v1884 = vadd.f32 %v1819, %v1883
        %v1885 = vpop.f32.mrb[0].mxu0
        %v1886 = vpop.f32.mrb[0].mxu0
        %v1887 = vadd.f32 %v1822, %v1886
        %v1888 = vpop.f32.mrb[0].mxu0
        %1889 = vmatprep.mubr.bf16.mxu0 0
        %1890 = vmatmul.mubr.bf16.gmra.mrb[0].mxu0 %v1611
        %v1891 = vpop.f32.mrb[0].mxu0
        %v1892 = vadd.f32 %v1827, %v1891
        %v1893 = vpop.f32.mrb[0].mxu0
        %v1894 = vpop.f32.mrb[0].mxu0
        %v1895 = vadd.f32 %v1830, %v1894
        %v1896 = vpop.f32.mrb[0].mxu0
        %1897 = vdwg.mxu0
        %v1901 = vunpack.c.l.b16 %v1006
        %v1902 = vunpack.c.l.b16 %v1057
        %v1903 = vunpack.c.l.b16 %v1108
        %s1904 = scalar_lea.vmem %s3, 384
        %v1905 = vld [vmem:[%s1904] sm:$0xf]
        %v1906 = vld [vmem:[%s1904 + $0x4] sm:$0xf]
        %v1907 = vld [vmem:[%s1904 + $0x8] sm:$0xf]
        %v1908 = vld [vmem:[%s1904 + $0xc] sm:$0xf]
        %v1909 = vld [vmem:[%s1904 + $0x10] sm:$0xf]
        %v1910 = vld [vmem:[%s1904 + $0x14] sm:$0xf]
        %v1911 = vld [vmem:[%s1904 + $0x18] sm:$0xf]
        %v1912 = vld [vmem:[%s1904 + $0x1c] sm:$0xf]
        %v1913 = vld [vmem:[%s1904 + $0x20] sm:$0xf]
        %v1914 = vld [vmem:[%s1904 + $0x24] sm:$0xf]
        %v1915 = vld [vmem:[%s1904 + $0x28] sm:$0xf]
        %v1916 = vld [vmem:[%s1904 + $0x2c] sm:$0xf]
        %v1917 = vld [vmem:[%s1904 + $0x30] sm:$0xf]
        %v1918 = vld [vmem:[%s1904 + $0x34] sm:$0xf]
        %v1919 = vld [vmem:[%s1904 + $0x38] sm:$0xf]
        %v1920 = vld [vmem:[%s1904 + $0x3c] sm:$0xf]
        %v1921 = vld [vmem:[%s1904 + $0x40] sm:$0xf]
        %v1922 = vld [vmem:[%s1904 + $0x44] sm:$0xf]
        %v1923 = vld [vmem:[%s1904 + $0x48] sm:$0xf]
        %v1924 = vld [vmem:[%s1904 + $0x4c] sm:$0xf]
        %v1925 = vld [vmem:[%s1904 + $0x50] sm:$0xf]
        %v1926 = vld [vmem:[%s1904 + $0x54] sm:$0xf]
        %v1927 = vld [vmem:[%s1904 + $0x58] sm:$0xf]
        %v1928 = vld [vmem:[%s1904 + $0x5c] sm:$0xf]
        %v1929 = vld [vmem:[%s1904 + $0x60] sm:$0xf]
        %v1930 = vld [vmem:[%s1904 + $0x64] sm:$0xf]
        %v1931 = vld [vmem:[%s1904 + $0x68] sm:$0xf]
        %v1932 = vld [vmem:[%s1904 + $0x6c] sm:$0xf]
        %v1933 = vld [vmem:[%s1904 + $0x70] sm:$0xf]
        %v1934 = vld [vmem:[%s1904 + $0x74] sm:$0xf]
        %v1935 = vld [vmem:[%s1904 + $0x78] sm:$0xf]
        %v1936 = vld [vmem:[%s1904 + $0x7c] sm:$0xf]
        %v1937 = vld [vmem:[%s1904 + $0x80] sm:$0xf]
        %v1938 = vld [vmem:[%s1904 + $0x84] sm:$0xf]
        %v1939 = vld [vmem:[%s1904 + $0x88] sm:$0xf]
        %v1940 = vld [vmem:[%s1904 + $0x8c] sm:$0xf]
        %v1941 = vld [vmem:[%s1904 + $0x90] sm:$0xf]
        %v1942 = vld [vmem:[%s1904 + $0x94] sm:$0xf]
        %v1943 = vld [vmem:[%s1904 + $0x98] sm:$0xf]
        %v1944 = vld [vmem:[%s1904 + $0x9c] sm:$0xf]
        %v1945 = vld [vmem:[%s1904 + $0xa0] sm:$0xf]
        %v1946 = vld [vmem:[%s1904 + $0xa4] sm:$0xf]
        %v1947 = vld [vmem:[%s1904 + $0xa8] sm:$0xf]
        %v1948 = vld [vmem:[%s1904 + $0xac] sm:$0xf]
        %v1949 = vld [vmem:[%s1904 + $0xb0] sm:$0xf]
        %v1950 = vld [vmem:[%s1904 + $0xb4] sm:$0xf]
        %v1951 = vld [vmem:[%s1904 + $0xb8] sm:$0xf]
        %v1952 = vld [vmem:[%s1904 + $0xbc] sm:$0xf]
        %v1953 = vpack.c.b16 %v1139, %v1136
        %v1954 = vpack.c.b16 %v1140, %v1137
        %v1955 = vpack.c.b16 %v1141, %v1138
        %v1956 = vpack.c.b16 %v1145, %v1142
        %v1957 = vpack.c.b16 %v1146, %v1143
        %v1958 = vpack.c.b16 %v1147, %v1144
        %v1959 = vpack.c.b16 %v1151, %v1148
        %v1960 = vpack.c.b16 %v1152, %v1149
        %v1961 = vpack.c.b16 %v1153, %v1150
        %v1962 = vpack.c.b16 %v1901, %v1154
        %v1963 = vpack.c.b16 %v1902, %v1155
        %v1964 = vpack.c.b16 %v1903, %v1156
        %v2025 = vunpack.c.l.b16 %v1905
        %v2026 = vunpack.c.l.b16 %v1906
        %v2027 = vunpack.c.l.b16 %v1907
        %v2028 = vunpack.c.l.b16 %v1908
        %v2029 = vunpack.c.l.b16 %v1909
        %v2030 = vunpack.c.l.b16 %v1910
        %v2031 = vunpack.c.l.b16 %v1911
        %v2032 = vunpack.c.l.b16 %v1912
        %v2033 = vunpack.c.l.b16 %v1913
        %v2034 = vunpack.c.l.b16 %v1914
        %v2035 = vunpack.c.l.b16 %v1915
        %v2036 = vunpack.c.l.b16 %v1916
        %v2037 = vunpack.c.l.b16 %v1917
        %v2038 = vunpack.c.l.b16 %v1918
        %v2039 = vunpack.c.l.b16 %v1919
        %v2040 = vunpack.c.l.b16 %v1920
        %v2041 = vunpack.c.l.b16 %v1921
        %v2042 = vunpack.c.l.b16 %v1922
        %v2043 = vunpack.c.l.b16 %v1923
        %v2044 = vunpack.c.l.b16 %v1924
        %v2045 = vunpack.c.l.b16 %v1925
        %v2046 = vunpack.c.l.b16 %v1926
        %v2047 = vunpack.c.l.b16 %v1927
        %v2048 = vunpack.c.l.b16 %v1928
        %v2049 = vunpack.c.l.b16 %v1929
        %v2050 = vunpack.c.l.b16 %v1930
        %v2051 = vunpack.c.l.b16 %v1931
        %v2052 = vunpack.c.l.b16 %v1932
        %v2053 = vunpack.c.l.b16 %v1933
        %v2054 = vunpack.c.l.b16 %v1934
        %v2055 = vunpack.c.l.b16 %v1935
        %v2056 = vunpack.c.l.b16 %v1936
        %v2057 = vunpack.c.l.b16 %v1937
        %v2058 = vunpack.c.l.b16 %v1938
        %v2059 = vunpack.c.l.b16 %v1939
        %v2060 = vunpack.c.l.b16 %v1940
        %v2061 = vunpack.c.l.b16 %v1941
        %v2062 = vunpack.c.l.b16 %v1942
        %v2063 = vunpack.c.l.b16 %v1943
        %v2064 = vunpack.c.l.b16 %v1944
        %v2065 = vunpack.c.l.b16 %v1945
        %v2066 = vunpack.c.l.b16 %v1946
        %v2067 = vunpack.c.l.b16 %v1947
        %v2068 = vunpack.c.l.b16 %v1948
        %v2069 = vunpack.c.l.b16 %v1949
        %v2070 = vunpack.c.l.b16 %v1950
        %v2071 = vunpack.c.l.b16 %v1951
        %v2072 = vunpack.c.l.b16 %v1952
        %v2073 = vpack.c.b16 %v2026, %v2025
        %v2074 = vpack.c.b16 %v2028, %v2027
        %v2075 = vpack.c.b16 %v2030, %v2029
        %v2076 = vpack.c.b16 %v2032, %v2031
        %v2077 = vpack.c.b16 %v2034, %v2033
        %v2078 = vpack.c.b16 %v2036, %v2035
        %v2079 = vpack.c.b16 %v2038, %v2037
        %v2080 = vpack.c.b16 %v2040, %v2039
        %v2081 = vpack.c.b16 %v2042, %v2041
        %v2082 = vpack.c.b16 %v2044, %v2043
        %v2083 = vpack.c.b16 %v2046, %v2045
        %v2084 = vpack.c.b16 %v2048, %v2047
        %v2085 = vpack.c.b16 %v2050, %v2049
        %v2086 = vpack.c.b16 %v2052, %v2051
        %v2087 = vpack.c.b16 %v2054, %v2053
        %v2088 = vpack.c.b16 %v2056, %v2055
        %v2089 = vpack.c.b16 %v2058, %v2057
        %v2090 = vpack.c.b16 %v2060, %v2059
        %v2091 = vpack.c.b16 %v2062, %v2061
        %v2092 = vpack.c.b16 %v2064, %v2063
        %v2093 = vpack.c.b16 %v2066, %v2065
        %v2094 = vpack.c.b16 %v2068, %v2067
        %v2095 = vpack.c.b16 %v2070, %v2069
        %v2096 = vpack.c.b16 %v2072, %v2071
        %2121 = vmatprep.subr.bf16.mxu0 0
        %2122 = vmatpush1.bf16.msra.mxu0 %v2073
        %2123 = vmatprep.subr.bf16.mxu0 0
        %2124 = vmatpush1.bf16.msra.mxu0 %v2074
        %2125 = vmatprep.subr.bf16.mxu0 0
        %2126 = vmatpush1.bf16.msra.mxu0 %v2075
        %2127 = vmatprep.subr.bf16.mxu0 0
        %2128 = vmatpush1.bf16.msra.mxu0 %v2076
        %2129 = vmatprep.subr.bf16.mxu0 0
        %2130 = vmatpush1.bf16.msra.mxu0 %v2077
        %2131 = vmatprep.subr.bf16.mxu0 0
        %2132 = vmatpush1.bf16.msra.mxu0 %v2078
        %2133 = vmatprep.subr.bf16.mxu0 0
        %2134 = vmatpush1.bf16.msra.mxu0 %v2079
        %2135 = vmatprep.subr.bf16.mxu0 0
        %2136 = vmatpush1.bf16.msra.mxu0 %v2080
        %2137 = vmatprep.subr.bf16.mxu0 0
        %2138 = vmatpush1.bf16.msra.mxu0 %v2081
        %2139 = vmatprep.subr.bf16.mxu0 0
        %2140 = vmatpush1.bf16.msra.mxu0 %v2082
        %2141 = vmatprep.subr.bf16.mxu0 0
        %2142 = vmatpush1.bf16.msra.mxu0 %v2083
        %2143 = vmatprep.subr.bf16.mxu0 0
        %2144 = vmatpush1.bf16.msra.mxu0 %v2084
        %2145 = vmatprep.subr.bf16.mxu0 0
        %2146 = vmatpush1.bf16.msra.mxu0 %v2085
        %2147 = vmatprep.subr.bf16.mxu0 0
        %2148 = vmatpush1.bf16.msra.mxu0 %v2086
        %2149 = vmatprep.subr.bf16.mxu0 0
        %2150 = vmatpush1.bf16.msra.mxu0 %v2087
        %2151 = vmatprep.subr.bf16.mxu0 0
        %2152 = vmatpush1.bf16.msra.mxu0 %v2088
        %2153 = vmatprep.mubr.bf16.mxu0 %v1954
        %2154 = vmatmul.mubr.bf16.gmra.mrb[0].mxu0 %v1953
        %v2155 = vpop.f32.mrb[0].mxu0
        %v2156 = vadd.f32 0.0, %v2155
        %v2157 = vpop.f32.mrb[0].mxu0
        %v2158 = vpop.f32.mrb[0].mxu0
        %v2159 = vadd.f32 0.0, %v2158
        %v2160 = vpop.f32.mrb[0].mxu0
        %2161 = vmatprep.mubr.bf16.mxu0 %v1957
        %2162 = vmatmul.mubr.bf16.gmra.mrb[0].mxu0 %v1956
        %v2163 = vpop.f32.mrb[0].mxu0
        %v2164 = vadd.f32 0.0, %v2163
        %v2165 = vpop.f32.mrb[0].mxu0
        %v2166 = vpop.f32.mrb[0].mxu0
        %v2167 = vadd.f32 0.0, %v2166
        %v2168 = vpop.f32.mrb[0].mxu0
        %2169 = vmatprep.mubr.bf16.mxu0 %v1960
        %2170 = vmatmul.mubr.bf16.gmra.mrb[0].mxu0 %v1959
        %v2171 = vpop.f32.mrb[0].mxu0
        %v2172 = vadd.f32 0.0, %v2171
        %v2173 = vpop.f32.mrb[0].mxu0
        %v2174 = vpop.f32.mrb[0].mxu0
        %v2175 = vadd.f32 0.0, %v2174
        %v2176 = vpop.f32.mrb[0].mxu0
        %2177 = vmatprep.mubr.bf16.mxu0 %v1963
        %2178 = vmatmul.mubr.bf16.gmra.mrb[0].mxu0 %v1962
        %v2179 = vpop.f32.mrb[0].mxu0
        %v2180 = vadd.f32 0.0, %v2179
        %v2181 = vpop.f32.mrb[0].mxu0
        %v2182 = vpop.f32.mrb[0].mxu0
        %v2183 = vadd.f32 0.0, %v2182
        %v2184 = vpop.f32.mrb[0].mxu0
        %2185 = vdwg.mxu0
        %2186 = vmatprep.subr.bf16.mxu0 0
        %2187 = vmatpush1.bf16.msra.mxu0 %v2089
        %2188 = vmatprep.subr.bf16.mxu0 0
        %2189 = vmatpush1.bf16.msra.mxu0 %v2090
        %2190 = vmatprep.subr.bf16.mxu0 0
        %2191 = vmatpush1.bf16.msra.mxu0 %v2091
        %2192 = vmatprep.subr.bf16.mxu0 0
        %2193 = vmatpush1.bf16.msra.mxu0 %v2092
        %2194 = vmatprep.subr.bf16.mxu0 0
        %2195 = vmatpush1.bf16.msra.mxu0 %v2093
        %2196 = vmatprep.subr.bf16.mxu0 0
        %2197 = vmatpush1.bf16.msra.mxu0 %v2094
        %2198 = vmatprep.subr.bf16.mxu0 0
        %2199 = vmatpush1.bf16.msra.mxu0 %v2095
        %2200 = vmatprep.subr.bf16.mxu0 0
        %2201 = vmatpush1.bf16.msra.mxu0 %v2096
        %2202 = vmatprep.subr.bf16.mxu0 0
        %2203 = vmatpush1.bf16.msra.mxu0 0
        %2204 = vmatprep.subr.bf16.mxu0 0
        %2205 = vmatpush1.bf16.msra.mxu0 0
        %2206 = vmatprep.subr.bf16.mxu0 0
        %2207 = vmatpush1.bf16.msra.mxu0 0
        %2208 = vmatprep.subr.bf16.mxu0 0
        %2209 = vmatpush1.bf16.msra.mxu0 0
        %2210 = vmatprep.subr.bf16.mxu0 0
        %2211 = vmatpush1.bf16.msra.mxu0 0
        %2212 = vmatprep.subr.bf16.mxu0 0
        %2213 = vmatpush1.bf16.msra.mxu0 0
        %2214 = vmatprep.subr.bf16.mxu0 0
        %2215 = vmatpush1.bf16.msra.mxu0 0
        %2216 = vmatprep.subr.bf16.mxu0 0
        %2217 = vmatpush1.bf16.msra.mxu0 0
        %2218 = vmatprep.mubr.bf16.mxu0 0
        %2219 = vmatmul.mubr.bf16.gmra.mrb[0].mxu0 %v1955
        %v2220 = vpop.f32.mrb[0].mxu0
        %v2221 = vadd.f32 %v2156, %v2220
        %v2222 = vpop.f32.mrb[0].mxu0
        %v2223 = vpop.f32.mrb[0].mxu0
        %v2224 = vadd.f32 %v2159, %v2223
        %v2225 = vpop.f32.mrb[0].mxu0
        %2226 = vmatprep.mubr.bf16.mxu0 0
        %2227 = vmatmul.mubr.bf16.gmra.mrb[0].mxu0 %v1958
        %v2228 = vpop.f32.mrb[0].mxu0
        %v2229 = vadd.f32 %v2164, %v2228
        %v2230 = vpop.f32.mrb[0].mxu0
        %v2231 = vpop.f32.mrb[0].mxu0
        %v2232 = vadd.f32 %v2167, %v2231
        %v2233 = vpop.f32.mrb[0].mxu0
        %2234 = vmatprep.mubr.bf16.mxu0 0
        %2235 = vmatmul.mubr.bf16.gmra.mrb[0].mxu0 %v1961
        %v2236 = vpop.f32.mrb[0].mxu0
        %v2237 = vadd.f32 %v2172, %v2236
        %v2238 = vpop.f32.mrb[0].mxu0
        %v2239 = vpop.f32.mrb[0].mxu0
        %v2240 = vadd.f32 %v2175, %v2239
        %v2241 = vpop.f32.mrb[0].mxu0
        %2242 = vmatprep.mubr.bf16.mxu0 0
        %2243 = vmatmul.mubr.bf16.gmra.mrb[0].mxu0 %v1964
        %v2244 = vpop.f32.mrb[0].mxu0
        %v2245 = vadd.f32 %v2180, %v2244
        %v2246 = vpop.f32.mrb[0].mxu0
        %v2247 = vpop.f32.mrb[0].mxu0
        %v2248 = vadd.f32 %v2183, %v2247
        %v2249 = vpop.f32.mrb[0].mxu0
        %2250 = vdwg.mxu0
        %v2251 = vadd.f32 %v1868, %v2221
        %v2252 = vadd.f32 %v1871, %v2224
        %v2253 = vadd.f32 %v1876, %v2229
        %v2254 = vadd.f32 %v1879, %v2232
        %v2255 = vadd.f32 %v1884, %v2237
        %v2256 = vadd.f32 %v1887, %v2240
        %v2257 = vadd.f32 %v1892, %v2245
        %v2258 = vadd.f32 %v1895, %v2248
        %v2259 = vld [vmem:[%s4] sm:$0x1]
        %v2261 = vlaneseq
        %v2262 = vshrl.u32 %v2261, 7
        %v2263 = vsub.s32 0, %v2262
        %v2264 = vrot.slane %v2259, %v2263
        %v2266 = vadd.f32 %v2251, %v2264
        %v2267 = vadd.f32 %v2252, %v2264
        %v2268 = vadd.f32 %v2253, %v2264
        %v2269 = vadd.f32 %v2254, %v2264
        %v2270 = vadd.f32 %v2255, %v2264
        %v2271 = vadd.f32 %v2256, %v2264
        %v2272 = vadd.f32 %v2257, %v2264
        %v2273 = vadd.f32 %v2258, %v2264
        %vm2274 = vcmp.ge.f32.partialorder %v2266, 0.0
        %vm2275 = vcmp.ge.f32.partialorder %v2267, 0.0
        %vm2276 = vcmp.ge.f32.partialorder %v2268, 0.0
        %vm2277 = vcmp.ge.f32.partialorder %v2269, 0.0
        %vm2278 = vcmp.ge.f32.partialorder %v2270, 0.0
        %vm2279 = vcmp.ge.f32.partialorder %v2271, 0.0
        %vm2280 = vcmp.ge.f32.partialorder %v2272, 0.0
        %vm2281 = vcmp.ge.f32.partialorder %v2273, 0.0
        %v2282 = vmul.f32 %v2266, 0.01
        %v2283 = vmul.f32 %v2267, 0.01
        %v2284 = vmul.f32 %v2268, 0.01
        %v2285 = vmul.f32 %v2269, 0.01
        %v2286 = vmul.f32 %v2270, 0.01
        %v2287 = vmul.f32 %v2271, 0.01
        %v2288 = vmul.f32 %v2272, 0.01
        %v2289 = vmul.f32 %v2273, 0.01
        %v2290 = vsel %vm2274, %v2266, %v2282
        %v2291 = vsel %vm2275, %v2267, %v2283
        %v2292 = vsel %vm2276, %v2268, %v2284
        %v2293 = vsel %vm2277, %v2269, %v2285
        %v2294 = vsel %vm2278, %v2270, %v2286
        %v2295 = vsel %vm2279, %v2271, %v2287
        %v2296 = vsel %vm2280, %v2272, %v2288
        %v2297 = vsel %vm2281, %v2273, %v2289
        %s2298 = scalar_lea.vmem [#allocation3], 16
        %2299 = vst [vmem:[%s2298 + $0x1] sm:$0xff] %v2290
        %2300 = vst [vmem:[%s2298 + $0x11] sm:$0xff] %v2291
        %2301 = vst [vmem:[%s2298 + $0x21] sm:$0xff] %v2292
        %2302 = vst [vmem:[%s2298 + $0x31] sm:$0xff] %v2293
        %2303 = vst [vmem:[%s2298 + $0x41] sm:$0xff] %v2294
        %2304 = vst [vmem:[%s2298 + $0x51] sm:$0xff] %v2295
        %2305 = vst [vmem:[%s2298 + $0x61] sm:$0xff] %v2296
        %2306 = vst [vmem:[%s2298 + $0x71] sm:$0xff] %v2297
        %v2307 = vld [vmem:[#allocation3] ss:$2 sm:$0xf]
        %s2308 = scalar_lea.vmem [#allocation3], 16
        %v2309 = vld [vmem:[%s2308] ss:$2 sm:$0xf]
        %s2310 = scalar_lea.vmem [#allocation3], 32
        %v2311 = vld [vmem:[%s2310] ss:$2 sm:$0xf]
        %s2312 = scalar_lea.vmem [#allocation3], 48
        %v2313 = vld [vmem:[%s2312] ss:$2 sm:$0xf]
        %s2314 = scalar_lea.vmem [#allocation3], 64
        %v2315 = vld [vmem:[%s2314] ss:$2 sm:$0xf]
        %s2316 = scalar_lea.vmem [#allocation3], 80
        %v2317 = vld [vmem:[%s2316] ss:$2 sm:$0xf]
        %s2318 = scalar_lea.vmem [#allocation3], 96
        %v2319 = vld [vmem:[%s2318] ss:$2 sm:$0xf]
        %s2320 = scalar_lea.vmem [#allocation3], 112
        %v2321 = vld [vmem:[%s2320] ss:$2 sm:$0xf]
        %s2322 = scalar_lea.vmem [#allocation3], 128
        %v2323 = vld [vmem:[%s2322] ss:$2 sm:$0xf]
        %v2324 = vpack.c.bf16 %v2307, %v2307
        %v2325 = vpack.c.bf16 %v2309, %v2309
        %v2326 = vpack.c.bf16 %v2311, %v2311
        %v2327 = vpack.c.bf16 %v2313, %v2313
        %v2328 = vpack.c.bf16 %v2315, %v2315
        %v2329 = vpack.c.bf16 %v2317, %v2317
        %v2330 = vpack.c.bf16 %v2319, %v2319
        %v2331 = vpack.c.bf16 %v2321, %v2321
        %v2332 = vpack.c.bf16 %v2323, %v2323
        %s2333 = scalar_lea.vmem [#allocation3], 1
        %v2334 = vld [vmem:[%s2333] ss:$2 sm:$0xf]
        %s2335 = scalar_lea.vmem [#allocation3], 17
        %v2336 = vld [vmem:[%s2335] ss:$2 sm:$0xf]
        %s2337 = scalar_lea.vmem [#allocation3], 33
        %v2338 = vld [vmem:[%s2337] ss:$2 sm:$0xf]
        %s2339 = scalar_lea.vmem [#allocation3], 49
        %v2340 = vld [vmem:[%s2339] ss:$2 sm:$0xf]
        %s2341 = scalar_lea.vmem [#allocation3], 65
        %v2342 = vld [vmem:[%s2341] ss:$2 sm:$0xf]
        %s2343 = scalar_lea.vmem [#allocation3], 81
        %v2344 = vld [vmem:[%s2343] ss:$2 sm:$0xf]
        %s2345 = scalar_lea.vmem [#allocation3], 97
        %v2346 = vld [vmem:[%s2345] ss:$2 sm:$0xf]
        %s2347 = scalar_lea.vmem [#allocation3], 113
        %v2348 = vld [vmem:[%s2347] ss:$2 sm:$0xf]
        %s2349 = scalar_lea.vmem [#allocation3], 129
        %v2350 = vld [vmem:[%s2349] ss:$2 sm:$0xf]
        %v2351 = vpack.c.bf16 %v2334, %v2334
        %v2352 = vpack.c.bf16 %v2336, %v2336
        %v2353 = vpack.c.bf16 %v2338, %v2338
        %v2354 = vpack.c.bf16 %v2340, %v2340
        %v2355 = vpack.c.bf16 %v2342, %v2342
        %v2356 = vpack.c.bf16 %v2344, %v2344
        %v2357 = vpack.c.bf16 %v2346, %v2346
        %v2358 = vpack.c.bf16 %v2348, %v2348
        %v2359 = vpack.c.bf16 %v2350, %v2350
        %s2360 = scalar_lea.vmem [#allocation3], 2
        %v2361 = vld [vmem:[%s2360] ss:$2 sm:$0xf]
        %s2362 = scalar_lea.vmem [#allocation3], 18
        %v2363 = vld [vmem:[%s2362] ss:$2 sm:$0xf]
        %s2364 = scalar_lea.vmem [#allocation3], 34
        %v2365 = vld [vmem:[%s2364] ss:$2 sm:$0xf]
        %s2366 = scalar_lea.vmem [#allocation3], 50
        %v2367 = vld [vmem:[%s2366] ss:$2 sm:$0xf]
        %s2368 = scalar_lea.vmem [#allocation3], 66
        %v2369 = vld [vmem:[%s2368] ss:$2 sm:$0xf]
        %s2370 = scalar_lea.vmem [#allocation3], 82
        %v2371 = vld [vmem:[%s2370] ss:$2 sm:$0xf]
        %s2372 = scalar_lea.vmem [#allocation3], 98
        %v2373 = vld [vmem:[%s2372] ss:$2 sm:$0xf]
        %s2374 = scalar_lea.vmem [#allocation3], 114
        %v2375 = vld [vmem:[%s2374] ss:$2 sm:$0xf]
        %s2376 = scalar_lea.vmem [#allocation3], 130
        %v2377 = vld [vmem:[%s2376] ss:$2 sm:$0xf]
        %v2378 = vpack.c.bf16 %v2361, %v2361
        %v2379 = vpack.c.bf16 %v2363, %v2363
        %v2380 = vpack.c.bf16 %v2365, %v2365
        %v2381 = vpack.c.bf16 %v2367, %v2367
        %v2382 = vpack.c.bf16 %v2369, %v2369
        %v2383 = vpack.c.bf16 %v2371, %v2371
        %v2384 = vpack.c.bf16 %v2373, %v2373
        %v2385 = vpack.c.bf16 %v2375, %v2375
        %v2386 = vpack.c.bf16 %v2377, %v2377
        %v2390 = vrot.slane %v2326, 6
        %v2391 = vrot.slane %v2353, 6
        %v2392 = vrot.slane %v2380, 6
        %v2396 = vrot.slane %v2328, 4
        %v2397 = vrot.slane %v2355, 4
        %v2398 = vrot.slane %v2382, 4
        %v2402 = vrot.slane %v2330, 2
        %v2403 = vrot.slane %v2357, 2
        %v2404 = vrot.slane %v2384, 2
        %vm2405 = vcmask 1041408
        %v2408 = vsel %vm2405, %v2324, %v2390
        %v2411 = vsel %vm2405, %v2351, %v2391
        %v2414 = vsel %vm2405, %v2378, %v2392
        %vm2415 = vcmask 1043456
        %v2417 = vsel %vm2415, %v2408, %v2396
        %v2419 = vsel %vm2415, %v2411, %v2397
        %v2421 = vsel %vm2415, %v2414, %v2398
        %vm2422 = vcmask 1045504
        %v2424 = vsel %vm2422, %v2417, %v2402
        %v2427 = vsel %vm2422, %v2419, %v2403
        %v2430 = vsel %vm2422, %v2421, %v2404
        %v2432 = vld [vmem:[%s5] sm:$0xf]
        %v2433 = vld [vmem:[%s5 + $0x4] sm:$0xf]
        %v2434 = vld [vmem:[%s5 + $0x8] sm:$0xf]
        %v2435 = vld [vmem:[%s5 + $0xc] sm:$0xf]
        %v2436 = vld [vmem:[%s5 + $0x10] sm:$0xf]
        %v2437 = vld [vmem:[%s5 + $0x14] sm:$0xf]
        %v2438 = vld [vmem:[%s5 + $0x18] sm:$0xf]
        %v2439 = vld [vmem:[%s5 + $0x1c] sm:$0xf]
        %v2440 = vld [vmem:[%s5 + $0x20] sm:$0xf]
        %v2441 = vld [vmem:[%s5 + $0x24] sm:$0xf]
        %v2442 = vld [vmem:[%s5 + $0x28] sm:$0xf]
        %v2443 = vld [vmem:[%s5 + $0x2c] sm:$0xf]
        %v2444 = vld [vmem:[%s5 + $0x30] sm:$0xf]
        %v2445 = vld [vmem:[%s5 + $0x34] sm:$0xf]
        %v2446 = vld [vmem:[%s5 + $0x38] sm:$0xf]
        %v2447 = vld [vmem:[%s5 + $0x3c] sm:$0xf]
        %v2448 = vld [vmem:[%s5 + $0x40] sm:$0xf]
        %v2449 = vld [vmem:[%s5 + $0x44] sm:$0xf]
        %v2450 = vld [vmem:[%s5 + $0x48] sm:$0xf]
        %v2451 = vld [vmem:[%s5 + $0x4c] sm:$0xf]
        %v2452 = vld [vmem:[%s5 + $0x50] sm:$0xf]
        %v2453 = vld [vmem:[%s5 + $0x54] sm:$0xf]
        %v2454 = vld [vmem:[%s5 + $0x58] sm:$0xf]
        %v2455 = vld [vmem:[%s5 + $0x5c] sm:$0xf]
        %v2456 = vld [vmem:[%s5 + $0x60] sm:$0xf]
        %v2457 = vld [vmem:[%s5 + $0x64] sm:$0xf]
        %v2458 = vld [vmem:[%s5 + $0x68] sm:$0xf]
        %v2459 = vld [vmem:[%s5 + $0x6c] sm:$0xf]
        %v2460 = vld [vmem:[%s5 + $0x70] sm:$0xf]
        %v2461 = vld [vmem:[%s5 + $0x74] sm:$0xf]
        %v2462 = vld [vmem:[%s5 + $0x78] sm:$0xf]
        %v2463 = vld [vmem:[%s5 + $0x7c] sm:$0xf]
        %v2464 = vld [vmem:[%s5 + $0x80] sm:$0xf]
        %v2465 = vld [vmem:[%s5 + $0x84] sm:$0xf]
        %v2466 = vld [vmem:[%s5 + $0x88] sm:$0xf]
        %v2467 = vld [vmem:[%s5 + $0x8c] sm:$0xf]
        %v2468 = vld [vmem:[%s5 + $0x90] sm:$0xf]
        %v2469 = vld [vmem:[%s5 + $0x94] sm:$0xf]
        %v2470 = vld [vmem:[%s5 + $0x98] sm:$0xf]
        %v2471 = vld [vmem:[%s5 + $0x9c] sm:$0xf]
        %v2472 = vld [vmem:[%s5 + $0xa0] sm:$0xf]
        %v2473 = vld [vmem:[%s5 + $0xa4] sm:$0xf]
        %v2474 = vld [vmem:[%s5 + $0xa8] sm:$0xf]
        %v2475 = vld [vmem:[%s5 + $0xac] sm:$0xf]
        %v2476 = vld [vmem:[%s5 + $0xb0] sm:$0xf]
        %v2477 = vld [vmem:[%s5 + $0xb4] sm:$0xf]
        %v2478 = vld [vmem:[%s5 + $0xb8] sm:$0xf]
        %v2479 = vld [vmem:[%s5 + $0xbc] sm:$0xf]
        %v2483 = vrot.slane %v2327, 6
        %v2484 = vrot.slane %v2354, 6
        %v2485 = vrot.slane %v2381, 6
        %v2489 = vrot.slane %v2329, 4
        %v2490 = vrot.slane %v2356, 4
        %v2491 = vrot.slane %v2383, 4
        %v2495 = vrot.slane %v2331, 2
        %v2496 = vrot.slane %v2358, 2
        %v2497 = vrot.slane %v2385, 2
        %v2500 = vsel %vm2405, %v2325, %v2483
        %v2503 = vsel %vm2405, %v2352, %v2484
        %v2506 = vsel %vm2405, %v2379, %v2485
        %v2508 = vsel %vm2415, %v2500, %v2489
        %v2510 = vsel %vm2415, %v2503, %v2490
        %v2512 = vsel %vm2415, %v2506, %v2491
        %v2514 = vsel %vm2422, %v2508, %v2495
        %v2517 = vsel %vm2422, %v2510, %v2496
        %v2520 = vsel %vm2422, %v2512, %v2497
        %s2522 = scalar_lea.vmem %s5, 192
        %v2523 = vld [vmem:[%s2522] sm:$0xf]
        %v2524 = vld [vmem:[%s2522 + $0x4] sm:$0xf]
        %v2525 = vld [vmem:[%s2522 + $0x8] sm:$0xf]
        %v2526 = vld [vmem:[%s2522 + $0xc] sm:$0xf]
        %v2527 = vld [vmem:[%s2522 + $0x10] sm:$0xf]
        %v2528 = vld [vmem:[%s2522 + $0x14] sm:$0xf]
        %v2529 = vld [vmem:[%s2522 + $0x18] sm:$0xf]
        %v2530 = vld [vmem:[%s2522 + $0x1c] sm:$0xf]
        %v2531 = vld [vmem:[%s2522 + $0x20] sm:$0xf]
        %v2532 = vld [vmem:[%s2522 + $0x24] sm:$0xf]
        %v2533 = vld [vmem:[%s2522 + $0x28] sm:$0xf]
        %v2534 = vld [vmem:[%s2522 + $0x2c] sm:$0xf]
        %v2535 = vld [vmem:[%s2522 + $0x30] sm:$0xf]
        %v2536 = vld [vmem:[%s2522 + $0x34] sm:$0xf]
        %v2537 = vld [vmem:[%s2522 + $0x38] sm:$0xf]
        %v2538 = vld [vmem:[%s2522 + $0x3c] sm:$0xf]
        %v2539 = vld [vmem:[%s2522 + $0x40] sm:$0xf]
        %v2540 = vld [vmem:[%s2522 + $0x44] sm:$0xf]
        %v2541 = vld [vmem:[%s2522 + $0x48] sm:$0xf]
        %v2542 = vld [vmem:[%s2522 + $0x4c] sm:$0xf]
        %v2543 = vld [vmem:[%s2522 + $0x50] sm:$0xf]
        %v2544 = vld [vmem:[%s2522 + $0x54] sm:$0xf]
        %v2545 = vld [vmem:[%s2522 + $0x58] sm:$0xf]
        %v2546 = vld [vmem:[%s2522 + $0x5c] sm:$0xf]
        %v2547 = vld [vmem:[%s2522 + $0x60] sm:$0xf]
        %v2548 = vld [vmem:[%s2522 + $0x64] sm:$0xf]
        %v2549 = vld [vmem:[%s2522 + $0x68] sm:$0xf]
        %v2550 = vld [vmem:[%s2522 + $0x6c] sm:$0xf]
        %v2551 = vld [vmem:[%s2522 + $0x70] sm:$0xf]
        %v2552 = vld [vmem:[%s2522 + $0x74] sm:$0xf]
        %v2553 = vld [vmem:[%s2522 + $0x78] sm:$0xf]
        %v2554 = vld [vmem:[%s2522 + $0x7c] sm:$0xf]
        %v2555 = vld [vmem:[%s2522 + $0x80] sm:$0xf]
        %v2556 = vld [vmem:[%s2522 + $0x84] sm:$0xf]
        %v2557 = vld [vmem:[%s2522 + $0x88] sm:$0xf]
        %v2558 = vld [vmem:[%s2522 + $0x8c] sm:$0xf]
        %v2559 = vld [vmem:[%s2522 + $0x90] sm:$0xf]
        %v2560 = vld [vmem:[%s2522 + $0x94] sm:$0xf]
        %v2561 = vld [vmem:[%s2522 + $0x98] sm:$0xf]
        %v2562 = vld [vmem:[%s2522 + $0x9c] sm:$0xf]
        %v2563 = vld [vmem:[%s2522 + $0xa0] sm:$0xf]
        %v2564 = vld [vmem:[%s2522 + $0xa4] sm:$0xf]
        %v2565 = vld [vmem:[%s2522 + $0xa8] sm:$0xf]
        %v2566 = vld [vmem:[%s2522 + $0xac] sm:$0xf]
        %v2567 = vld [vmem:[%s2522 + $0xb0] sm:$0xf]
        %v2568 = vld [vmem:[%s2522 + $0xb4] sm:$0xf]
        %v2569 = vld [vmem:[%s2522 + $0xb8] sm:$0xf]
        %v2570 = vld [vmem:[%s2522 + $0xbc] sm:$0xf]
        %v2619 = vunpack.c.l.b16 %v2523
        %v2620 = vunpack.c.l.b16 %v2524
        %v2621 = vunpack.c.l.b16 %v2525
        %v2622 = vunpack.c.l.b16 %v2526
        %v2623 = vunpack.c.l.b16 %v2527
        %v2624 = vunpack.c.l.b16 %v2528
        %v2625 = vunpack.c.l.b16 %v2529
        %v2626 = vunpack.c.l.b16 %v2530
        %v2627 = vunpack.c.l.b16 %v2531
        %v2628 = vunpack.c.l.b16 %v2532
        %v2629 = vunpack.c.l.b16 %v2533
        %v2630 = vunpack.c.l.b16 %v2534
        %v2631 = vunpack.c.l.b16 %v2535
        %v2632 = vunpack.c.l.b16 %v2536
        %v2633 = vunpack.c.l.b16 %v2537
        %v2634 = vunpack.c.l.b16 %v2538
        %v2635 = vunpack.c.l.b16 %v2539
        %v2636 = vunpack.c.l.b16 %v2540
        %v2637 = vunpack.c.l.b16 %v2541
        %v2638 = vunpack.c.l.b16 %v2542
        %v2639 = vunpack.c.l.b16 %v2543
        %v2640 = vunpack.c.l.b16 %v2544
        %v2641 = vunpack.c.l.b16 %v2545
        %v2642 = vunpack.c.l.b16 %v2546
        %v2643 = vunpack.c.l.b16 %v2547
        %v2644 = vunpack.c.l.b16 %v2548
        %v2645 = vunpack.c.l.b16 %v2549
        %v2646 = vunpack.c.l.b16 %v2550
        %v2647 = vunpack.c.l.b16 %v2551
        %v2648 = vunpack.c.l.b16 %v2552
        %v2649 = vunpack.c.l.b16 %v2553
        %v2650 = vunpack.c.l.b16 %v2554
        %v2651 = vunpack.c.l.b16 %v2555
        %v2652 = vunpack.c.l.b16 %v2556
        %v2653 = vunpack.c.l.b16 %v2557
        %v2654 = vunpack.c.l.b16 %v2558
        %v2655 = vunpack.c.l.b16 %v2559
        %v2656 = vunpack.c.l.b16 %v2560
        %v2657 = vunpack.c.l.b16 %v2561
        %v2658 = vunpack.c.l.b16 %v2562
        %v2659 = vunpack.c.l.b16 %v2563
        %v2660 = vunpack.c.l.b16 %v2564
        %v2661 = vunpack.c.l.b16 %v2565
        %v2662 = vunpack.c.l.b16 %v2566
        %v2663 = vunpack.c.l.b16 %v2567
        %v2664 = vunpack.c.l.b16 %v2568
        %v2665 = vunpack.c.l.b16 %v2569
        %v2666 = vunpack.c.l.b16 %v2570
        %v2667 = vpack.c.b16 %v2620, %v2619
        %v2668 = vpack.c.b16 %v2622, %v2621
        %v2669 = vpack.c.b16 %v2624, %v2623
        %v2670 = vpack.c.b16 %v2626, %v2625
        %v2671 = vpack.c.b16 %v2628, %v2627
        %v2672 = vpack.c.b16 %v2630, %v2629
        %v2673 = vpack.c.b16 %v2632, %v2631
        %v2674 = vpack.c.b16 %v2634, %v2633
        %v2675 = vpack.c.b16 %v2636, %v2635
        %v2676 = vpack.c.b16 %v2638, %v2637
        %v2677 = vpack.c.b16 %v2640, %v2639
        %v2678 = vpack.c.b16 %v2642, %v2641
        %v2679 = vpack.c.b16 %v2644, %v2643
        %v2680 = vpack.c.b16 %v2646, %v2645
        %v2681 = vpack.c.b16 %v2648, %v2647
        %v2682 = vpack.c.b16 %v2650, %v2649
        %v2683 = vpack.c.b16 %v2652, %v2651
        %v2684 = vpack.c.b16 %v2654, %v2653
        %v2685 = vpack.c.b16 %v2656, %v2655
        %v2686 = vpack.c.b16 %v2658, %v2657
        %v2687 = vpack.c.b16 %v2660, %v2659
        %v2688 = vpack.c.b16 %v2662, %v2661
        %v2689 = vpack.c.b16 %v2664, %v2663
        %v2690 = vpack.c.b16 %v2666, %v2665
        %2715 = vmatprep.subr.bf16.mxu0 0
        %2716 = vmatpush1.bf16.msra.mxu0 %v2667
        %2717 = vmatprep.subr.bf16.mxu0 0
        %2718 = vmatpush1.bf16.msra.mxu0 %v2668
        %2719 = vmatprep.subr.bf16.mxu0 0
        %2720 = vmatpush1.bf16.msra.mxu0 %v2669
        %2721 = vmatprep.subr.bf16.mxu0 0
        %2722 = vmatpush1.bf16.msra.mxu0 %v2670
        %2723 = vmatprep.subr.bf16.mxu0 0
        %2724 = vmatpush1.bf16.msra.mxu0 %v2671
        %2725 = vmatprep.subr.bf16.mxu0 0
        %2726 = vmatpush1.bf16.msra.mxu0 %v2672
        %2727 = vmatprep.subr.bf16.mxu0 0
        %2728 = vmatpush1.bf16.msra.mxu0 %v2673
        %2729 = vmatprep.subr.bf16.mxu0 0
        %2730 = vmatpush1.bf16.msra.mxu0 %v2674
        %2731 = vmatprep.subr.bf16.mxu0 0
        %2732 = vmatpush1.bf16.msra.mxu0 %v2675
        %2733 = vmatprep.subr.bf16.mxu0 0
        %2734 = vmatpush1.bf16.msra.mxu0 %v2676
        %2735 = vmatprep.subr.bf16.mxu0 0
        %2736 = vmatpush1.bf16.msra.mxu0 %v2677
        %2737 = vmatprep.subr.bf16.mxu0 0
        %2738 = vmatpush1.bf16.msra.mxu0 %v2678
        %2739 = vmatprep.subr.bf16.mxu0 0
        %2740 = vmatpush1.bf16.msra.mxu0 %v2679
        %2741 = vmatprep.subr.bf16.mxu0 0
        %2742 = vmatpush1.bf16.msra.mxu0 %v2680
        %2743 = vmatprep.subr.bf16.mxu0 0
        %2744 = vmatpush1.bf16.msra.mxu0 %v2681
        %2745 = vmatprep.subr.bf16.mxu0 0
        %2746 = vmatpush1.bf16.msra.mxu0 %v2682
        %2747 = vmatprep.mubr.bf16.mxu0 %v2517
        %2748 = vmatmul.mubr.bf16.gmra.mrb[0].mxu0 %v2514
        %v2749 = vpop.f32.mrb[0].mxu0
        %v2750 = vadd.f32 0.0, %v2749
        %v2751 = vpop.f32.mrb[0].mxu0
        %v2752 = vpop.f32.mrb[0].mxu0
        %v2753 = vadd.f32 0.0, %v2752
        %v2754 = vpop.f32.mrb[0].mxu0
        %2755 = vdwg.mxu0
        %2756 = vmatprep.subr.bf16.mxu0 0
        %2757 = vmatpush1.bf16.msra.mxu0 %v2683
        %2758 = vmatprep.subr.bf16.mxu0 0
        %2759 = vmatpush1.bf16.msra.mxu0 %v2684
        %2760 = vmatprep.subr.bf16.mxu0 0
        %2761 = vmatpush1.bf16.msra.mxu0 %v2685
        %2762 = vmatprep.subr.bf16.mxu0 0
        %2763 = vmatpush1.bf16.msra.mxu0 %v2686
        %2764 = vmatprep.subr.bf16.mxu0 0
        %2765 = vmatpush1.bf16.msra.mxu0 %v2687
        %2766 = vmatprep.subr.bf16.mxu0 0
        %2767 = vmatpush1.bf16.msra.mxu0 %v2688
        %2768 = vmatprep.subr.bf16.mxu0 0
        %2769 = vmatpush1.bf16.msra.mxu0 %v2689
        %2770 = vmatprep.subr.bf16.mxu0 0
        %2771 = vmatpush1.bf16.msra.mxu0 %v2690
        %2772 = vmatprep.subr.bf16.mxu0 0
        %2773 = vmatpush1.bf16.msra.mxu0 0
        %2774 = vmatprep.subr.bf16.mxu0 0
        %2775 = vmatpush1.bf16.msra.mxu0 0
        %2776 = vmatprep.subr.bf16.mxu0 0
        %2777 = vmatpush1.bf16.msra.mxu0 0
        %2778 = vmatprep.subr.bf16.mxu0 0
        %2779 = vmatpush1.bf16.msra.mxu0 0
        %2780 = vmatprep.subr.bf16.mxu0 0
        %2781 = vmatpush1.bf16.msra.mxu0 0
        %2782 = vmatprep.subr.bf16.mxu0 0
        %2783 = vmatpush1.bf16.msra.mxu0 0
        %2784 = vmatprep.subr.bf16.mxu0 0
        %2785 = vmatpush1.bf16.msra.mxu0 0
        %2786 = vmatprep.subr.bf16.mxu0 0
        %2787 = vmatpush1.bf16.msra.mxu0 0
        %2788 = vmatprep.mubr.bf16.mxu0 0
        %2789 = vmatmul.mubr.bf16.gmra.mrb[0].mxu0 %v2520
        %v2790 = vpop.f32.mrb[0].mxu0
        %v2791 = vadd.f32 %v2750, %v2790
        %v2792 = vpop.f32.mrb[0].mxu0
        %v2793 = vpop.f32.mrb[0].mxu0
        %v2794 = vadd.f32 %v2753, %v2793
        %v2795 = vpop.f32.mrb[0].mxu0
        %2796 = vdwg.mxu0
        %v2845 = vunpack.c.l.b16 %v2432
        %v2846 = vunpack.c.l.b16 %v2433
        %v2847 = vunpack.c.l.b16 %v2434
        %v2848 = vunpack.c.l.b16 %v2435
        %v2849 = vunpack.c.l.b16 %v2436
        %v2850 = vunpack.c.l.b16 %v2437
        %v2851 = vunpack.c.l.b16 %v2438
        %v2852 = vunpack.c.l.b16 %v2439
        %v2853 = vunpack.c.l.b16 %v2440
        %v2854 = vunpack.c.l.b16 %v2441
        %v2855 = vunpack.c.l.b16 %v2442
        %v2856 = vunpack.c.l.b16 %v2443
        %v2857 = vunpack.c.l.b16 %v2444
        %v2858 = vunpack.c.l.b16 %v2445
        %v2859 = vunpack.c.l.b16 %v2446
        %v2860 = vunpack.c.l.b16 %v2447
        %v2861 = vunpack.c.l.b16 %v2448
        %v2862 = vunpack.c.l.b16 %v2449
        %v2863 = vunpack.c.l.b16 %v2450
        %v2864 = vunpack.c.l.b16 %v2451
        %v2865 = vunpack.c.l.b16 %v2452
        %v2866 = vunpack.c.l.b16 %v2453
        %v2867 = vunpack.c.l.b16 %v2454
        %v2868 = vunpack.c.l.b16 %v2455
        %v2869 = vunpack.c.l.b16 %v2456
        %v2870 = vunpack.c.l.b16 %v2457
        %v2871 = vunpack.c.l.b16 %v2458
        %v2872 = vunpack.c.l.b16 %v2459
        %v2873 = vunpack.c.l.b16 %v2460
        %v2874 = vunpack.c.l.b16 %v2461
        %v2875 = vunpack.c.l.b16 %v2462
        %v2876 = vunpack.c.l.b16 %v2463
        %v2877 = vunpack.c.l.b16 %v2464
        %v2878 = vunpack.c.l.b16 %v2465
        %v2879 = vunpack.c.l.b16 %v2466
        %v2880 = vunpack.c.l.b16 %v2467
        %v2881 = vunpack.c.l.b16 %v2468
        %v2882 = vunpack.c.l.b16 %v2469
        %v2883 = vunpack.c.l.b16 %v2470
        %v2884 = vunpack.c.l.b16 %v2471
        %v2885 = vunpack.c.l.b16 %v2472
        %v2886 = vunpack.c.l.b16 %v2473
        %v2887 = vunpack.c.l.b16 %v2474
        %v2888 = vunpack.c.l.b16 %v2475
        %v2889 = vunpack.c.l.b16 %v2476
        %v2890 = vunpack.c.l.b16 %v2477
        %v2891 = vunpack.c.l.b16 %v2478
        %v2892 = vunpack.c.l.b16 %v2479
        %v2893 = vpack.c.b16 %v2846, %v2845
        %v2894 = vpack.c.b16 %v2848, %v2847
        %v2895 = vpack.c.b16 %v2850, %v2849
        %v2896 = vpack.c.b16 %v2852, %v2851
        %v2897 = vpack.c.b16 %v2854, %v2853
        %v2898 = vpack.c.b16 %v2856, %v2855
        %v2899 = vpack.c.b16 %v2858, %v2857
        %v2900 = vpack.c.b16 %v2860, %v2859
        %v2901 = vpack.c.b16 %v2862, %v2861
        %v2902 = vpack.c.b16 %v2864, %v2863
        %v2903 = vpack.c.b16 %v2866, %v2865
        %v2904 = vpack.c.b16 %v2868, %v2867
        %v2905 = vpack.c.b16 %v2870, %v2869
        %v2906 = vpack.c.b16 %v2872, %v2871
        %v2907 = vpack.c.b16 %v2874, %v2873
        %v2908 = vpack.c.b16 %v2876, %v2875
        %v2909 = vpack.c.b16 %v2878, %v2877
        %v2910 = vpack.c.b16 %v2880, %v2879
        %v2911 = vpack.c.b16 %v2882, %v2881
        %v2912 = vpack.c.b16 %v2884, %v2883
        %v2913 = vpack.c.b16 %v2886, %v2885
        %v2914 = vpack.c.b16 %v2888, %v2887
        %v2915 = vpack.c.b16 %v2890, %v2889
        %v2916 = vpack.c.b16 %v2892, %v2891
        %2941 = vmatprep.subr.bf16.mxu0 0
        %2942 = vmatpush1.bf16.msra.mxu0 %v2893
        %2943 = vmatprep.subr.bf16.mxu0 0
        %2944 = vmatpush1.bf16.msra.mxu0 %v2894
        %2945 = vmatprep.subr.bf16.mxu0 0
        %2946 = vmatpush1.bf16.msra.mxu0 %v2895
        %2947 = vmatprep.subr.bf16.mxu0 0
        %2948 = vmatpush1.bf16.msra.mxu0 %v2896
        %2949 = vmatprep.subr.bf16.mxu0 0
        %2950 = vmatpush1.bf16.msra.mxu0 %v2897
        %2951 = vmatprep.subr.bf16.mxu0 0
        %2952 = vmatpush1.bf16.msra.mxu0 %v2898
        %2953 = vmatprep.subr.bf16.mxu0 0
        %2954 = vmatpush1.bf16.msra.mxu0 %v2899
        %2955 = vmatprep.subr.bf16.mxu0 0
        %2956 = vmatpush1.bf16.msra.mxu0 %v2900
        %2957 = vmatprep.subr.bf16.mxu0 0
        %2958 = vmatpush1.bf16.msra.mxu0 %v2901
        %2959 = vmatprep.subr.bf16.mxu0 0
        %2960 = vmatpush1.bf16.msra.mxu0 %v2902
        %2961 = vmatprep.subr.bf16.mxu0 0
        %2962 = vmatpush1.bf16.msra.mxu0 %v2903
        %2963 = vmatprep.subr.bf16.mxu0 0
        %2964 = vmatpush1.bf16.msra.mxu0 %v2904
        %2965 = vmatprep.subr.bf16.mxu0 0
        %2966 = vmatpush1.bf16.msra.mxu0 %v2905
        %2967 = vmatprep.subr.bf16.mxu0 0
        %2968 = vmatpush1.bf16.msra.mxu0 %v2906
        %2969 = vmatprep.subr.bf16.mxu0 0
        %2970 = vmatpush1.bf16.msra.mxu0 %v2907
        %2971 = vmatprep.subr.bf16.mxu0 0
        %2972 = vmatpush1.bf16.msra.mxu0 %v2908
        %2973 = vmatprep.mubr.bf16.mxu0 %v2427
        %2974 = vmatmul.mubr.bf16.gmra.mrb[0].mxu0 %v2424
        %v2975 = vpop.f32.mrb[0].mxu0
        %v2976 = vadd.f32 %v2791, %v2975
        %v2977 = vpop.f32.mrb[0].mxu0
        %v2978 = vpop.f32.mrb[0].mxu0
        %v2979 = vadd.f32 %v2794, %v2978
        %v2980 = vpop.f32.mrb[0].mxu0
        %2981 = vdwg.mxu0
        %2982 = vmatprep.subr.bf16.mxu0 0
        %2983 = vmatpush1.bf16.msra.mxu0 %v2909
        %2984 = vmatprep.subr.bf16.mxu0 0
        %2985 = vmatpush1.bf16.msra.mxu0 %v2910
        %2986 = vmatprep.subr.bf16.mxu0 0
        %2987 = vmatpush1.bf16.msra.mxu0 %v2911
        %2988 = vmatprep.subr.bf16.mxu0 0
        %2989 = vmatpush1.bf16.msra.mxu0 %v2912
        %2990 = vmatprep.subr.bf16.mxu0 0
        %2991 = vmatpush1.bf16.msra.mxu0 %v2913
        %2992 = vmatprep.subr.bf16.mxu0 0
        %2993 = vmatpush1.bf16.msra.mxu0 %v2914
        %2994 = vmatprep.subr.bf16.mxu0 0
        %2995 = vmatpush1.bf16.msra.mxu0 %v2915
        %2996 = vmatprep.subr.bf16.mxu0 0
        %2997 = vmatpush1.bf16.msra.mxu0 %v2916
        %2998 = vmatprep.subr.bf16.mxu0 0
        %2999 = vmatpush1.bf16.msra.mxu0 0
        %3000 = vmatprep.subr.bf16.mxu0 0
        %3001 = vmatpush1.bf16.msra.mxu0 0
        %3002 = vmatprep.subr.bf16.mxu0 0
        %3003 = vmatpush1.bf16.msra.mxu0 0
        %3004 = vmatprep.subr.bf16.mxu0 0
        %3005 = vmatpush1.bf16.msra.mxu0 0
        %3006 = vmatprep.subr.bf16.mxu0 0
        %3007 = vmatpush1.bf16.msra.mxu0 0
        %3008 = vmatprep.subr.bf16.mxu0 0
        %3009 = vmatpush1.bf16.msra.mxu0 0
        %3010 = vmatprep.subr.bf16.mxu0 0
        %3011 = vmatpush1.bf16.msra.mxu0 0
        %3012 = vmatprep.subr.bf16.mxu0 0
        %3013 = vmatpush1.bf16.msra.mxu0 0
        %3014 = vmatprep.mubr.bf16.mxu0 0
        %3015 = vmatmul.mubr.bf16.gmra.mrb[0].mxu0 %v2430
        %v3016 = vpop.f32.mrb[0].mxu0
        %v3017 = vadd.f32 %v2976, %v3016
        %v3018 = vpop.f32.mrb[0].mxu0
        %v3019 = vpop.f32.mrb[0].mxu0
        %v3020 = vadd.f32 %v2979, %v3019
        %v3021 = vpop.f32.mrb[0].mxu0
        %3022 = vdwg.mxu0
        %v3023 = vrot.slane %v2328, 6
        %v3024 = vrot.slane %v2355, 6
        %v3025 = vrot.slane %v2382, 6
        %v3026 = vrot.slane %v2330, 4
        %v3027 = vrot.slane %v2357, 4
        %v3028 = vrot.slane %v2384, 4
        %v3032 = vrot.slane %v2332, 2
        %v3033 = vrot.slane %v2359, 2
        %v3034 = vrot.slane %v2386, 2
        %v3037 = vsel %vm2405, %v2326, %v3023
        %v3040 = vsel %vm2405, %v2353, %v3024
        %v3043 = vsel %vm2405, %v2380, %v3025
        %v3045 = vsel %vm2415, %v3037, %v3026
        %v3047 = vsel %vm2415, %v3040, %v3027
        %v3049 = vsel %vm2415, %v3043, %v3028
        %v3051 = vsel %vm2422, %v3045, %v3032
        %v3054 = vsel %vm2422, %v3047, %v3033
        %v3057 = vsel %vm2422, %v3049, %v3034
        %s3059 = scalar_lea.vmem %s5, 384
        %v3060 = vld [vmem:[%s3059] sm:$0xf]
        %v3061 = vld [vmem:[%s3059 + $0x4] sm:$0xf]
        %v3062 = vld [vmem:[%s3059 + $0x8] sm:$0xf]
        %v3063 = vld [vmem:[%s3059 + $0xc] sm:$0xf]
        %v3064 = vld [vmem:[%s3059 + $0x10] sm:$0xf]
        %v3065 = vld [vmem:[%s3059 + $0x14] sm:$0xf]
        %v3066 = vld [vmem:[%s3059 + $0x18] sm:$0xf]
        %v3067 = vld [vmem:[%s3059 + $0x1c] sm:$0xf]
        %v3068 = vld [vmem:[%s3059 + $0x20] sm:$0xf]
        %v3069 = vld [vmem:[%s3059 + $0x24] sm:$0xf]
        %v3070 = vld [vmem:[%s3059 + $0x28] sm:$0xf]
        %v3071 = vld [vmem:[%s3059 + $0x2c] sm:$0xf]
        %v3072 = vld [vmem:[%s3059 + $0x30] sm:$0xf]
        %v3073 = vld [vmem:[%s3059 + $0x34] sm:$0xf]
        %v3074 = vld [vmem:[%s3059 + $0x38] sm:$0xf]
        %v3075 = vld [vmem:[%s3059 + $0x3c] sm:$0xf]
        %v3076 = vld [vmem:[%s3059 + $0x40] sm:$0xf]
        %v3077 = vld [vmem:[%s3059 + $0x44] sm:$0xf]
        %v3078 = vld [vmem:[%s3059 + $0x48] sm:$0xf]
        %v3079 = vld [vmem:[%s3059 + $0x4c] sm:$0xf]
        %v3080 = vld [vmem:[%s3059 + $0x50] sm:$0xf]
        %v3081 = vld [vmem:[%s3059 + $0x54] sm:$0xf]
        %v3082 = vld [vmem:[%s3059 + $0x58] sm:$0xf]
        %v3083 = vld [vmem:[%s3059 + $0x5c] sm:$0xf]
        %v3084 = vld [vmem:[%s3059 + $0x60] sm:$0xf]
        %v3085 = vld [vmem:[%s3059 + $0x64] sm:$0xf]
        %v3086 = vld [vmem:[%s3059 + $0x68] sm:$0xf]
        %v3087 = vld [vmem:[%s3059 + $0x6c] sm:$0xf]
        %v3088 = vld [vmem:[%s3059 + $0x70] sm:$0xf]
        %v3089 = vld [vmem:[%s3059 + $0x74] sm:$0xf]
        %v3090 = vld [vmem:[%s3059 + $0x78] sm:$0xf]
        %v3091 = vld [vmem:[%s3059 + $0x7c] sm:$0xf]
        %v3092 = vld [vmem:[%s3059 + $0x80] sm:$0xf]
        %v3093 = vld [vmem:[%s3059 + $0x84] sm:$0xf]
        %v3094 = vld [vmem:[%s3059 + $0x88] sm:$0xf]
        %v3095 = vld [vmem:[%s3059 + $0x8c] sm:$0xf]
        %v3096 = vld [vmem:[%s3059 + $0x90] sm:$0xf]
        %v3097 = vld [vmem:[%s3059 + $0x94] sm:$0xf]
        %v3098 = vld [vmem:[%s3059 + $0x98] sm:$0xf]
        %v3099 = vld [vmem:[%s3059 + $0x9c] sm:$0xf]
        %v3100 = vld [vmem:[%s3059 + $0xa0] sm:$0xf]
        %v3101 = vld [vmem:[%s3059 + $0xa4] sm:$0xf]
        %v3102 = vld [vmem:[%s3059 + $0xa8] sm:$0xf]
        %v3103 = vld [vmem:[%s3059 + $0xac] sm:$0xf]
        %v3104 = vld [vmem:[%s3059 + $0xb0] sm:$0xf]
        %v3105 = vld [vmem:[%s3059 + $0xb4] sm:$0xf]
        %v3106 = vld [vmem:[%s3059 + $0xb8] sm:$0xf]
        %v3107 = vld [vmem:[%s3059 + $0xbc] sm:$0xf]
        %v3156 = vunpack.c.l.b16 %v3060
        %v3157 = vunpack.c.l.b16 %v3061
        %v3158 = vunpack.c.l.b16 %v3062
        %v3159 = vunpack.c.l.b16 %v3063
        %v3160 = vunpack.c.l.b16 %v3064
        %v3161 = vunpack.c.l.b16 %v3065
        %v3162 = vunpack.c.l.b16 %v3066
        %v3163 = vunpack.c.l.b16 %v3067
        %v3164 = vunpack.c.l.b16 %v3068
        %v3165 = vunpack.c.l.b16 %v3069
        %v3166 = vunpack.c.l.b16 %v3070
        %v3167 = vunpack.c.l.b16 %v3071
        %v3168 = vunpack.c.l.b16 %v3072
        %v3169 = vunpack.c.l.b16 %v3073
        %v3170 = vunpack.c.l.b16 %v3074
        %v3171 = vunpack.c.l.b16 %v3075
        %v3172 = vunpack.c.l.b16 %v3076
        %v3173 = vunpack.c.l.b16 %v3077
        %v3174 = vunpack.c.l.b16 %v3078
        %v3175 = vunpack.c.l.b16 %v3079
        %v3176 = vunpack.c.l.b16 %v3080
        %v3177 = vunpack.c.l.b16 %v3081
        %v3178 = vunpack.c.l.b16 %v3082
        %v3179 = vunpack.c.l.b16 %v3083
        %v3180 = vunpack.c.l.b16 %v3084
        %v3181 = vunpack.c.l.b16 %v3085
        %v3182 = vunpack.c.l.b16 %v3086
        %v3183 = vunpack.c.l.b16 %v3087
        %v3184 = vunpack.c.l.b16 %v3088
        %v3185 = vunpack.c.l.b16 %v3089
        %v3186 = vunpack.c.l.b16 %v3090
        %v3187 = vunpack.c.l.b16 %v3091
        %v3188 = vunpack.c.l.b16 %v3092
        %v3189 = vunpack.c.l.b16 %v3093
        %v3190 = vunpack.c.l.b16 %v3094
        %v3191 = vunpack.c.l.b16 %v3095
        %v3192 = vunpack.c.l.b16 %v3096
        %v3193 = vunpack.c.l.b16 %v3097
        %v3194 = vunpack.c.l.b16 %v3098
        %v3195 = vunpack.c.l.b16 %v3099
        %v3196 = vunpack.c.l.b16 %v3100
        %v3197 = vunpack.c.l.b16 %v3101
        %v3198 = vunpack.c.l.b16 %v3102
        %v3199 = vunpack.c.l.b16 %v3103
        %v3200 = vunpack.c.l.b16 %v3104
        %v3201 = vunpack.c.l.b16 %v3105
        %v3202 = vunpack.c.l.b16 %v3106
        %v3203 = vunpack.c.l.b16 %v3107
        %v3204 = vpack.c.b16 %v3157, %v3156
        %v3205 = vpack.c.b16 %v3159, %v3158
        %v3206 = vpack.c.b16 %v3161, %v3160
        %v3207 = vpack.c.b16 %v3163, %v3162
        %v3208 = vpack.c.b16 %v3165, %v3164
        %v3209 = vpack.c.b16 %v3167, %v3166
        %v3210 = vpack.c.b16 %v3169, %v3168
        %v3211 = vpack.c.b16 %v3171, %v3170
        %v3212 = vpack.c.b16 %v3173, %v3172
        %v3213 = vpack.c.b16 %v3175, %v3174
        %v3214 = vpack.c.b16 %v3177, %v3176
        %v3215 = vpack.c.b16 %v3179, %v3178
        %v3216 = vpack.c.b16 %v3181, %v3180
        %v3217 = vpack.c.b16 %v3183, %v3182
        %v3218 = vpack.c.b16 %v3185, %v3184
        %v3219 = vpack.c.b16 %v3187, %v3186
        %v3220 = vpack.c.b16 %v3189, %v3188
        %v3221 = vpack.c.b16 %v3191, %v3190
        %v3222 = vpack.c.b16 %v3193, %v3192
        %v3223 = vpack.c.b16 %v3195, %v3194
        %v3224 = vpack.c.b16 %v3197, %v3196
        %v3225 = vpack.c.b16 %v3199, %v3198
        %v3226 = vpack.c.b16 %v3201, %v3200
        %v3227 = vpack.c.b16 %v3203, %v3202
        %3252 = vmatprep.subr.bf16.mxu0 0
        %3253 = vmatpush1.bf16.msra.mxu0 %v3204
        %3254 = vmatprep.subr.bf16.mxu0 0
        %3255 = vmatpush1.bf16.msra.mxu0 %v3205
        %3256 = vmatprep.subr.bf16.mxu0 0
        %3257 = vmatpush1.bf16.msra.mxu0 %v3206
        %3258 = vmatprep.subr.bf16.mxu0 0
        %3259 = vmatpush1.bf16.msra.mxu0 %v3207
        %3260 = vmatprep.subr.bf16.mxu0 0
        %3261 = vmatpush1.bf16.msra.mxu0 %v3208
        %3262 = vmatprep.subr.bf16.mxu0 0
        %3263 = vmatpush1.bf16.msra.mxu0 %v3209
        %3264 = vmatprep.subr.bf16.mxu0 0
        %3265 = vmatpush1.bf16.msra.mxu0 %v3210
        %3266 = vmatprep.subr.bf16.mxu0 0
        %3267 = vmatpush1.bf16.msra.mxu0 %v3211
        %3268 = vmatprep.subr.bf16.mxu0 0
        %3269 = vmatpush1.bf16.msra.mxu0 %v3212
        %3270 = vmatprep.subr.bf16.mxu0 0
        %3271 = vmatpush1.bf16.msra.mxu0 %v3213
        %3272 = vmatprep.subr.bf16.mxu0 0
        %3273 = vmatpush1.bf16.msra.mxu0 %v3214
        %3274 = vmatprep.subr.bf16.mxu0 0
        %3275 = vmatpush1.bf16.msra.mxu0 %v3215
        %3276 = vmatprep.subr.bf16.mxu0 0
        %3277 = vmatpush1.bf16.msra.mxu0 %v3216
        %3278 = vmatprep.subr.bf16.mxu0 0
        %3279 = vmatpush1.bf16.msra.mxu0 %v3217
        %3280 = vmatprep.subr.bf16.mxu0 0
        %3281 = vmatpush1.bf16.msra.mxu0 %v3218
        %3282 = vmatprep.subr.bf16.mxu0 0
        %3283 = vmatpush1.bf16.msra.mxu0 %v3219
        %3284 = vmatprep.mubr.bf16.mxu0 %v3054
        %3285 = vmatmul.mubr.bf16.gmra.mrb[0].mxu0 %v3051
        %v3286 = vpop.f32.mrb[0].mxu0
        %v3287 = vadd.f32 0.0, %v3286
        %v3288 = vpop.f32.mrb[0].mxu0
        %v3289 = vpop.f32.mrb[0].mxu0
        %v3290 = vadd.f32 0.0, %v3289
        %v3291 = vpop.f32.mrb[0].mxu0
        %3292 = vdwg.mxu0
        %3293 = vmatprep.subr.bf16.mxu0 0
        %3294 = vmatpush1.bf16.msra.mxu0 %v3220
        %3295 = vmatprep.subr.bf16.mxu0 0
        %3296 = vmatpush1.bf16.msra.mxu0 %v3221
        %3297 = vmatprep.subr.bf16.mxu0 0
        %3298 = vmatpush1.bf16.msra.mxu0 %v3222
        %3299 = vmatprep.subr.bf16.mxu0 0
        %3300 = vmatpush1.bf16.msra.mxu0 %v3223
        %3301 = vmatprep.subr.bf16.mxu0 0
        %3302 = vmatpush1.bf16.msra.mxu0 %v3224
        %3303 = vmatprep.subr.bf16.mxu0 0
        %3304 = vmatpush1.bf16.msra.mxu0 %v3225
        %3305 = vmatprep.subr.bf16.mxu0 0
        %3306 = vmatpush1.bf16.msra.mxu0 %v3226
        %3307 = vmatprep.subr.bf16.mxu0 0
        %3308 = vmatpush1.bf16.msra.mxu0 %v3227
        %3309 = vmatprep.subr.bf16.mxu0 0
        %3310 = vmatpush1.bf16.msra.mxu0 0
        %3311 = vmatprep.subr.bf16.mxu0 0
        %3312 = vmatpush1.bf16.msra.mxu0 0
        %3313 = vmatprep.subr.bf16.mxu0 0
        %3314 = vmatpush1.bf16.msra.mxu0 0
        %3315 = vmatprep.subr.bf16.mxu0 0
        %3316 = vmatpush1.bf16.msra.mxu0 0
        %3317 = vmatprep.subr.bf16.mxu0 0
        %3318 = vmatpush1.bf16.msra.mxu0 0
        %3319 = vmatprep.subr.bf16.mxu0 0
        %3320 = vmatpush1.bf16.msra.mxu0 0
        %3321 = vmatprep.subr.bf16.mxu0 0
        %3322 = vmatpush1.bf16.msra.mxu0 0
        %3323 = vmatprep.subr.bf16.mxu0 0
        %3324 = vmatpush1.bf16.msra.mxu0 0
        %3325 = vmatprep.mubr.bf16.mxu0 0
        %3326 = vmatmul.mubr.bf16.gmra.mrb[0].mxu0 %v3057
        %v3327 = vpop.f32.mrb[0].mxu0
        %v3328 = vadd.f32 %v3287, %v3327
        %v3329 = vpop.f32.mrb[0].mxu0
        %v3330 = vpop.f32.mrb[0].mxu0
        %v3331 = vadd.f32 %v3290, %v3330
        %v3332 = vpop.f32.mrb[0].mxu0
        %3333 = vdwg.mxu0
        %v3334 = vadd.f32 %v3017, %v3328
        %v3335 = vadd.f32 %v3020, %v3331
        %v3336 = vld [vmem:[%s6] sm:$0x1]
        %v3338 = vlaneseq
        %v3339 = vshrl.u32 %v3338, 7
        %v3340 = vsub.s32 0, %v3339
        %v3341 = vrot.slane %v3336, %v3340
        %v3343 = vadd.f32 %v3334, %v3341
        %v3344 = vadd.f32 %v3335, %v3341
        %vm3345 = vcmp.ge.f32.partialorder %v3343, 0.0
        %vm3346 = vcmp.ge.f32.partialorder %v3344, 0.0
        %v3347 = vmul.f32 %v3343, 0.01
        %v3348 = vmul.f32 %v3344, 0.01
        %v3349 = vsel %vm3345, %v3343, %v3347
        %v3350 = vsel %vm3346, %v3344, %v3348
        %s3351 = scalar_lea.vmem [#allocation4], 8
        %3352 = vst [vmem:[%s3351 + $0x1] sm:$0xf] %v3349
        %s3353 = scalar_lea.vmem [#allocation4], 16
        %3354 = vst [vmem:[%s3353 - $0x3] sm:$0xf0] %v3349
        %s3355 = scalar_lea.vmem [#allocation4], 24
        %3356 = vst [vmem:[%s3355 + $0x1] sm:$0xf] %v3350
        %s3357 = scalar_lea.vmem [#allocation4], 32
        %3358 = vst [vmem:[%s3357 - $0x3] sm:$0xf0] %v3350
        %v3359 = vld [vmem:[#allocation4] sm:$0xf]
        %v3360 = vld [vmem:[#allocation4 + $0x8] sm:$0xf]
        %v3361 = vld [vmem:[#allocation4 + $0x10] sm:$0xf]
        %v3362 = vld [vmem:[#allocation4 + $0x18] sm:$0xf]
        %v3363 = vpack.c.bf16 %v3359, %v3359
        %v3364 = vpack.c.bf16 %v3360, %v3360
        %v3365 = vpack.c.bf16 %v3361, %v3361
        %v3366 = vpack.c.bf16 %v3362, %v3362
        %v3367 = vld [vmem:[#allocation4 + $0x1] sm:$0xf]
        %v3368 = vld [vmem:[#allocation4 + $0x9] sm:$0xf]
        %v3369 = vld [vmem:[#allocation4 + $0x11] sm:$0xf]
        %v3370 = vld [vmem:[#allocation4 + $0x19] sm:$0xf]
        %v3371 = vpack.c.bf16 %v3367, %v3367
        %v3372 = vpack.c.bf16 %v3368, %v3368
        %v3373 = vpack.c.bf16 %v3369, %v3369
        %v3374 = vpack.c.bf16 %v3370, %v3370
        %v3375 = vld [vmem:[#allocation4 + $0x2] sm:$0xf]
        %v3376 = vld [vmem:[#allocation4 + $0xa] sm:$0xf]
        %v3377 = vld [vmem:[#allocation4 + $0x12] sm:$0xf]
        %v3378 = vld [vmem:[#allocation4 + $0x1a] sm:$0xf]
        %v3379 = vpack.c.bf16 %v3375, %v3375
        %v3380 = vpack.c.bf16 %v3376, %v3376
        %v3381 = vpack.c.bf16 %v3377, %v3377
        %v3382 = vpack.c.bf16 %v3378, %v3378
        %v3383 = vld [vmem:[%s3351] sm:$0xf]
        %v3384 = vld [vmem:[%s3351 + $0x8] sm:$0xf]
        %v3385 = vld [vmem:[%s3351 + $0x10] sm:$0xf]
        %v3386 = vld [vmem:[%s3351 + $0x18] sm:$0xf]
        %v3387 = vpack.c.bf16 %v3383, %v3383
        %v3388 = vpack.c.bf16 %v3384, %v3384
        %v3389 = vpack.c.bf16 %v3385, %v3385
        %v3390 = vpack.c.bf16 %v3386, %v3386
        %v3391 = vld [vmem:[%s3351 + $0x1] sm:$0xf]
        %v3392 = vld [vmem:[%s3351 + $0x9] sm:$0xf]
        %v3393 = vld [vmem:[%s3351 + $0x11] sm:$0xf]
        %v3394 = vld [vmem:[%s3351 + $0x19] sm:$0xf]
        %v3395 = vpack.c.bf16 %v3391, %v3391
        %v3396 = vpack.c.bf16 %v3392, %v3392
        %v3397 = vpack.c.bf16 %v3393, %v3393
        %v3398 = vpack.c.bf16 %v3394, %v3394
        %v3399 = vld [vmem:[%s3351 + $0x2] sm:$0xf]
        %v3400 = vld [vmem:[%s3351 + $0xa] sm:$0xf]
        %v3401 = vld [vmem:[%s3351 + $0x12] sm:$0xf]
        %v3402 = vld [vmem:[%s3351 + $0x1a] sm:$0xf]
        %v3403 = vpack.c.bf16 %v3399, %v3399
        %v3404 = vpack.c.bf16 %v3400, %v3400
        %v3405 = vpack.c.bf16 %v3401, %v3401
        %v3406 = vpack.c.bf16 %v3402, %v3402
        %v3407 = vld [vmem:[%s3353] sm:$0xf]
        %v3408 = vld [vmem:[%s3353 + $0x8] sm:$0xf]
        %v3409 = vld [vmem:[%s3353 + $0x10] sm:$0xf]
        %v3410 = vld [vmem:[%s3353 + $0x18] sm:$0xf]
        %v3411 = vpack.c.bf16 %v3407, %v3407
        %v3412 = vpack.c.bf16 %v3408, %v3408
        %v3413 = vpack.c.bf16 %v3409, %v3409
        %v3414 = vpack.c.bf16 %v3410, %v3410
        %v3415 = vld [vmem:[%s3353 + $0x1] sm:$0xf]
        %v3416 = vld [vmem:[%s3353 + $0x9] sm:$0xf]
        %v3417 = vld [vmem:[%s3353 + $0x11] sm:$0xf]
        %v3418 = vld [vmem:[%s3353 + $0x19] sm:$0xf]
        %v3419 = vpack.c.bf16 %v3415, %v3415
        %v3420 = vpack.c.bf16 %v3416, %v3416
        %v3421 = vpack.c.bf16 %v3417, %v3417
        %v3422 = vpack.c.bf16 %v3418, %v3418
        %v3423 = vld [vmem:[%s3353 + $0x2] sm:$0xf]
        %v3424 = vld [vmem:[%s3353 + $0xa] sm:$0xf]
        %v3425 = vld [vmem:[%s3353 + $0x12] sm:$0xf]
        %v3426 = vld [vmem:[%s3353 + $0x1a] sm:$0xf]
        %v3427 = vpack.c.bf16 %v3423, %v3423
        %v3428 = vpack.c.bf16 %v3424, %v3424
        %v3429 = vpack.c.bf16 %v3425, %v3425
        %v3430 = vpack.c.bf16 %v3426, %v3426
        %v3434 = vrot.slane %v3364, 6
        %v3435 = vrot.slane %v3372, 6
        %v3436 = vrot.slane %v3380, 6
        %v3440 = vrot.slane %v3365, 4
        %v3441 = vrot.slane %v3373, 4
        %v3442 = vrot.slane %v3381, 4
        %v3446 = vrot.slane %v3366, 2
        %v3447 = vrot.slane %v3374, 2
        %v3448 = vrot.slane %v3382, 2
        %v3451 = vsel %vm2405, %v3363, %v3434
        %v3454 = vsel %vm2405, %v3371, %v3435
        %v3457 = vsel %vm2405, %v3379, %v3436
        %v3459 = vsel %vm2415, %v3451, %v3440
        %v3461 = vsel %vm2415, %v3454, %v3441
        %v3463 = vsel %vm2415, %v3457, %v3442
        %v3465 = vsel %vm2422, %v3459, %v3446
        %v3468 = vsel %vm2422, %v3461, %v3447
        %v3471 = vsel %vm2422, %v3463, %v3448
        %v3473 = vld [vmem:[%s7] sm:$0xff]
        %v3474 = vld [vmem:[%s7 + $0x8] sm:$0xff]
        %v3475 = vld [vmem:[%s7 + $0x10] sm:$0xff]
        %v3476 = vld [vmem:[%s7 + $0x18] sm:$0xff]
        %v3477 = vld [vmem:[%s7 + $0x20] sm:$0xff]
        %v3478 = vld [vmem:[%s7 + $0x28] sm:$0xff]
        %v3479 = vld [vmem:[%s7 + $0x30] sm:$0xff]
        %v3480 = vld [vmem:[%s7 + $0x38] sm:$0xff]
        %v3481 = vld [vmem:[%s7 + $0x40] sm:$0xff]
        %v3482 = vld [vmem:[%s7 + $0x48] sm:$0xff]
        %v3483 = vld [vmem:[%s7 + $0x50] sm:$0xff]
        %v3484 = vld [vmem:[%s7 + $0x58] sm:$0xff]
        %v3485 = vld [vmem:[%s7 + $0x60] sm:$0xff]
        %v3486 = vld [vmem:[%s7 + $0x68] sm:$0xff]
        %v3487 = vld [vmem:[%s7 + $0x70] sm:$0xff]
        %v3488 = vld [vmem:[%s7 + $0x78] sm:$0xff]
        %v3489 = vld [vmem:[%s7 + $0x80] sm:$0xff]
        %v3490 = vld [vmem:[%s7 + $0x88] sm:$0xff]
        %v3491 = vld [vmem:[%s7 + $0x90] sm:$0xff]
        %v3492 = vld [vmem:[%s7 + $0x98] sm:$0xff]
        %v3493 = vld [vmem:[%s7 + $0xa0] sm:$0xff]
        %v3494 = vld [vmem:[%s7 + $0xa8] sm:$0xff]
        %v3495 = vld [vmem:[%s7 + $0xb0] sm:$0xff]
        %v3496 = vld [vmem:[%s7 + $0xb8] sm:$0xff]
        %v3497 = vld [vmem:[%s7 + $0xc0] sm:$0xff]
        %v3498 = vld [vmem:[%s7 + $0xc8] sm:$0xff]
        %v3499 = vld [vmem:[%s7 + $0xd0] sm:$0xff]
        %v3500 = vld [vmem:[%s7 + $0xd8] sm:$0xff]
        %v3501 = vld [vmem:[%s7 + $0xe0] sm:$0xff]
        %v3502 = vld [vmem:[%s7 + $0xe8] sm:$0xff]
        %v3503 = vld [vmem:[%s7 + $0xf0] sm:$0xff]
        %v3504 = vld [vmem:[%s7 + $0xf8] sm:$0xff]
        %v3505 = vld [vmem:[%s7 + $0x100] sm:$0xff]
        %v3506 = vld [vmem:[%s7 + $0x108] sm:$0xff]
        %v3507 = vld [vmem:[%s7 + $0x110] sm:$0xff]
        %v3508 = vld [vmem:[%s7 + $0x118] sm:$0xff]
        %v3509 = vld [vmem:[%s7 + $0x120] sm:$0xff]
        %v3510 = vld [vmem:[%s7 + $0x128] sm:$0xff]
        %v3511 = vld [vmem:[%s7 + $0x130] sm:$0xff]
        %v3512 = vld [vmem:[%s7 + $0x138] sm:$0xff]
        %v3513 = vld [vmem:[%s7 + $0x140] sm:$0xff]
        %v3514 = vld [vmem:[%s7 + $0x148] sm:$0xff]
        %v3515 = vld [vmem:[%s7 + $0x150] sm:$0xff]
        %v3516 = vld [vmem:[%s7 + $0x158] sm:$0xff]
        %v3517 = vld [vmem:[%s7 + $0x160] sm:$0xff]
        %v3518 = vld [vmem:[%s7 + $0x168] sm:$0xff]
        %v3519 = vld [vmem:[%s7 + $0x170] sm:$0xff]
        %v3520 = vld [vmem:[%s7 + $0x178] sm:$0xff]
        %v3524 = vrot.slane %v3388, 6
        %v3525 = vrot.slane %v3396, 6
        %v3526 = vrot.slane %v3404, 6
        %v3530 = vrot.slane %v3389, 4
        %v3531 = vrot.slane %v3397, 4
        %v3532 = vrot.slane %v3405, 4
        %v3536 = vrot.slane %v3390, 2
        %v3537 = vrot.slane %v3398, 2
        %v3538 = vrot.slane %v3406, 2
        %v3541 = vsel %vm2405, %v3387, %v3524
        %v3544 = vsel %vm2405, %v3395, %v3525
        %v3547 = vsel %vm2405, %v3403, %v3526
        %v3549 = vsel %vm2415, %v3541, %v3530
        %v3551 = vsel %vm2415, %v3544, %v3531
        %v3553 = vsel %vm2415, %v3547, %v3532
        %v3555 = vsel %vm2422, %v3549, %v3536
        %v3558 = vsel %vm2422, %v3551, %v3537
        %v3561 = vsel %vm2422, %v3553, %v3538
        %s3563 = scalar_lea.vmem %s7, 384
        %v3564 = vld [vmem:[%s3563] sm:$0xff]
        %v3565 = vld [vmem:[%s3563 + $0x8] sm:$0xff]
        %v3566 = vld [vmem:[%s3563 + $0x10] sm:$0xff]
        %v3567 = vld [vmem:[%s3563 + $0x18] sm:$0xff]
        %v3568 = vld [vmem:[%s3563 + $0x20] sm:$0xff]
        %v3569 = vld [vmem:[%s3563 + $0x28] sm:$0xff]
        %v3570 = vld [vmem:[%s3563 + $0x30] sm:$0xff]
        %v3571 = vld [vmem:[%s3563 + $0x38] sm:$0xff]
        %v3572 = vld [vmem:[%s3563 + $0x40] sm:$0xff]
        %v3573 = vld [vmem:[%s3563 + $0x48] sm:$0xff]
        %v3574 = vld [vmem:[%s3563 + $0x50] sm:$0xff]
        %v3575 = vld [vmem:[%s3563 + $0x58] sm:$0xff]
        %v3576 = vld [vmem:[%s3563 + $0x60] sm:$0xff]
        %v3577 = vld [vmem:[%s3563 + $0x68] sm:$0xff]
        %v3578 = vld [vmem:[%s3563 + $0x70] sm:$0xff]
        %v3579 = vld [vmem:[%s3563 + $0x78] sm:$0xff]
        %v3580 = vld [vmem:[%s3563 + $0x80] sm:$0xff]
        %v3581 = vld [vmem:[%s3563 + $0x88] sm:$0xff]
        %v3582 = vld [vmem:[%s3563 + $0x90] sm:$0xff]
        %v3583 = vld [vmem:[%s3563 + $0x98] sm:$0xff]
        %v3584 = vld [vmem:[%s3563 + $0xa0] sm:$0xff]
        %v3585 = vld [vmem:[%s3563 + $0xa8] sm:$0xff]
        %v3586 = vld [vmem:[%s3563 + $0xb0] sm:$0xff]
        %v3587 = vld [vmem:[%s3563 + $0xb8] sm:$0xff]
        %v3588 = vld [vmem:[%s3563 + $0xc0] sm:$0xff]
        %v3589 = vld [vmem:[%s3563 + $0xc8] sm:$0xff]
        %v3590 = vld [vmem:[%s3563 + $0xd0] sm:$0xff]
        %v3591 = vld [vmem:[%s3563 + $0xd8] sm:$0xff]
        %v3592 = vld [vmem:[%s3563 + $0xe0] sm:$0xff]
        %v3593 = vld [vmem:[%s3563 + $0xe8] sm:$0xff]
        %v3594 = vld [vmem:[%s3563 + $0xf0] sm:$0xff]
        %v3595 = vld [vmem:[%s3563 + $0xf8] sm:$0xff]
        %v3596 = vld [vmem:[%s3563 + $0x100] sm:$0xff]
        %v3597 = vld [vmem:[%s3563 + $0x108] sm:$0xff]
        %v3598 = vld [vmem:[%s3563 + $0x110] sm:$0xff]
        %v3599 = vld [vmem:[%s3563 + $0x118] sm:$0xff]
        %v3600 = vld [vmem:[%s3563 + $0x120] sm:$0xff]
        %v3601 = vld [vmem:[%s3563 + $0x128] sm:$0xff]
        %v3602 = vld [vmem:[%s3563 + $0x130] sm:$0xff]
        %v3603 = vld [vmem:[%s3563 + $0x138] sm:$0xff]
        %v3604 = vld [vmem:[%s3563 + $0x140] sm:$0xff]
        %v3605 = vld [vmem:[%s3563 + $0x148] sm:$0xff]
        %v3606 = vld [vmem:[%s3563 + $0x150] sm:$0xff]
        %v3607 = vld [vmem:[%s3563 + $0x158] sm:$0xff]
        %v3608 = vld [vmem:[%s3563 + $0x160] sm:$0xff]
        %v3609 = vld [vmem:[%s3563 + $0x168] sm:$0xff]
        %v3610 = vld [vmem:[%s3563 + $0x170] sm:$0xff]
        %v3611 = vld [vmem:[%s3563 + $0x178] sm:$0xff]
        %v3660 = vunpack.c.l.b16 %v3564
        %v3661 = vunpack.c.h.b16 %v3564
        %v3662 = vunpack.c.l.b16 %v3565
        %v3663 = vunpack.c.h.b16 %v3565
        %v3664 = vunpack.c.l.b16 %v3566
        %v3665 = vunpack.c.h.b16 %v3566
        %v3666 = vunpack.c.l.b16 %v3567
        %v3667 = vunpack.c.h.b16 %v3567
        %v3668 = vunpack.c.l.b16 %v3568
        %v3669 = vunpack.c.h.b16 %v3568
        %v3670 = vunpack.c.l.b16 %v3569
        %v3671 = vunpack.c.h.b16 %v3569
        %v3672 = vunpack.c.l.b16 %v3570
        %v3673 = vunpack.c.h.b16 %v3570
        %v3674 = vunpack.c.l.b16 %v3571
        %v3675 = vunpack.c.h.b16 %v3571
        %v3676 = vunpack.c.l.b16 %v3572
        %v3677 = vunpack.c.h.b16 %v3572
        %v3678 = vunpack.c.l.b16 %v3573
        %v3679 = vunpack.c.h.b16 %v3573
        %v3680 = vunpack.c.l.b16 %v3574
        %v3681 = vunpack.c.h.b16 %v3574
        %v3682 = vunpack.c.l.b16 %v3575
        %v3683 = vunpack.c.h.b16 %v3575
        %v3684 = vunpack.c.l.b16 %v3576
        %v3685 = vunpack.c.h.b16 %v3576
        %v3686 = vunpack.c.l.b16 %v3577
        %v3687 = vunpack.c.h.b16 %v3577
        %v3688 = vunpack.c.l.b16 %v3578
        %v3689 = vunpack.c.h.b16 %v3578
        %v3690 = vunpack.c.l.b16 %v3579
        %v3691 = vunpack.c.h.b16 %v3579
        %v3692 = vunpack.c.l.b16 %v3580
        %v3693 = vunpack.c.h.b16 %v3580
        %v3694 = vunpack.c.l.b16 %v3581
        %v3695 = vunpack.c.h.b16 %v3581
        %v3696 = vunpack.c.l.b16 %v3582
        %v3697 = vunpack.c.h.b16 %v3582
        %v3698 = vunpack.c.l.b16 %v3583
        %v3699 = vunpack.c.h.b16 %v3583
        %v3700 = vunpack.c.l.b16 %v3584
        %v3701 = vunpack.c.h.b16 %v3584
        %v3702 = vunpack.c.l.b16 %v3585
        %v3703 = vunpack.c.h.b16 %v3585
        %v3704 = vunpack.c.l.b16 %v3586
        %v3705 = vunpack.c.h.b16 %v3586
        %v3706 = vunpack.c.l.b16 %v3587
        %v3707 = vunpack.c.h.b16 %v3587
        %v3708 = vunpack.c.l.b16 %v3588
        %v3709 = vunpack.c.h.b16 %v3588
        %v3710 = vunpack.c.l.b16 %v3589
        %v3711 = vunpack.c.h.b16 %v3589
        %v3712 = vunpack.c.l.b16 %v3590
        %v3713 = vunpack.c.h.b16 %v3590
        %v3714 = vunpack.c.l.b16 %v3591
        %v3715 = vunpack.c.h.b16 %v3591
        %v3716 = vunpack.c.l.b16 %v3592
        %v3717 = vunpack.c.h.b16 %v3592
        %v3718 = vunpack.c.l.b16 %v3593
        %v3719 = vunpack.c.h.b16 %v3593
        %v3720 = vunpack.c.l.b16 %v3594
        %v3721 = vunpack.c.h.b16 %v3594
        %v3722 = vunpack.c.l.b16 %v3595
        %v3723 = vunpack.c.h.b16 %v3595
        %v3724 = vunpack.c.l.b16 %v3596
        %v3725 = vunpack.c.h.b16 %v3596
        %v3726 = vunpack.c.l.b16 %v3597
        %v3727 = vunpack.c.h.b16 %v3597
        %v3728 = vunpack.c.l.b16 %v3598
        %v3729 = vunpack.c.h.b16 %v3598
        %v3730 = vunpack.c.l.b16 %v3599
        %v3731 = vunpack.c.h.b16 %v3599
        %v3732 = vunpack.c.l.b16 %v3600
        %v3733 = vunpack.c.h.b16 %v3600
        %v3734 = vunpack.c.l.b16 %v3601
        %v3735 = vunpack.c.h.b16 %v3601
        %v3736 = vunpack.c.l.b16 %v3602
        %v3737 = vunpack.c.h.b16 %v3602
        %v3738 = vunpack.c.l.b16 %v3603
        %v3739 = vunpack.c.h.b16 %v3603
        %v3740 = vunpack.c.l.b16 %v3604
        %v3741 = vunpack.c.h.b16 %v3604
        %v3742 = vunpack.c.l.b16 %v3605
        %v3743 = vunpack.c.h.b16 %v3605
        %v3744 = vunpack.c.l.b16 %v3606
        %v3745 = vunpack.c.h.b16 %v3606
        %v3746 = vunpack.c.l.b16 %v3607
        %v3747 = vunpack.c.h.b16 %v3607
        %v3748 = vunpack.c.l.b16 %v3608
        %v3749 = vunpack.c.h.b16 %v3608
        %v3750 = vunpack.c.l.b16 %v3609
        %v3751 = vunpack.c.h.b16 %v3609
        %v3752 = vunpack.c.l.b16 %v3610
        %v3753 = vunpack.c.h.b16 %v3610
        %v3754 = vunpack.c.l.b16 %v3611
        %v3755 = vunpack.c.h.b16 %v3611
        %v3756 = vpack.c.b16 %v3662, %v3660
        %v3757 = vpack.c.b16 %v3663, %v3661
        %v3758 = vpack.c.b16 %v3666, %v3664
        %v3759 = vpack.c.b16 %v3667, %v3665
        %v3760 = vpack.c.b16 %v3670, %v3668
        %v3761 = vpack.c.b16 %v3671, %v3669
        %v3762 = vpack.c.b16 %v3674, %v3672
        %v3763 = vpack.c.b16 %v3675, %v3673
        %v3764 = vpack.c.b16 %v3678, %v3676
        %v3765 = vpack.c.b16 %v3679, %v3677
        %v3766 = vpack.c.b16 %v3682, %v3680
        %v3767 = vpack.c.b16 %v3683, %v3681
        %v3768 = vpack.c.b16 %v3686, %v3684
        %v3769 = vpack.c.b16 %v3687, %v3685
        %v3770 = vpack.c.b16 %v3690, %v3688
        %v3771 = vpack.c.b16 %v3691, %v3689
        %v3772 = vpack.c.b16 %v3694, %v3692
        %v3773 = vpack.c.b16 %v3695, %v3693
        %v3774 = vpack.c.b16 %v3698, %v3696
        %v3775 = vpack.c.b16 %v3699, %v3697
        %v3776 = vpack.c.b16 %v3702, %v3700
        %v3777 = vpack.c.b16 %v3703, %v3701
        %v3778 = vpack.c.b16 %v3706, %v3704
        %v3779 = vpack.c.b16 %v3707, %v3705
        %v3780 = vpack.c.b16 %v3710, %v3708
        %v3781 = vpack.c.b16 %v3711, %v3709
        %v3782 = vpack.c.b16 %v3714, %v3712
        %v3783 = vpack.c.b16 %v3715, %v3713
        %v3784 = vpack.c.b16 %v3718, %v3716
        %v3785 = vpack.c.b16 %v3719, %v3717
        %v3786 = vpack.c.b16 %v3722, %v3720
        %v3787 = vpack.c.b16 %v3723, %v3721
        %v3788 = vpack.c.b16 %v3726, %v3724
        %v3789 = vpack.c.b16 %v3727, %v3725
        %v3790 = vpack.c.b16 %v3730, %v3728
        %v3791 = vpack.c.b16 %v3731, %v3729
        %v3792 = vpack.c.b16 %v3734, %v3732
        %v3793 = vpack.c.b16 %v3735, %v3733
        %v3794 = vpack.c.b16 %v3738, %v3736
        %v3795 = vpack.c.b16 %v3739, %v3737
        %v3796 = vpack.c.b16 %v3742, %v3740
        %v3797 = vpack.c.b16 %v3743, %v3741
        %v3798 = vpack.c.b16 %v3746, %v3744
        %v3799 = vpack.c.b16 %v3747, %v3745
        %v3800 = vpack.c.b16 %v3750, %v3748
        %v3801 = vpack.c.b16 %v3751, %v3749
        %v3802 = vpack.c.b16 %v3754, %v3752
        %v3803 = vpack.c.b16 %v3755, %v3753
        %3852 = vmatprep.subr.bf16.mxu0 %v3757
        %3853 = vmatpush1.bf16.msra.mxu0 %v3756
        %3854 = vmatprep.subr.bf16.mxu0 %v3759
        %3855 = vmatpush1.bf16.msra.mxu0 %v3758
        %3856 = vmatprep.subr.bf16.mxu0 %v3761
        %3857 = vmatpush1.bf16.msra.mxu0 %v3760
        %3858 = vmatprep.subr.bf16.mxu0 %v3763
        %3859 = vmatpush1.bf16.msra.mxu0 %v3762
        %3860 = vmatprep.subr.bf16.mxu0 %v3765
        %3861 = vmatpush1.bf16.msra.mxu0 %v3764
        %3862 = vmatprep.subr.bf16.mxu0 %v3767
        %3863 = vmatpush1.bf16.msra.mxu0 %v3766
        %3864 = vmatprep.subr.bf16.mxu0 %v3769
        %3865 = vmatpush1.bf16.msra.mxu0 %v3768
        %3866 = vmatprep.subr.bf16.mxu0 %v3771
        %3867 = vmatpush1.bf16.msra.mxu0 %v3770
        %3868 = vmatprep.subr.bf16.mxu0 %v3773
        %3869 = vmatpush1.bf16.msra.mxu0 %v3772
        %3870 = vmatprep.subr.bf16.mxu0 %v3775
        %3871 = vmatpush1.bf16.msra.mxu0 %v3774
        %3872 = vmatprep.subr.bf16.mxu0 %v3777
        %3873 = vmatpush1.bf16.msra.mxu0 %v3776
        %3874 = vmatprep.subr.bf16.mxu0 %v3779
        %3875 = vmatpush1.bf16.msra.mxu0 %v3778
        %3876 = vmatprep.subr.bf16.mxu0 %v3781
        %3877 = vmatpush1.bf16.msra.mxu0 %v3780
        %3878 = vmatprep.subr.bf16.mxu0 %v3783
        %3879 = vmatpush1.bf16.msra.mxu0 %v3782
        %3880 = vmatprep.subr.bf16.mxu0 %v3785
        %3881 = vmatpush1.bf16.msra.mxu0 %v3784
        %3882 = vmatprep.subr.bf16.mxu0 %v3787
        %3883 = vmatpush1.bf16.msra.mxu0 %v3786
        %3884 = vmatprep.mubr.bf16.mxu0 %v3558
        %3885 = vmatmul.mubr.bf16.gmra.mrb[0].mxu0 %v3555
        %v3886 = vpop.f32.mrb[0].mxu0
        %v3887 = vadd.f32 0.0, %v3886
        %v3888 = vpop.f32.mrb[0].mxu0
        %v3889 = vadd.f32 0.0, %v3888
        %v3890 = vpop.f32.mrb[0].mxu0
        %v3891 = vadd.f32 0.0, %v3890
        %v3892 = vpop.f32.mrb[0].mxu0
        %v3893 = vadd.f32 0.0, %v3892
        %3894 = vdwg.mxu0
        %3895 = vmatprep.subr.bf16.mxu0 %v3789
        %3896 = vmatpush1.bf16.msra.mxu0 %v3788
        %3897 = vmatprep.subr.bf16.mxu0 %v3791
        %3898 = vmatpush1.bf16.msra.mxu0 %v3790
        %3899 = vmatprep.subr.bf16.mxu0 %v3793
        %3900 = vmatpush1.bf16.msra.mxu0 %v3792
        %3901 = vmatprep.subr.bf16.mxu0 %v3795
        %3902 = vmatpush1.bf16.msra.mxu0 %v3794
        %3903 = vmatprep.subr.bf16.mxu0 %v3797
        %3904 = vmatpush1.bf16.msra.mxu0 %v3796
        %3905 = vmatprep.subr.bf16.mxu0 %v3799
        %3906 = vmatpush1.bf16.msra.mxu0 %v3798
        %3907 = vmatprep.subr.bf16.mxu0 %v3801
        %3908 = vmatpush1.bf16.msra.mxu0 %v3800
        %3909 = vmatprep.subr.bf16.mxu0 %v3803
        %3910 = vmatpush1.bf16.msra.mxu0 %v3802
        %3911 = vmatprep.subr.bf16.mxu0 0
        %3912 = vmatpush1.bf16.msra.mxu0 0
        %3913 = vmatprep.subr.bf16.mxu0 0
        %3914 = vmatpush1.bf16.msra.mxu0 0
        %3915 = vmatprep.subr.bf16.mxu0 0
        %3916 = vmatpush1.bf16.msra.mxu0 0
        %3917 = vmatprep.subr.bf16.mxu0 0
        %3918 = vmatpush1.bf16.msra.mxu0 0
        %3919 = vmatprep.subr.bf16.mxu0 0
        %3920 = vmatpush1.bf16.msra.mxu0 0
        %3921 = vmatprep.subr.bf16.mxu0 0
        %3922 = vmatpush1.bf16.msra.mxu0 0
        %3923 = vmatprep.subr.bf16.mxu0 0
        %3924 = vmatpush1.bf16.msra.mxu0 0
        %3925 = vmatprep.subr.bf16.mxu0 0
        %3926 = vmatpush1.bf16.msra.mxu0 0
        %3927 = vmatprep.mubr.bf16.mxu0 0
        %3928 = vmatmul.mubr.bf16.gmra.mrb[0].mxu0 %v3561
        %v3929 = vpop.f32.mrb[0].mxu0
        %v3930 = vadd.f32 %v3887, %v3929
        %v3931 = vpop.f32.mrb[0].mxu0
        %v3932 = vadd.f32 %v3889, %v3931
        %v3933 = vpop.f32.mrb[0].mxu0
        %v3934 = vadd.f32 %v3891, %v3933
        %v3935 = vpop.f32.mrb[0].mxu0
        %v3936 = vadd.f32 %v3893, %v3935
        %3937 = vdwg.mxu0
        %v3986 = vunpack.c.l.b16 %v3473
        %v3987 = vunpack.c.h.b16 %v3473
        %v3988 = vunpack.c.l.b16 %v3474
        %v3989 = vunpack.c.h.b16 %v3474
        %v3990 = vunpack.c.l.b16 %v3475
        %v3991 = vunpack.c.h.b16 %v3475
        %v3992 = vunpack.c.l.b16 %v3476
        %v3993 = vunpack.c.h.b16 %v3476
        %v3994 = vunpack.c.l.b16 %v3477
        %v3995 = vunpack.c.h.b16 %v3477
        %v3996 = vunpack.c.l.b16 %v3478
        %v3997 = vunpack.c.h.b16 %v3478
        %v3998 = vunpack.c.l.b16 %v3479
        %v3999 = vunpack.c.h.b16 %v3479
        %v4000 = vunpack.c.l.b16 %v3480
        %v4001 = vunpack.c.h.b16 %v3480
        %v4002 = vunpack.c.l.b16 %v3481
        %v4003 = vunpack.c.h.b16 %v3481
        %v4004 = vunpack.c.l.b16 %v3482
        %v4005 = vunpack.c.h.b16 %v3482
        %v4006 = vunpack.c.l.b16 %v3483
        %v4007 = vunpack.c.h.b16 %v3483
        %v4008 = vunpack.c.l.b16 %v3484
        %v4009 = vunpack.c.h.b16 %v3484
        %v4010 = vunpack.c.l.b16 %v3485
        %v4011 = vunpack.c.h.b16 %v3485
        %v4012 = vunpack.c.l.b16 %v3486
        %v4013 = vunpack.c.h.b16 %v3486
        %v4014 = vunpack.c.l.b16 %v3487
        %v4015 = vunpack.c.h.b16 %v3487
        %v4016 = vunpack.c.l.b16 %v3488
        %v4017 = vunpack.c.h.b16 %v3488
        %v4018 = vunpack.c.l.b16 %v3489
        %v4019 = vunpack.c.h.b16 %v3489
        %v4020 = vunpack.c.l.b16 %v3490
        %v4021 = vunpack.c.h.b16 %v3490
        %v4022 = vunpack.c.l.b16 %v3491
        %v4023 = vunpack.c.h.b16 %v3491
        %v4024 = vunpack.c.l.b16 %v3492
        %v4025 = vunpack.c.h.b16 %v3492
        %v4026 = vunpack.c.l.b16 %v3493
        %v4027 = vunpack.c.h.b16 %v3493
        %v4028 = vunpack.c.l.b16 %v3494
        %v4029 = vunpack.c.h.b16 %v3494
        %v4030 = vunpack.c.l.b16 %v3495
        %v4031 = vunpack.c.h.b16 %v3495
        %v4032 = vunpack.c.l.b16 %v3496
        %v4033 = vunpack.c.h.b16 %v3496
        %v4034 = vunpack.c.l.b16 %v3497
        %v4035 = vunpack.c.h.b16 %v3497
        %v4036 = vunpack.c.l.b16 %v3498
        %v4037 = vunpack.c.h.b16 %v3498
        %v4038 = vunpack.c.l.b16 %v3499
        %v4039 = vunpack.c.h.b16 %v3499
        %v4040 = vunpack.c.l.b16 %v3500
        %v4041 = vunpack.c.h.b16 %v3500
        %v4042 = vunpack.c.l.b16 %v3501
        %v4043 = vunpack.c.h.b16 %v3501
        %v4044 = vunpack.c.l.b16 %v3502
        %v4045 = vunpack.c.h.b16 %v3502
        %v4046 = vunpack.c.l.b16 %v3503
        %v4047 = vunpack.c.h.b16 %v3503
        %v4048 = vunpack.c.l.b16 %v3504
        %v4049 = vunpack.c.h.b16 %v3504
        %v4050 = vunpack.c.l.b16 %v3505
        %v4051 = vunpack.c.h.b16 %v3505
        %v4052 = vunpack.c.l.b16 %v3506
        %v4053 = vunpack.c.h.b16 %v3506
        %v4054 = vunpack.c.l.b16 %v3507
        %v4055 = vunpack.c.h.b16 %v3507
        %v4056 = vunpack.c.l.b16 %v3508
        %v4057 = vunpack.c.h.b16 %v3508
        %v4058 = vunpack.c.l.b16 %v3509
        %v4059 = vunpack.c.h.b16 %v3509
        %v4060 = vunpack.c.l.b16 %v3510
        %v4061 = vunpack.c.h.b16 %v3510
        %v4062 = vunpack.c.l.b16 %v3511
        %v4063 = vunpack.c.h.b16 %v3511
        %v4064 = vunpack.c.l.b16 %v3512
        %v4065 = vunpack.c.h.b16 %v3512
        %v4066 = vunpack.c.l.b16 %v3513
        %v4067 = vunpack.c.h.b16 %v3513
        %v4068 = vunpack.c.l.b16 %v3514
        %v4069 = vunpack.c.h.b16 %v3514
        %v4070 = vunpack.c.l.b16 %v3515
        %v4071 = vunpack.c.h.b16 %v3515
        %v4072 = vunpack.c.l.b16 %v3516
        %v4073 = vunpack.c.h.b16 %v3516
        %v4074 = vunpack.c.l.b16 %v3517
        %v4075 = vunpack.c.h.b16 %v3517
        %v4076 = vunpack.c.l.b16 %v3518
        %v4077 = vunpack.c.h.b16 %v3518
        %v4078 = vunpack.c.l.b16 %v3519
        %v4079 = vunpack.c.h.b16 %v3519
        %v4080 = vunpack.c.l.b16 %v3520
        %v4081 = vunpack.c.h.b16 %v3520
        %v4082 = vpack.c.b16 %v3988, %v3986
        %v4083 = vpack.c.b16 %v3989, %v3987
        %v4084 = vpack.c.b16 %v3992, %v3990
        %v4085 = vpack.c.b16 %v3993, %v3991
        %v4086 = vpack.c.b16 %v3996, %v3994
        %v4087 = vpack.c.b16 %v3997, %v3995
        %v4088 = vpack.c.b16 %v4000, %v3998
        %v4089 = vpack.c.b16 %v4001, %v3999
        %v4090 = vpack.c.b16 %v4004, %v4002
        %v4091 = vpack.c.b16 %v4005, %v4003
        %v4092 = vpack.c.b16 %v4008, %v4006
        %v4093 = vpack.c.b16 %v4009, %v4007
        %v4094 = vpack.c.b16 %v4012, %v4010
        %v4095 = vpack.c.b16 %v4013, %v4011
        %v4096 = vpack.c.b16 %v4016, %v4014
        %v4097 = vpack.c.b16 %v4017, %v4015
        %v4098 = vpack.c.b16 %v4020, %v4018
        %v4099 = vpack.c.b16 %v4021, %v4019
        %v4100 = vpack.c.b16 %v4024, %v4022
        %v4101 = vpack.c.b16 %v4025, %v4023
        %v4102 = vpack.c.b16 %v4028, %v4026
        %v4103 = vpack.c.b16 %v4029, %v4027
        %v4104 = vpack.c.b16 %v4032, %v4030
        %v4105 = vpack.c.b16 %v4033, %v4031
        %v4106 = vpack.c.b16 %v4036, %v4034
        %v4107 = vpack.c.b16 %v4037, %v4035
        %v4108 = vpack.c.b16 %v4040, %v4038
        %v4109 = vpack.c.b16 %v4041, %v4039
        %v4110 = vpack.c.b16 %v4044, %v4042
        %v4111 = vpack.c.b16 %v4045, %v4043
        %v4112 = vpack.c.b16 %v4048, %v4046
        %v4113 = vpack.c.b16 %v4049, %v4047
        %v4114 = vpack.c.b16 %v4052, %v4050
        %v4115 = vpack.c.b16 %v4053, %v4051
        %v4116 = vpack.c.b16 %v4056, %v4054
        %v4117 = vpack.c.b16 %v4057, %v4055
        %v4118 = vpack.c.b16 %v4060, %v4058
        %v4119 = vpack.c.b16 %v4061, %v4059
        %v4120 = vpack.c.b16 %v4064, %v4062
        %v4121 = vpack.c.b16 %v4065, %v4063
        %v4122 = vpack.c.b16 %v4068, %v4066
        %v4123 = vpack.c.b16 %v4069, %v4067
        %v4124 = vpack.c.b16 %v4072, %v4070
        %v4125 = vpack.c.b16 %v4073, %v4071
        %v4126 = vpack.c.b16 %v4076, %v4074
        %v4127 = vpack.c.b16 %v4077, %v4075
        %v4128 = vpack.c.b16 %v4080, %v4078
        %v4129 = vpack.c.b16 %v4081, %v4079
        %4178 = vmatprep.subr.bf16.mxu0 %v4083
        %4179 = vmatpush1.bf16.msra.mxu0 %v4082
        %4180 = vmatprep.subr.bf16.mxu0 %v4085
        %4181 = vmatpush1.bf16.msra.mxu0 %v4084
        %4182 = vmatprep.subr.bf16.mxu0 %v4087
        %4183 = vmatpush1.bf16.msra.mxu0 %v4086
        %4184 = vmatprep.subr.bf16.mxu0 %v4089
        %4185 = vmatpush1.bf16.msra.mxu0 %v4088
        %4186 = vmatprep.subr.bf16.mxu0 %v4091
        %4187 = vmatpush1.bf16.msra.mxu0 %v4090
        %4188 = vmatprep.subr.bf16.mxu0 %v4093
        %4189 = vmatpush1.bf16.msra.mxu0 %v4092
        %4190 = vmatprep.subr.bf16.mxu0 %v4095
        %4191 = vmatpush1.bf16.msra.mxu0 %v4094
        %4192 = vmatprep.subr.bf16.mxu0 %v4097
        %4193 = vmatpush1.bf16.msra.mxu0 %v4096
        %4194 = vmatprep.subr.bf16.mxu0 %v4099
        %4195 = vmatpush1.bf16.msra.mxu0 %v4098
        %4196 = vmatprep.subr.bf16.mxu0 %v4101
        %4197 = vmatpush1.bf16.msra.mxu0 %v4100
        %4198 = vmatprep.subr.bf16.mxu0 %v4103
        %4199 = vmatpush1.bf16.msra.mxu0 %v4102
        %4200 = vmatprep.subr.bf16.mxu0 %v4105
        %4201 = vmatpush1.bf16.msra.mxu0 %v4104
        %4202 = vmatprep.subr.bf16.mxu0 %v4107
        %4203 = vmatpush1.bf16.msra.mxu0 %v4106
        %4204 = vmatprep.subr.bf16.mxu0 %v4109
        %4205 = vmatpush1.bf16.msra.mxu0 %v4108
        %4206 = vmatprep.subr.bf16.mxu0 %v4111
        %4207 = vmatpush1.bf16.msra.mxu0 %v4110
        %4208 = vmatprep.subr.bf16.mxu0 %v4113
        %4209 = vmatpush1.bf16.msra.mxu0 %v4112
        %4210 = vmatprep.mubr.bf16.mxu0 %v3468
        %4211 = vmatmul.mubr.bf16.gmra.mrb[0].mxu0 %v3465
        %v4212 = vpop.f32.mrb[0].mxu0
        %v4213 = vadd.f32 %v3930, %v4212
        %v4214 = vpop.f32.mrb[0].mxu0
        %v4215 = vadd.f32 %v3932, %v4214
        %v4216 = vpop.f32.mrb[0].mxu0
        %v4217 = vadd.f32 %v3934, %v4216
        %v4218 = vpop.f32.mrb[0].mxu0
        %v4219 = vadd.f32 %v3936, %v4218
        %4220 = vdwg.mxu0
        %4221 = vmatprep.subr.bf16.mxu0 %v4115
        %4222 = vmatpush1.bf16.msra.mxu0 %v4114
        %4223 = vmatprep.subr.bf16.mxu0 %v4117
        %4224 = vmatpush1.bf16.msra.mxu0 %v4116
        %4225 = vmatprep.subr.bf16.mxu0 %v4119
        %4226 = vmatpush1.bf16.msra.mxu0 %v4118
        %4227 = vmatprep.subr.bf16.mxu0 %v4121
        %4228 = vmatpush1.bf16.msra.mxu0 %v4120
        %4229 = vmatprep.subr.bf16.mxu0 %v4123
        %4230 = vmatpush1.bf16.msra.mxu0 %v4122
        %4231 = vmatprep.subr.bf16.mxu0 %v4125
        %4232 = vmatpush1.bf16.msra.mxu0 %v4124
        %4233 = vmatprep.subr.bf16.mxu0 %v4127
        %4234 = vmatpush1.bf16.msra.mxu0 %v4126
        %4235 = vmatprep.subr.bf16.mxu0 %v4129
        %4236 = vmatpush1.bf16.msra.mxu0 %v4128
        %4237 = vmatprep.subr.bf16.mxu0 0
        %4238 = vmatpush1.bf16.msra.mxu0 0
        %4239 = vmatprep.subr.bf16.mxu0 0
        %4240 = vmatpush1.bf16.msra.mxu0 0
        %4241 = vmatprep.subr.bf16.mxu0 0
        %4242 = vmatpush1.bf16.msra.mxu0 0
        %4243 = vmatprep.subr.bf16.mxu0 0
        %4244 = vmatpush1.bf16.msra.mxu0 0
        %4245 = vmatprep.subr.bf16.mxu0 0
        %4246 = vmatpush1.bf16.msra.mxu0 0
        %4247 = vmatprep.subr.bf16.mxu0 0
        %4248 = vmatpush1.bf16.msra.mxu0 0
        %4249 = vmatprep.subr.bf16.mxu0 0
        %4250 = vmatpush1.bf16.msra.mxu0 0
        %4251 = vmatprep.subr.bf16.mxu0 0
        %4252 = vmatpush1.bf16.msra.mxu0 0
        %4253 = vmatprep.mubr.bf16.mxu0 0
        %4254 = vmatmul.mubr.bf16.gmra.mrb[0].mxu0 %v3471
        %v4255 = vpop.f32.mrb[0].mxu0
        %v4256 = vadd.f32 %v4213, %v4255
        %v4257 = vpop.f32.mrb[0].mxu0
        %v4258 = vadd.f32 %v4215, %v4257
        %v4259 = vpop.f32.mrb[0].mxu0
        %v4260 = vadd.f32 %v4217, %v4259
        %v4261 = vpop.f32.mrb[0].mxu0
        %v4262 = vadd.f32 %v4219, %v4261
        %4263 = vdwg.mxu0
        %v4267 = vrot.slane %v3412, 6
        %v4268 = vrot.slane %v3420, 6
        %v4269 = vrot.slane %v3428, 6
        %v4273 = vrot.slane %v3413, 4
        %v4274 = vrot.slane %v3421, 4
        %v4275 = vrot.slane %v3429, 4
        %v4279 = vrot.slane %v3414, 2
        %v4280 = vrot.slane %v3422, 2
        %v4281 = vrot.slane %v3430, 2
        %v4284 = vsel %vm2405, %v3411, %v4267
        %v4287 = vsel %vm2405, %v3419, %v4268
        %v4290 = vsel %vm2405, %v3427, %v4269
        %v4292 = vsel %vm2415, %v4284, %v4273
        %v4294 = vsel %vm2415, %v4287, %v4274
        %v4296 = vsel %vm2415, %v4290, %v4275
        %v4298 = vsel %vm2422, %v4292, %v4279
        %v4301 = vsel %vm2422, %v4294, %v4280
        %v4304 = vsel %vm2422, %v4296, %v4281
        %s4306 = scalar_lea.vmem %s7, 768
        %v4307 = vld [vmem:[%s4306] sm:$0xff]
        %v4308 = vld [vmem:[%s4306 + $0x8] sm:$0xff]
        %v4309 = vld [vmem:[%s4306 + $0x10] sm:$0xff]
        %v4310 = vld [vmem:[%s4306 + $0x18] sm:$0xff]
        %v4311 = vld [vmem:[%s4306 + $0x20] sm:$0xff]
        %v4312 = vld [vmem:[%s4306 + $0x28] sm:$0xff]
        %v4313 = vld [vmem:[%s4306 + $0x30] sm:$0xff]
        %v4314 = vld [vmem:[%s4306 + $0x38] sm:$0xff]
        %v4315 = vld [vmem:[%s4306 + $0x40] sm:$0xff]
        %v4316 = vld [vmem:[%s4306 + $0x48] sm:$0xff]
        %v4317 = vld [vmem:[%s4306 + $0x50] sm:$0xff]
        %v4318 = vld [vmem:[%s4306 + $0x58] sm:$0xff]
        %v4319 = vld [vmem:[%s4306 + $0x60] sm:$0xff]
        %v4320 = vld [vmem:[%s4306 + $0x68] sm:$0xff]
        %v4321 = vld [vmem:[%s4306 + $0x70] sm:$0xff]
        %v4322 = vld [vmem:[%s4306 + $0x78] sm:$0xff]
        %v4323 = vld [vmem:[%s4306 + $0x80] sm:$0xff]
        %v4324 = vld [vmem:[%s4306 + $0x88] sm:$0xff]
        %v4325 = vld [vmem:[%s4306 + $0x90] sm:$0xff]
        %v4326 = vld [vmem:[%s4306 + $0x98] sm:$0xff]
        %v4327 = vld [vmem:[%s4306 + $0xa0] sm:$0xff]
        %v4328 = vld [vmem:[%s4306 + $0xa8] sm:$0xff]
        %v4329 = vld [vmem:[%s4306 + $0xb0] sm:$0xff]
        %v4330 = vld [vmem:[%s4306 + $0xb8] sm:$0xff]
        %v4331 = vld [vmem:[%s4306 + $0xc0] sm:$0xff]
        %v4332 = vld [vmem:[%s4306 + $0xc8] sm:$0xff]
        %v4333 = vld [vmem:[%s4306 + $0xd0] sm:$0xff]
        %v4334 = vld [vmem:[%s4306 + $0xd8] sm:$0xff]
        %v4335 = vld [vmem:[%s4306 + $0xe0] sm:$0xff]
        %v4336 = vld [vmem:[%s4306 + $0xe8] sm:$0xff]
        %v4337 = vld [vmem:[%s4306 + $0xf0] sm:$0xff]
        %v4338 = vld [vmem:[%s4306 + $0xf8] sm:$0xff]
        %v4339 = vld [vmem:[%s4306 + $0x100] sm:$0xff]
        %v4340 = vld [vmem:[%s4306 + $0x108] sm:$0xff]
        %v4341 = vld [vmem:[%s4306 + $0x110] sm:$0xff]
        %v4342 = vld [vmem:[%s4306 + $0x118] sm:$0xff]
        %v4343 = vld [vmem:[%s4306 + $0x120] sm:$0xff]
        %v4344 = vld [vmem:[%s4306 + $0x128] sm:$0xff]
        %v4345 = vld [vmem:[%s4306 + $0x130] sm:$0xff]
        %v4346 = vld [vmem:[%s4306 + $0x138] sm:$0xff]
        %v4347 = vld [vmem:[%s4306 + $0x140] sm:$0xff]
        %v4348 = vld [vmem:[%s4306 + $0x148] sm:$0xff]
        %v4349 = vld [vmem:[%s4306 + $0x150] sm:$0xff]
        %v4350 = vld [vmem:[%s4306 + $0x158] sm:$0xff]
        %v4351 = vld [vmem:[%s4306 + $0x160] sm:$0xff]
        %v4352 = vld [vmem:[%s4306 + $0x168] sm:$0xff]
        %v4353 = vld [vmem:[%s4306 + $0x170] sm:$0xff]
        %v4354 = vld [vmem:[%s4306 + $0x178] sm:$0xff]
        %v4403 = vunpack.c.l.b16 %v4307
        %v4404 = vunpack.c.h.b16 %v4307
        %v4405 = vunpack.c.l.b16 %v4308
        %v4406 = vunpack.c.h.b16 %v4308
        %v4407 = vunpack.c.l.b16 %v4309
        %v4408 = vunpack.c.h.b16 %v4309
        %v4409 = vunpack.c.l.b16 %v4310
        %v4410 = vunpack.c.h.b16 %v4310
        %v4411 = vunpack.c.l.b16 %v4311
        %v4412 = vunpack.c.h.b16 %v4311
        %v4413 = vunpack.c.l.b16 %v4312
        %v4414 = vunpack.c.h.b16 %v4312
        %v4415 = vunpack.c.l.b16 %v4313
        %v4416 = vunpack.c.h.b16 %v4313
        %v4417 = vunpack.c.l.b16 %v4314
        %v4418 = vunpack.c.h.b16 %v4314
        %v4419 = vunpack.c.l.b16 %v4315
        %v4420 = vunpack.c.h.b16 %v4315
        %v4421 = vunpack.c.l.b16 %v4316
        %v4422 = vunpack.c.h.b16 %v4316
        %v4423 = vunpack.c.l.b16 %v4317
        %v4424 = vunpack.c.h.b16 %v4317
        %v4425 = vunpack.c.l.b16 %v4318
        %v4426 = vunpack.c.h.b16 %v4318
        %v4427 = vunpack.c.l.b16 %v4319
        %v4428 = vunpack.c.h.b16 %v4319
        %v4429 = vunpack.c.l.b16 %v4320
        %v4430 = vunpack.c.h.b16 %v4320
        %v4431 = vunpack.c.l.b16 %v4321
        %v4432 = vunpack.c.h.b16 %v4321
        %v4433 = vunpack.c.l.b16 %v4322
        %v4434 = vunpack.c.h.b16 %v4322
        %v4435 = vunpack.c.l.b16 %v4323
        %v4436 = vunpack.c.h.b16 %v4323
        %v4437 = vunpack.c.l.b16 %v4324
        %v4438 = vunpack.c.h.b16 %v4324
        %v4439 = vunpack.c.l.b16 %v4325
        %v4440 = vunpack.c.h.b16 %v4325
        %v4441 = vunpack.c.l.b16 %v4326
        %v4442 = vunpack.c.h.b16 %v4326
        %v4443 = vunpack.c.l.b16 %v4327
        %v4444 = vunpack.c.h.b16 %v4327
        %v4445 = vunpack.c.l.b16 %v4328
        %v4446 = vunpack.c.h.b16 %v4328
        %v4447 = vunpack.c.l.b16 %v4329
        %v4448 = vunpack.c.h.b16 %v4329
        %v4449 = vunpack.c.l.b16 %v4330
        %v4450 = vunpack.c.h.b16 %v4330
        %v4451 = vunpack.c.l.b16 %v4331
        %v4452 = vunpack.c.h.b16 %v4331
        %v4453 = vunpack.c.l.b16 %v4332
        %v4454 = vunpack.c.h.b16 %v4332
        %v4455 = vunpack.c.l.b16 %v4333
        %v4456 = vunpack.c.h.b16 %v4333
        %v4457 = vunpack.c.l.b16 %v4334
        %v4458 = vunpack.c.h.b16 %v4334
        %v4459 = vunpack.c.l.b16 %v4335
        %v4460 = vunpack.c.h.b16 %v4335
        %v4461 = vunpack.c.l.b16 %v4336
        %v4462 = vunpack.c.h.b16 %v4336
        %v4463 = vunpack.c.l.b16 %v4337
        %v4464 = vunpack.c.h.b16 %v4337
        %v4465 = vunpack.c.l.b16 %v4338
        %v4466 = vunpack.c.h.b16 %v4338
        %v4467 = vunpack.c.l.b16 %v4339
        %v4468 = vunpack.c.h.b16 %v4339
        %v4469 = vunpack.c.l.b16 %v4340
        %v4470 = vunpack.c.h.b16 %v4340
        %v4471 = vunpack.c.l.b16 %v4341
        %v4472 = vunpack.c.h.b16 %v4341
        %v4473 = vunpack.c.l.b16 %v4342
        %v4474 = vunpack.c.h.b16 %v4342
        %v4475 = vunpack.c.l.b16 %v4343
        %v4476 = vunpack.c.h.b16 %v4343
        %v4477 = vunpack.c.l.b16 %v4344
        %v4478 = vunpack.c.h.b16 %v4344
        %v4479 = vunpack.c.l.b16 %v4345
        %v4480 = vunpack.c.h.b16 %v4345
        %v4481 = vunpack.c.l.b16 %v4346
        %v4482 = vunpack.c.h.b16 %v4346
        %v4483 = vunpack.c.l.b16 %v4347
        %v4484 = vunpack.c.h.b16 %v4347
        %v4485 = vunpack.c.l.b16 %v4348
        %v4486 = vunpack.c.h.b16 %v4348
        %v4487 = vunpack.c.l.b16 %v4349
        %v4488 = vunpack.c.h.b16 %v4349
        %v4489 = vunpack.c.l.b16 %v4350
        %v4490 = vunpack.c.h.b16 %v4350
        %v4491 = vunpack.c.l.b16 %v4351
        %v4492 = vunpack.c.h.b16 %v4351
        %v4493 = vunpack.c.l.b16 %v4352
        %v4494 = vunpack.c.h.b16 %v4352
        %v4495 = vunpack.c.l.b16 %v4353
        %v4496 = vunpack.c.h.b16 %v4353
        %v4497 = vunpack.c.l.b16 %v4354
        %v4498 = vunpack.c.h.b16 %v4354
        %v4499 = vpack.c.b16 %v4405, %v4403
        %v4500 = vpack.c.b16 %v4406, %v4404
        %v4501 = vpack.c.b16 %v4409, %v4407
        %v4502 = vpack.c.b16 %v4410, %v4408
        %v4503 = vpack.c.b16 %v4413, %v4411
        %v4504 = vpack.c.b16 %v4414, %v4412
        %v4505 = vpack.c.b16 %v4417, %v4415
        %v4506 = vpack.c.b16 %v4418, %v4416
        %v4507 = vpack.c.b16 %v4421, %v4419
        %v4508 = vpack.c.b16 %v4422, %v4420
        %v4509 = vpack.c.b16 %v4425, %v4423
        %v4510 = vpack.c.b16 %v4426, %v4424
        %v4511 = vpack.c.b16 %v4429, %v4427
        %v4512 = vpack.c.b16 %v4430, %v4428
        %v4513 = vpack.c.b16 %v4433, %v4431
        %v4514 = vpack.c.b16 %v4434, %v4432
        %v4515 = vpack.c.b16 %v4437, %v4435
        %v4516 = vpack.c.b16 %v4438, %v4436
        %v4517 = vpack.c.b16 %v4441, %v4439
        %v4518 = vpack.c.b16 %v4442, %v4440
        %v4519 = vpack.c.b16 %v4445, %v4443
        %v4520 = vpack.c.b16 %v4446, %v4444
        %v4521 = vpack.c.b16 %v4449, %v4447
        %v4522 = vpack.c.b16 %v4450, %v4448
        %v4523 = vpack.c.b16 %v4453, %v4451
        %v4524 = vpack.c.b16 %v4454, %v4452
        %v4525 = vpack.c.b16 %v4457, %v4455
        %v4526 = vpack.c.b16 %v4458, %v4456
        %v4527 = vpack.c.b16 %v4461, %v4459
        %v4528 = vpack.c.b16 %v4462, %v4460
        %v4529 = vpack.c.b16 %v4465, %v4463
        %v4530 = vpack.c.b16 %v4466, %v4464
        %v4531 = vpack.c.b16 %v4469, %v4467
        %v4532 = vpack.c.b16 %v4470, %v4468
        %v4533 = vpack.c.b16 %v4473, %v4471
        %v4534 = vpack.c.b16 %v4474, %v4472
        %v4535 = vpack.c.b16 %v4477, %v4475
        %v4536 = vpack.c.b16 %v4478, %v4476
        %v4537 = vpack.c.b16 %v4481, %v4479
        %v4538 = vpack.c.b16 %v4482, %v4480
        %v4539 = vpack.c.b16 %v4485, %v4483
        %v4540 = vpack.c.b16 %v4486, %v4484
        %v4541 = vpack.c.b16 %v4489, %v4487
        %v4542 = vpack.c.b16 %v4490, %v4488
        %v4543 = vpack.c.b16 %v4493, %v4491
        %v4544 = vpack.c.b16 %v4494, %v4492
        %v4545 = vpack.c.b16 %v4497, %v4495
        %v4546 = vpack.c.b16 %v4498, %v4496
        %4595 = vmatprep.subr.bf16.mxu0 %v4500
        %4596 = vmatpush1.bf16.msra.mxu0 %v4499
        %4597 = vmatprep.subr.bf16.mxu0 %v4502
        %4598 = vmatpush1.bf16.msra.mxu0 %v4501
        %4599 = vmatprep.subr.bf16.mxu0 %v4504
        %4600 = vmatpush1.bf16.msra.mxu0 %v4503
        %4601 = vmatprep.subr.bf16.mxu0 %v4506
        %4602 = vmatpush1.bf16.msra.mxu0 %v4505
        %4603 = vmatprep.subr.bf16.mxu0 %v4508
        %4604 = vmatpush1.bf16.msra.mxu0 %v4507
        %4605 = vmatprep.subr.bf16.mxu0 %v4510
        %4606 = vmatpush1.bf16.msra.mxu0 %v4509
        %4607 = vmatprep.subr.bf16.mxu0 %v4512
        %4608 = vmatpush1.bf16.msra.mxu0 %v4511
        %4609 = vmatprep.subr.bf16.mxu0 %v4514
        %4610 = vmatpush1.bf16.msra.mxu0 %v4513
        %4611 = vmatprep.subr.bf16.mxu0 %v4516
        %4612 = vmatpush1.bf16.msra.mxu0 %v4515
        %4613 = vmatprep.subr.bf16.mxu0 %v4518
        %4614 = vmatpush1.bf16.msra.mxu0 %v4517
        %4615 = vmatprep.subr.bf16.mxu0 %v4520
        %4616 = vmatpush1.bf16.msra.mxu0 %v4519
        %4617 = vmatprep.subr.bf16.mxu0 %v4522
        %4618 = vmatpush1.bf16.msra.mxu0 %v4521
        %4619 = vmatprep.subr.bf16.mxu0 %v4524
        %4620 = vmatpush1.bf16.msra.mxu0 %v4523
        %4621 = vmatprep.subr.bf16.mxu0 %v4526
        %4622 = vmatpush1.bf16.msra.mxu0 %v4525
        %4623 = vmatprep.subr.bf16.mxu0 %v4528
        %4624 = vmatpush1.bf16.msra.mxu0 %v4527
        %4625 = vmatprep.subr.bf16.mxu0 %v4530
        %4626 = vmatpush1.bf16.msra.mxu0 %v4529
        %4627 = vmatprep.mubr.bf16.mxu0 %v4301
        %4628 = vmatmul.mubr.bf16.gmra.mrb[0].mxu0 %v4298
        %v4629 = vpop.f32.mrb[0].mxu0
        %v4630 = vadd.f32 0.0, %v4629
        %v4631 = vpop.f32.mrb[0].mxu0
        %v4632 = vadd.f32 0.0, %v4631
        %v4633 = vpop.f32.mrb[0].mxu0
        %v4634 = vadd.f32 0.0, %v4633
        %v4635 = vpop.f32.mrb[0].mxu0
        %v4636 = vadd.f32 0.0, %v4635
        %4637 = vdwg.mxu0
        %4638 = vmatprep.subr.bf16.mxu0 %v4532
        %4639 = vmatpush1.bf16.msra.mxu0 %v4531
        %4640 = vmatprep.subr.bf16.mxu0 %v4534
        %4641 = vmatpush1.bf16.msra.mxu0 %v4533
        %4642 = vmatprep.subr.bf16.mxu0 %v4536
        %4643 = vmatpush1.bf16.msra.mxu0 %v4535
        %4644 = vmatprep.subr.bf16.mxu0 %v4538
        %4645 = vmatpush1.bf16.msra.mxu0 %v4537
        %4646 = vmatprep.subr.bf16.mxu0 %v4540
        %4647 = vmatpush1.bf16.msra.mxu0 %v4539
        %4648 = vmatprep.subr.bf16.mxu0 %v4542
        %4649 = vmatpush1.bf16.msra.mxu0 %v4541
        %4650 = vmatprep.subr.bf16.mxu0 %v4544
        %4651 = vmatpush1.bf16.msra.mxu0 %v4543
        %4652 = vmatprep.subr.bf16.mxu0 %v4546
        %4653 = vmatpush1.bf16.msra.mxu0 %v4545
        %4654 = vmatprep.subr.bf16.mxu0 0
        %4655 = vmatpush1.bf16.msra.mxu0 0
        %4656 = vmatprep.subr.bf16.mxu0 0
        %4657 = vmatpush1.bf16.msra.mxu0 0
        %4658 = vmatprep.subr.bf16.mxu0 0
        %4659 = vmatpush1.bf16.msra.mxu0 0
        %4660 = vmatprep.subr.bf16.mxu0 0
        %4661 = vmatpush1.bf16.msra.mxu0 0
        %4662 = vmatprep.subr.bf16.mxu0 0
        %4663 = vmatpush1.bf16.msra.mxu0 0
        %4664 = vmatprep.subr.bf16.mxu0 0
        %4665 = vmatpush1.bf16.msra.mxu0 0
        %4666 = vmatprep.subr.bf16.mxu0 0
        %4667 = vmatpush1.bf16.msra.mxu0 0
        %4668 = vmatprep.subr.bf16.mxu0 0
        %4669 = vmatpush1.bf16.msra.mxu0 0
        %4670 = vmatprep.mubr.bf16.mxu0 0
        %4671 = vmatmul.mubr.bf16.gmra.mrb[0].mxu0 %v4304
        %v4672 = vpop.f32.mrb[0].mxu0
        %v4673 = vadd.f32 %v4630, %v4672
        %v4674 = vpop.f32.mrb[0].mxu0
        %v4675 = vadd.f32 %v4632, %v4674
        %v4676 = vpop.f32.mrb[0].mxu0
        %v4677 = vadd.f32 %v4634, %v4676
        %v4678 = vpop.f32.mrb[0].mxu0
        %v4679 = vadd.f32 %v4636, %v4678
        %4680 = vdwg.mxu0
        %v4681 = vadd.f32 %v4256, %v4673
        %v4682 = vadd.f32 %v4258, %v4675
        %v4683 = vadd.f32 %v4260, %v4677
        %v4684 = vadd.f32 %v4262, %v4679
        %v4685 = vld [vmem:[%s8] sm:$0x3]
        %v4687 = vlaneseq
        %v4688 = vshrl.u32 %v4687, 7
        %v4689 = vsub.s32 0, %v4688
        %v4690 = vrot.slane %v4685, %v4689
        %v4691 = vlaneseq
        %v4692 = vshrl.u32 %v4691, 7
        %v4693 = vsub.s32 1, %v4692
        %v4694 = vrot.slane %v4685, %v4693
        %v4697 = vadd.f32 %v4681, %v4690
        %v4698 = vadd.f32 %v4682, %v4694
        %v4699 = vadd.f32 %v4683, %v4690
        %v4700 = vadd.f32 %v4684, %v4694
        %vm4701 = vcmp.ge.f32.partialorder %v4697, 0.0
        %vm4702 = vcmp.ge.f32.partialorder %v4698, 0.0
        %vm4703 = vcmp.ge.f32.partialorder %v4699, 0.0
        %vm4704 = vcmp.ge.f32.partialorder %v4700, 0.0
        %v4705 = vmul.f32 %v4697, 0.01
        %v4706 = vmul.f32 %v4698, 0.01
        %v4707 = vmul.f32 %v4699, 0.01
        %v4708 = vmul.f32 %v4700, 0.01
        %v4709 = vsel %vm4701, %v4697, %v4705
        %v4710 = vsel %vm4702, %v4698, %v4706
        %v4711 = vsel %vm4703, %v4699, %v4707
        %v4712 = vsel %vm4704, %v4700, %v4708
        %v4713 = vadd.f32 %v4709, %v4711
        %v4714 = vrot.slane %v4713, 4
        %v4715 = vadd.f32 %v4713, %v4714
        %v4716 = vrot.slane %v4715, 2
        %v4717 = vadd.f32 %v4715, %v4716
        %v4718 = vrot.slane %v4717, 1
        %v4719 = vadd.f32 %v4717, %v4718
        %v4720 = vadd.f32 %v4710, %v4712
        %v4721 = vrot.slane %v4720, 4
        %v4722 = vadd.f32 %v4720, %v4721
        %v4723 = vrot.slane %v4722, 2
        %v4724 = vadd.f32 %v4722, %v4723
        %v4725 = vrot.slane %v4724, 1
        %v4726 = vadd.f32 %v4724, %v4725
        %v4727 = vmul.f32 %v4719, 0.0625
        %v4728 = vmul.f32 %v4726, 0.0625
        %v4729 = vld [vmem:[%s9] sm:$0xff]
        %v4730 = vld [vmem:[%s9 + $0x8] sm:$0xff]
        %v4731 = vld [vmem:[%s9 + $0x10] sm:$0xff]
        %v4732 = vld [vmem:[%s9 + $0x18] sm:$0xff]
        %v4733 = vld [vmem:[%s9 + $0x20] sm:$0xff]
        %v4734 = vld [vmem:[%s9 + $0x28] sm:$0xff]
        %v4735 = vld [vmem:[%s9 + $0x30] sm:$0xff]
        %v4736 = vld [vmem:[%s9 + $0x38] sm:$0xff]
        %v4737 = vld [vmem:[%s9 + $0x40] sm:$0xff]
        %v4738 = vld [vmem:[%s9 + $0x48] sm:$0xff]
        %v4739 = vld [vmem:[%s9 + $0x50] sm:$0xff]
        %v4740 = vld [vmem:[%s9 + $0x58] sm:$0xff]
        %v4741 = vld [vmem:[%s9 + $0x60] sm:$0xff]
        %v4742 = vld [vmem:[%s9 + $0x68] sm:$0xff]
        %v4743 = vld [vmem:[%s9 + $0x70] sm:$0xff]
        %v4744 = vld [vmem:[%s9 + $0x78] sm:$0xff]
        %v4745 = vld [vmem:[%s9 + $0x80] sm:$0xff]
        %v4746 = vld [vmem:[%s9 + $0x88] sm:$0xff]
        %v4747 = vld [vmem:[%s9 + $0x90] sm:$0xff]
        %v4748 = vld [vmem:[%s9 + $0x98] sm:$0xff]
        %v4749 = vld [vmem:[%s9 + $0xa0] sm:$0xff]
        %v4750 = vld [vmem:[%s9 + $0xa8] sm:$0xff]
        %v4751 = vld [vmem:[%s9 + $0xb0] sm:$0xff]
        %v4752 = vld [vmem:[%s9 + $0xb8] sm:$0xff]
        %v4753 = vld [vmem:[%s9 + $0xc0] sm:$0xff]
        %v4754 = vld [vmem:[%s9 + $0xc8] sm:$0xff]
        %v4755 = vld [vmem:[%s9 + $0xd0] sm:$0xff]
        %v4756 = vld [vmem:[%s9 + $0xd8] sm:$0xff]
        %v4757 = vld [vmem:[%s9 + $0xe0] sm:$0xff]
        %v4758 = vld [vmem:[%s9 + $0xe8] sm:$0xff]
        %v4759 = vld [vmem:[%s9 + $0xf0] sm:$0xff]
        %v4760 = vld [vmem:[%s9 + $0xf8] sm:$0xff]
        %v4761 = vld [vmem:[%s10] sm:$0x1]
        %4762 = vmatprep.subr.mxu0 0.0
        %4763 = vmatpush1.msra.mxu0 %v4729
        %4764 = vmatprep.subr.mxu0 0.0
        %4765 = vmatpush1.msra.mxu0 %v4730
        %4766 = vmatprep.subr.mxu0 0.0
        %4767 = vmatpush1.msra.mxu0 %v4731
        %4768 = vmatprep.subr.mxu0 0.0
        %4769 = vmatpush1.msra.mxu0 %v4732
        %4770 = vmatprep.subr.mxu0 0.0
        %4771 = vmatpush1.msra.mxu0 %v4733
        %4772 = vmatprep.subr.mxu0 0.0
        %4773 = vmatpush1.msra.mxu0 %v4734
        %4774 = vmatprep.subr.mxu0 0.0
        %4775 = vmatpush1.msra.mxu0 %v4735
        %4776 = vmatprep.subr.mxu0 0.0
        %4777 = vmatpush1.msra.mxu0 %v4736
        %4778 = vmatprep.subr.mxu0 0.0
        %4779 = vmatpush1.msra.mxu0 %v4737
        %4780 = vmatprep.subr.mxu0 0.0
        %4781 = vmatpush1.msra.mxu0 %v4738
        %4782 = vmatprep.subr.mxu0 0.0
        %4783 = vmatpush1.msra.mxu0 %v4739
        %4784 = vmatprep.subr.mxu0 0.0
        %4785 = vmatpush1.msra.mxu0 %v4740
        %4786 = vmatprep.subr.mxu0 0.0
        %4787 = vmatpush1.msra.mxu0 %v4741
        %4788 = vmatprep.subr.mxu0 0.0
        %4789 = vmatpush1.msra.mxu0 %v4742
        %4790 = vmatprep.subr.mxu0 0.0
        %4791 = vmatpush1.msra.mxu0 %v4743
        %4792 = vmatprep.subr.mxu0 0.0
        %4793 = vmatpush1.msra.mxu0 %v4744
        %4794 = vmatprep.subr.mxu0 0.0
        %4795 = vmatpush1.msra.mxu0 %v4745
        %4796 = vmatprep.subr.mxu0 0.0
        %4797 = vmatpush1.msra.mxu0 %v4746
        %4798 = vmatprep.subr.mxu0 0.0
        %4799 = vmatpush1.msra.mxu0 %v4747
        %4800 = vmatprep.subr.mxu0 0.0
        %4801 = vmatpush1.msra.mxu0 %v4748
        %4802 = vmatprep.subr.mxu0 0.0
        %4803 = vmatpush1.msra.mxu0 %v4749
        %4804 = vmatprep.subr.mxu0 0.0
        %4805 = vmatpush1.msra.mxu0 %v4750
        %4806 = vmatprep.subr.mxu0 0.0
        %4807 = vmatpush1.msra.mxu0 %v4751
        %4808 = vmatprep.subr.mxu0 0.0
        %4809 = vmatpush1.msra.mxu0 %v4752
        %4810 = vmatprep.subr.mxu0 0.0
        %4811 = vmatpush1.msra.mxu0 %v4753
        %4812 = vmatprep.subr.mxu0 0.0
        %4813 = vmatpush1.msra.mxu0 %v4754
        %4814 = vmatprep.subr.mxu0 0.0
        %4815 = vmatpush1.msra.mxu0 %v4755
        %4816 = vmatprep.subr.mxu0 0.0
        %4817 = vmatpush1.msra.mxu0 %v4756
        %4818 = vmatprep.subr.mxu0 0.0
        %4819 = vmatpush1.msra.mxu0 %v4757
        %4820 = vmatprep.subr.mxu0 0.0
        %4821 = vmatpush1.msra.mxu0 %v4758
        %4822 = vmatprep.subr.mxu0 0.0
        %4823 = vmatpush1.msra.mxu0 %v4759
        %4824 = vmatprep.subr.mxu0 0.0
        %4825 = vmatpush1.msra.mxu0 %v4760
        %4826 = vmatprep.mubr.f32.mxu0 %v4728
        %4827 = vmatmul.mubr.f32.gmra.mrb[0].mxu0 %v4727
        %v4828 = vpop.f32.mrb[0].mxu0
        %v4829 = vadd.f32 %v4761, %v4828
        %v4830 = vpop.f32.mrb[0].mxu0
        %4831 = vdwg.mxu0
        %4832 = vst [vmem:[%s378] sm:$0x1] %v4829
        %s4833 = sand.u32 %s269, 1
        %s4834 = scalar_lea.sflag [#allocation6], %s4833
        %s4835 = sand.u32 %s269, 1
        %s4836 = scalar_lea.vmem [#allocation5], %s4835
        // Predicated region
        $region65: #{conv4_forward.1} parent=63 // pred_check
          %p4837 = pneg %p279
        $region66: #{conv4_forward.1} parent=63 // pred_check_branch
          %4839 = sbr.rel (%p4837) target = $region68
        $region67: #{conv4_forward.1} parent=63 // pred_region
          %s4841 = ssub.s32 16, 16
          %4842 = vsyncadd %s4834, %s4841
          %s4843 = smul.addr %s25, 16
          %s4844 = scalar_lea.hbm %s11, %s4843
          %s4846 = sshll.u32 %s4836, 4
          %s4847 = int_to_ptr.vmem [resolvable:$true] %s4846
          %4849 = dma.vmem_to_hbm [thread:$0]  %s4847, 16, %s4844, %s4834
        $region68: #{conv4_forward.1} parent=63 // pred_fallthru
          _
      $region64: #{conv4_forward.1} parent=5 // pred_fallthru
        _
      %p4850 = scmp.le.s32.totalorder 2, %s20
      // Predicated region
      $region69: #{conv4_forward.1} parent=5 // pred_check
        %p4851 = pneg %p4850
      $region70: #{conv4_forward.1} parent=5 // pred_check_branch
        %4853 = sbr.rel (%p4851) target = $region72
      $region71: #{conv4_forward.1} parent=5 // pred_region
        %s4854 = ssub.s32 %s20, 2
        // Predicated region
        $region73: #{conv4_forward.1} parent=71 // pred_check
          %p4855 = pneg %p285
        $region74: #{conv4_forward.1} parent=71 // pred_check_branch
          %4857 = sbr.rel (%p4855) target = $region76
        $region75: #{conv4_forward.1} parent=71 // pred_region
          %s4858 = sand.u32 %s270, 1
          %s4859 = scalar_lea.sflag [#allocation6], %s4858
          %s4860 = sand.u32 %s270, 1
          %s4861 = scalar_lea.vmem [#allocation5], %s4860
          %4862 = dma.done %s4859, 16
        $region76: #{conv4_forward.1} parent=71 // pred_fallthru
          _
      $region72: #{conv4_forward.1} parent=5 // pred_fallthru
        _
    $region6: #{conv4_forward.1} parent=1 // loop_footer
      %s24 = sadd.s32 1, %s20
    $region7: #{conv4_forward.1} parent=1 // loop_footer_branch
      %19 = sbr.rel target = $region3
    $region8: #{conv4_forward.1} parent=1 // loop_exit
      _
    %4863 = vsyncpa [#allocation6], 1
    %s4864 = scalar_lea.sflag [#allocation6], 1
    %4865 = vsyncpa %s4864, 1

</llo_original>
